<compile_context>
chip_gen: v6e
topology: v6e:2x2x1
jax: 0.10.0
libtpu: 0.0.40
codegen_flags: <defaults>
</compile_context>

<pallas_src>
import functools
import math

import jax
import jax.numpy as jnp
from jax.experimental import pallas as pl
from jax.experimental.pallas import tpu as pltpu


# ----------------------------- config ---------------------------------------
class Config:
    vocab_size = 64
    hidden_size = 32
    max_sent_len = 16
    num_tf_layers = 2          # -> 1 layer per encoder stack
    ff_size = 64
    dropout = 0.0              # dropout disabled -> deterministic (eval-mode semantics)
    num_entity_labels = 5
    num_att_heads = 4
    use_crf_layer = False      # TODO(synk): CRF path (forward algo + Viterbi) not implemented; linear-classifier path used.


# --------------------------- fused Pallas kernel -----------------------------
def _doc_ner_kernel(ids_ref, mask_ref, ner_lab_ref, cw_lab_ref,
                    tok_emb_ref, pos_emb_ref, emb_g_ref, emb_b_ref,
                    wqkv_ref, bqkv_ref, wo_ref, bo_ref,
                    w1_ref, b1_ref, w2_ref, b2_ref,
                    ln0g_ref, ln0b_ref, ln1g_ref, ln1b_ref,
                    fing_ref, finb_ref,
                    clsw_ref, clsb_ref, cw1w_ref, cw1b_ref, cw2w_ref, cw2b_ref,
                    enc_out_ref, ner_nll_ref, ner_pred_ref,
                    cw_loss_ref, cw_pred_ref,
                    *, num_heads, layers_per_enc, eps):
    """One grid step == one sentence; all intermediates stay in VMEM/vregs."""
    S = ids_ref.shape[1]
    V, D = tok_emb_ref.shape
    H = num_heads
    dh = D // H
    scale = 1.0 / math.sqrt(dh)

    def layer_norm(x, g, b):
        # annotated-transformer LayerNorm: unbiased std, eps added to std.
        mean = jnp.mean(x, axis=-1, keepdims=True)
        c = x - mean
        std = jnp.sqrt(jnp.sum(c * c, axis=-1, keepdims=True) / (x.shape[-1] - 1))
        return g * c * pl.reciprocal(std + eps, approx=True) + b

    # ---- token embedding: fused one-hot gather + positional + LayerNorm -----
    # TODO(synk): the one-hot matmul gather is exact but O(S*V); for large vocabs
    # switch to a PrefetchScalarGridSpec + pl.Element row-gather on the table.
    ids = ids_ref[0]                                              # [S, 1] int32
    vocab_iota = jax.lax.broadcasted_iota(jnp.int32, (S, V), 1)
    onehot_tok = (vocab_iota == ids).astype(jnp.float32)
    x = jnp.dot(onehot_tok, tok_emb_ref[...], preferred_element_type=jnp.float32)
    x = x + pos_emb_ref[...]
    x = layer_norm(x, emb_g_ref[...], emb_b_ref[...])

    keep = mask_ref[0] > 0.5                                      # [1, S] -> broadcast over queries

    # Per-head lane masks (head split/merge without lane slicing or transposes).
    lane = jax.lax.broadcasted_iota(jnp.int32, (1, D), 1)
    head_masks = [((lane >= h * dh) & (lane < (h + 1) * dh)).astype(jnp.float32)
                  for h in range(H)]

    def self_attention(xn, li):
        # Fused QKV projection: one [S, D] x [D, 3D] MXU push.
        qkv = jnp.dot(xn, wqkv_ref[li], preferred_element_type=jnp.float32) + bqkv_ref[li]
        q = qkv[:, 0:D]
        k = qkv[:, D:2 * D]
        v = qkv[:, 2 * D:3 * D]
        ctx = jnp.zeros((S, D), jnp.float32)
        for h in range(H):                                        # static unroll over heads
            mh = head_masks[h]
            # (q*mh)·k^T contracts only head-h lanes  ==  q_h·k_h^T
            s = jnp.einsum('qd,kd->qk', q * mh, k,
                           preferred_element_type=jnp.float32) * scale
            # masked_fill(mask==0, -1e9); fully-masked (pad) query rows become a
            # uniform softmax exactly like the PyTorch reference -- their outputs
            # are never used by the (masked) losses downstream.
            s = jnp.where(keep, s, -1e9)
            m = jnp.max(s, axis=-1, keepdims=True)
            p = jnp.exp(s - m)
            p = p * pl.reciprocal(jnp.sum(p, axis=-1, keepdims=True), approx=True)
            # (p_h @ v) masked to head-h columns == concat-heads layout contribution.
            ctx = ctx + jnp.dot(p, v, preferred_element_type=jnp.float32) * mh
        return jnp.dot(ctx, wo_ref[li], preferred_element_type=jnp.float32) + bo_ref[li]

    # ---- two pre-norm transformer encoder stacks -----------------------------
    li = 0
    for enc_idx in range(2):
        for _ in range(layers_per_enc):
            xn = layer_norm(x, ln0g_ref[li], ln0b_ref[li])
            x = x + self_attention(xn, li)
            xn = layer_norm(x, ln1g_ref[li], ln1b_ref[li])
            hmid = jnp.dot(xn, w1_ref[li], preferred_element_type=jnp.float32) + b1_ref[li]
            hmid = jnp.maximum(hmid, 0.0)
            x = x + jnp.dot(hmid, w2_ref[li], preferred_element_type=jnp.float32) + b2_ref[li]
            li += 1
        x = layer_norm(x, fing_ref[enc_idx], finb_ref[enc_idx])

    enc_out_ref[0] = x

    def softmax_nll_and_pred(logits, labels):
        # fused log_softmax + NLL (ignore_index<0 -> 0 loss) + first-index argmax.
        mx = jnp.max(logits, axis=-1, keepdims=True)
        z = logits - mx
        logp = z - jnp.log(jnp.sum(jnp.exp(z), axis=-1, keepdims=True))
        cols = jax.lax.broadcasted_iota(jnp.int32, logits.shape, 1)
        onehot = (cols == labels).astype(jnp.float32)             # all-zero row if label == -100
        nll = -jnp.sum(logp * onehot, axis=-1, keepdims=True)
        nll = nll * (labels >= 0).astype(jnp.float32)
        pred = jnp.min(jnp.where(logits >= mx, cols.astype(jnp.float32),
                                 jnp.float32(logits.shape[-1])),
                       axis=-1, keepdims=True)
        return nll, pred.astype(jnp.int32)

    # ---- NER classifier head (logits never leave VMEM) -----------------------
    ner_logits = jnp.dot(x, clsw_ref[...], preferred_element_type=jnp.float32) + clsb_ref[...]
    nll, pred = softmax_nll_and_pred(ner_logits, ner_lab_ref[0])
    ner_nll_ref[0] = nll
    ner_pred_ref[0] = pred

    # ---- cut-word head: Linear -> ReLU -> Linear -> CE(ignore_index=-100) ----
    hcw = jnp.dot(x, cw1w_ref[...], preferred_element_type=jnp.float32) + cw1b_ref[...]
    hcw = jnp.maximum(hcw, 0.0)
    cw_logits = jnp.dot(hcw, cw2w_ref[...], preferred_element_type=jnp.float32) + cw2b_ref[...]
    cwl, cwp = softmax_nll_and_pred(cw_logits, cw_lab_ref[0])
    cw_loss_ref[0] = cwl
    cw_pred_ref[0] = cwp


# --------------------------- pallas_call wrapper ------------------------------
_WEIGHT_ORDER = ('tok_emb', 'pos_emb', 'emb_ln_g', 'emb_ln_b',
                 'wqkv', 'bqkv', 'wo', 'bo', 'w1', 'b1', 'w2', 'b2',
                 'ln0_g', 'ln0_b', 'ln1_g', 'ln1_b', 'fin_g', 'fin_b',
                 'cls_w', 'cls_b', 'cw_w1', 'cw_b1', 'cw_w2', 'cw_b2')


def _resident_spec(arr):
    nd = arr.ndim
    return pl.BlockSpec(arr.shape, lambda i, _nd=nd: (0,) * _nd)   # stays resident in VMEM


def fused_doc_ner_call(params, cfg, ids3, mask3, ner_lab3, cw_lab3):
    B, S, _ = ids3.shape
    D = cfg.hidden_size
    weights = [params['pos_emb'][:S] if name == 'pos_emb' else params[name]
               for name in _WEIGHT_ORDER]

    sent_S1 = pl.BlockSpec((1, S, 1), lambda i: (i, 0, 0))
    in_specs = ([sent_S1,
                 pl.BlockSpec((1, 1, S), lambda i: (i, 0, 0)),
                 sent_S1, sent_S1]
                + [_resident_spec(w) for w in weights])
    out_shape = (jax.ShapeDtypeStruct((B, S, D), jnp.float32),
                 jax.ShapeDtypeStruct((B, S, 1), jnp.float32),
                 jax.ShapeDtypeStruct((B, S, 1), jnp.int32),
                 jax.ShapeDtypeStruct((B, S, 1), jnp.float32),
                 jax.ShapeDtypeStruct((B, S, 1), jnp.int32))
    out_specs = (pl.BlockSpec((1, S, D), lambda i: (i, 0, 0)),
                 sent_S1, sent_S1, sent_S1, sent_S1)

    kernel = functools.partial(
        _doc_ner_kernel,
        num_heads=cfg.num_att_heads,
        layers_per_enc=cfg.num_tf_layers // 2,
        eps=1e-6)

    return pl.pallas_call(
        kernel,
        out_shape=out_shape,
        grid=(B,),
        in_specs=in_specs,
        out_specs=out_specs,
        compiler_params=pltpu.CompilerParams(dimension_semantics=("parallel",)),
    )(ids3, mask3, ner_lab3, cw_lab3, *weights)


# --------------------------- parameter init ----------------------------------
def _linear_params(key, fan_in, fan_out):
    kw, kb = jax.random.split(key)
    bound = 1.0 / math.sqrt(fan_in)
    w = jax.random.uniform(kw, (fan_in, fan_out), jnp.float32, -bound, bound)
    b = jax.random.uniform(kb, (fan_out,), jnp.float32, -bound, bound)
    return w, b


def init_params(key, cfg):
    D, F = cfg.hidden_size, cfg.ff_size
    layers_per_enc = cfg.num_tf_layers // 2
    L = 2 * layers_per_enc                       # total layers across both encoder stacks
    keys = jax.random.split(key, 7)
    p = {}
    p['tok_emb'] = jax.random.normal(keys[0], (cfg.vocab_size, D), jnp.float32)
    p['pos_emb'] = jax.random.normal(keys[1], (cfg.max_sent_len, D), jnp.float32)
    p['emb_ln_g'] = jnp.ones((1, D), jnp.float32)
    p['emb_ln_b'] = jnp.zeros((1, D), jnp.float32)

    def init_layer(k):
        ks = jax.random.split(k, 6)
        wq, bq = _linear_params(ks[0], D, D)
        wk, bk = _linear_params(ks[1], D, D)
        wv, bv = _linear_params(ks[2], D, D)
        wo, bo = _linear_params(ks[3], D, D)
        w1, b1 = _linear_params(ks[4], D, F)
        w2, b2 = _linear_params(ks[5], F, D)
        return dict(wqkv=jnp.concatenate([wq, wk, wv], axis=1),   # fused QKV [D, 3D]
                    bqkv=jnp.concatenate([bq, bk, bv])[None, :],
                    wo=wo, bo=bo[None, :],
                    w1=w1, b1=b1[None, :],
                    w2=w2, b2=b2[None, :])

    lkeys = jax.random.split(keys[2], L)
    layers = [init_layer(lkeys[i]) for i in range(L)]
    for name in ('wqkv', 'bqkv', 'wo', 'bo', 'w1', 'b1', 'w2', 'b2'):
        p[name] = jnp.stack([lp[name] for lp in layers], axis=0)  # [L, ...]
    p['ln0_g'] = jnp.ones((L, 1, D), jnp.float32)
    p['ln0_b'] = jnp.zeros((L, 1, D), jnp.float32)
    p['ln1_g'] = jnp.ones((L, 1, D), jnp.float32)
    p['ln1_b'] = jnp.zeros((L, 1, D), jnp.float32)
    p['fin_g'] = jnp.ones((2, 1, D), jnp.float32)                 # one final LN per encoder stack
    p['fin_b'] = jnp.zeros((2, 1, D), jnp.float32)
    cls_w, cls_b = _linear_params(keys[4], D, cfg.num_entity_labels)
    cw_w1, cw_b1 = _linear_params(keys[5], D, D // 2)
    cw_w2, cw_b2 = _linear_params(keys[6], D // 2, 2)
    p['cls_w'], p['cls_b'] = cls_w, cls_b[None, :]
    p['cw_w1'], p['cw_b1'] = cw_w1, cw_b1[None, :]
    p['cw_w2'], p['cw_b2'] = cw_w2, cw_b2[None, :]
    return p


# ----------------------------- model forward ---------------------------------
def doc_ner_forward(params, cfg, input_ids, input_masks, cut_word_label,
                    doc_start_list, doc_batch_size, label_ids,
                    train_flag=True, decode_flag=True):
    if train_flag:
        assert label_ids is not None
    # All sentences of all docs are processed independently (attention mask is
    # per-sentence), so the reference's per-document loop is batched into one
    # fused kernel call covering every sentence in the doc batch.
    s0 = doc_start_list[0]
    e0 = doc_start_list[doc_batch_size]
    ids3 = input_ids[s0:e0].astype(jnp.int32)[..., None]                       # [B,S,1]
    mask3 = (input_masks[s0:e0] == 1).astype(jnp.float32)[:, None, :]          # [B,1,S]
    ner_lab3 = label_ids[s0:e0].astype(jnp.int32)[..., None]
    cw_lab3 = cut_word_label[s0:e0].astype(jnp.int32)[..., None]

    enc, ner_nll, ner_pred, cw_loss, cw_pred = fused_doc_ner_call(
        params, cfg, ids3, mask3, ner_lab3, cw_lab3)

    ner_nll = ner_nll[..., 0]          # [B,S] per-token NLL (0 where label == -100)
    cw_loss = cw_loss[..., 0]
    cut_word_pred = cw_pred[..., 0]
    batch_seq_preds = ner_pred[..., 0] if decode_flag else None
    if train_flag:
        # reduction='none' + per-sentence sum (+ cut-word loss), matching the reference.
        ner_loss = ner_nll.sum(axis=-1) + cw_loss.sum(axis=-1)
    else:
        ner_loss = None
    return enc, ner_loss, batch_seq_preds, cut_word_pred


# --------------------------------- main ---------------------------------------
if __name__ == "__main__":
    cfg = Config()
    key = jax.random.PRNGKey(0)
    kp, kid, kcut, klab = jax.random.split(key, 4)
    params = init_params(kp, cfg)

    total_sents, S = 4, cfg.max_sent_len
    doc_start_list = [0, 2, 4]      # two docs of two sentences each
    doc_batch_size = 2

    input_ids = jax.random.randint(kid, (total_sents, S), 0, cfg.vocab_size, jnp.int32)
    lengths = jnp.array([16, 12, 16, 10], jnp.int32)
    input_masks = (jnp.arange(S)[None, :] < lengths[:, None]).astype(jnp.int32)
    cut_word_label = jax.random.randint(kcut, (total_sents, S), 0, 2, jnp.int32)
    cut_word_label = jnp.where(input_masks == 1, cut_word_label, -100)
    label_ids = jax.random.randint(klab, (total_sents, S), 0,
                                   cfg.num_entity_labels, jnp.int32)

    fwd = jax.jit(lambda p, ids, masks, cwl, lab: doc_ner_forward(
        p, cfg, ids, masks, cwl, doc_start_list, doc_batch_size, lab,
        train_flag=True, decode_flag=True))

    outs = fwd(params, input_ids, input_masks, cut_word_label, label_ids)
    batch_seq_enc, ner_loss, batch_seq_preds, cut_word_pred = jax.block_until_ready(outs)

    assert batch_seq_enc.shape == (total_sents, S, cfg.hidden_size)
    assert ner_loss.shape == (total_sents,)
    assert batch_seq_preds.shape == (total_sents, S)
    assert cut_word_pred.shape == (total_sents, S)
    assert bool(jnp.all(jnp.isfinite(batch_seq_enc)))
    assert bool(jnp.all(jnp.isfinite(ner_loss)))
    print("KERNEL_OK")
</pallas_src>

<mosaic_0001>
module attributes {stable_mosaic.version = 11 : i64} {
  func.func @_doc_ner_kernel(%arg0: i32, %arg1: memref<1x16x1xi32, #tpu.memory_space<vmem>>, %arg2: memref<1x1x16xf32, #tpu.memory_space<vmem>>, %arg3: memref<1x16x1xi32, #tpu.memory_space<vmem>>, %arg4: memref<1x16x1xi32, #tpu.memory_space<vmem>>, %arg5: memref<64x32xf32, #tpu.memory_space<vmem>>, %arg6: memref<16x32xf32, #tpu.memory_space<vmem>>, %arg7: memref<1x32xf32, #tpu.memory_space<vmem>>, %arg8: memref<1x32xf32, #tpu.memory_space<vmem>>, %arg9: memref<2x32x96xf32, #tpu.memory_space<vmem>>, %arg10: memref<2x1x96xf32, #tpu.memory_space<vmem>>, %arg11: memref<2x32x32xf32, #tpu.memory_space<vmem>>, %arg12: memref<2x1x32xf32, #tpu.memory_space<vmem>>, %arg13: memref<2x32x64xf32, #tpu.memory_space<vmem>>, %arg14: memref<2x1x64xf32, #tpu.memory_space<vmem>>, %arg15: memref<2x64x32xf32, #tpu.memory_space<vmem>>, %arg16: memref<2x1x32xf32, #tpu.memory_space<vmem>>, %arg17: memref<2x1x32xf32, #tpu.memory_space<vmem>>, %arg18: memref<2x1x32xf32, #tpu.memory_space<vmem>>, %arg19: memref<2x1x32xf32, #tpu.memory_space<vmem>>, %arg20: memref<2x1x32xf32, #tpu.memory_space<vmem>>, %arg21: memref<2x1x32xf32, #tpu.memory_space<vmem>>, %arg22: memref<2x1x32xf32, #tpu.memory_space<vmem>>, %arg23: memref<32x5xf32, #tpu.memory_space<vmem>>, %arg24: memref<1x5xf32, #tpu.memory_space<vmem>>, %arg25: memref<32x16xf32, #tpu.memory_space<vmem>>, %arg26: memref<1x16xf32, #tpu.memory_space<vmem>>, %arg27: memref<16x2xf32, #tpu.memory_space<vmem>>, %arg28: memref<1x2xf32, #tpu.memory_space<vmem>>, %arg29: memref<1x16x32xf32, #tpu.memory_space<vmem>>, %arg30: memref<1x16x1xf32, #tpu.memory_space<vmem>>, %arg31: memref<1x16x1xi32, #tpu.memory_space<vmem>>, %arg32: memref<1x16x1xf32, #tpu.memory_space<vmem>>, %arg33: memref<1x16x1xi32, #tpu.memory_space<vmem>>) attributes {dimension_semantics = [#tpu.dimension_semantics<parallel>], iteration_bounds = array<i64: 4>, scalar_prefetch = 0 : i64, scratch_operands = 0 : i64, tpu.core_type = #tpu.core_type<tc>, window_params = [{transform_indices = @transform_0, window_bounds = array<i64: 1, 16, 1>}, {transform_indices = @transform_1, window_bounds = array<i64: 1, 1, 16>}, {transform_indices = @transform_2, window_bounds = array<i64: 1, 16, 1>}, {transform_indices = @transform_3, window_bounds = array<i64: 1, 16, 1>}, {pipeline_mode = #tpu.pipeline_mode<synchronous>, transform_indices = @transform_4, window_bounds = array<i64: 64, 32>}, {pipeline_mode = #tpu.pipeline_mode<synchronous>, transform_indices = @transform_5, window_bounds = array<i64: 16, 32>}, {pipeline_mode = #tpu.pipeline_mode<synchronous>, transform_indices = @transform_6, window_bounds = array<i64: 1, 32>}, {pipeline_mode = #tpu.pipeline_mode<synchronous>, transform_indices = @transform_7, window_bounds = array<i64: 1, 32>}, {pipeline_mode = #tpu.pipeline_mode<synchronous>, transform_indices = @transform_8, window_bounds = array<i64: 2, 32, 96>}, {pipeline_mode = #tpu.pipeline_mode<synchronous>, transform_indices = @transform_9, window_bounds = array<i64: 2, 1, 96>}, {pipeline_mode = #tpu.pipeline_mode<synchronous>, transform_indices = @transform_10, window_bounds = array<i64: 2, 32, 32>}, {pipeline_mode = #tpu.pipeline_mode<synchronous>, transform_indices = @transform_11, window_bounds = array<i64: 2, 1, 32>}, {pipeline_mode = #tpu.pipeline_mode<synchronous>, transform_indices = @transform_12, window_bounds = array<i64: 2, 32, 64>}, {pipeline_mode = #tpu.pipeline_mode<synchronous>, transform_indices = @transform_13, window_bounds = array<i64: 2, 1, 64>}, {pipeline_mode = #tpu.pipeline_mode<synchronous>, transform_indices = @transform_14, window_bounds = array<i64: 2, 64, 32>}, {pipeline_mode = #tpu.pipeline_mode<synchronous>, transform_indices = @transform_15, window_bounds = array<i64: 2, 1, 32>}, {pipeline_mode = #tpu.pipeline_mode<synchronous>, transform_indices = @transform_16, window_bounds = array<i64: 2, 1, 32>}, {pipeline_mode = #tpu.pipeline_mode<synchronous>, transform_indices = @transform_17, window_bounds = array<i64: 2, 1, 32>}, {pipeline_mode = #tpu.pipeline_mode<synchronous>, transform_indices = @transform_18, window_bounds = array<i64: 2, 1, 32>}, {pipeline_mode = #tpu.pipeline_mode<synchronous>, transform_indices = @transform_19, window_bounds = array<i64: 2, 1, 32>}, {pipeline_mode = #tpu.pipeline_mode<synchronous>, transform_indices = @transform_20, window_bounds = array<i64: 2, 1, 32>}, {pipeline_mode = #tpu.pipeline_mode<synchronous>, transform_indices = @transform_21, window_bounds = array<i64: 2, 1, 32>}, {pipeline_mode = #tpu.pipeline_mode<synchronous>, transform_indices = @transform_22, window_bounds = array<i64: 32, 5>}, {pipeline_mode = #tpu.pipeline_mode<synchronous>, transform_indices = @transform_23, window_bounds = array<i64: 1, 5>}, {pipeline_mode = #tpu.pipeline_mode<synchronous>, transform_indices = @transform_24, window_bounds = array<i64: 32, 16>}, {pipeline_mode = #tpu.pipeline_mode<synchronous>, transform_indices = @transform_25, window_bounds = array<i64: 1, 16>}, {pipeline_mode = #tpu.pipeline_mode<synchronous>, transform_indices = @transform_26, window_bounds = array<i64: 16, 2>}, {pipeline_mode = #tpu.pipeline_mode<synchronous>, transform_indices = @transform_27, window_bounds = array<i64: 1, 2>}, {transform_indices = @transform_28, window_bounds = array<i64: 1, 16, 32>}, {transform_indices = @transform_29, window_bounds = array<i64: 1, 16, 1>}, {transform_indices = @transform_30, window_bounds = array<i64: 1, 16, 1>}, {transform_indices = @transform_31, window_bounds = array<i64: 1, 16, 1>}, {transform_indices = @transform_32, window_bounds = array<i64: 1, 16, 1>}]} {
    %c0 = arith.constant 0 : index
    %c0_0 = arith.constant 0 : index
    %c0_1 = arith.constant 0 : index
    %0 = vector.load %arg1[%c0, %c0_0, %c0_1] : memref<1x16x1xi32, #tpu.memory_space<vmem>>, vector<1x16x1xi32>
    %1 = vector.shape_cast %0 : vector<1x16x1xi32> to vector<16x1xi32>
    %2 = tpu.iota {dimensions = array<i32: 1>} : vector<16x64xi32>
    %3 = vector.broadcast %1 : vector<16x1xi32> to vector<16x64xi32>
    %4 = arith.cmpi eq, %2, %3 : vector<16x64xi32>
    %5 = arith.extui %4 : vector<16x64xi1> to vector<16x64xi32>
    %6 = arith.sitofp %5 : vector<16x64xi32> to vector<16x64xf32>
    %c0_2 = arith.constant 0 : index
    %c0_3 = arith.constant 0 : index
    %7 = vector.load %arg5[%c0_2, %c0_3] : memref<64x32xf32, #tpu.memory_space<vmem>>, vector<64x32xf32>
    %cst = arith.constant dense<0.000000e+00> : vector<16x32xf32>
    %8 = tpu.matmul %6, %7, %cst {dimension_numbers = #tpu.dot_dimension_numbers<[1], [0], [0], [1], [0, 0, 1, 1], [], []>} : vector<16x64xf32>, vector<64x32xf32>, vector<16x32xf32> -> vector<16x32xf32>
    %c0_4 = arith.constant 0 : index
    %c0_5 = arith.constant 0 : index
    %9 = vector.load %arg6[%c0_4, %c0_5] : memref<16x32xf32, #tpu.memory_space<vmem>>, vector<16x32xf32>
    %10 = arith.addf %8, %9 : vector<16x32xf32>
    %c0_6 = arith.constant 0 : index
    %c0_7 = arith.constant 0 : index
    %11 = vector.load %arg7[%c0_6, %c0_7] : memref<1x32xf32, #tpu.memory_space<vmem>>, vector<1x32xf32>
    %c0_8 = arith.constant 0 : index
    %c0_9 = arith.constant 0 : index
    %12 = vector.load %arg8[%c0_8, %c0_9] : memref<1x32xf32, #tpu.memory_space<vmem>>, vector<1x32xf32>
    %cst_10 = arith.constant dense<0.000000e+00> : vector<16xf32>
    %13 = vector.multi_reduction <add>, %10, %cst_10 [1] : vector<16x32xf32> to vector<16xf32>
    %14 = vector.shape_cast %13 : vector<16xf32> to vector<16x1xf32>
    %cst_11 = arith.constant 3.200000e+01 : f32
    %15 = vector.broadcast %cst_11 : f32 to vector<16x1xf32>
    %16 = arith.divf %14, %15 : vector<16x1xf32>
    %17 = vector.broadcast %16 : vector<16x1xf32> to vector<16x32xf32>
    %18 = arith.subf %10, %17 : vector<16x32xf32>
    %19 = arith.mulf %18, %18 : vector<16x32xf32>
    %cst_12 = arith.constant dense<0.000000e+00> : vector<16xf32>
    %20 = vector.multi_reduction <add>, %19, %cst_12 [1] : vector<16x32xf32> to vector<16xf32>
    %21 = vector.shape_cast %20 : vector<16xf32> to vector<16x1xf32>
    %cst_13 = arith.constant 3.100000e+01 : f32
    %22 = vector.broadcast %cst_13 : f32 to vector<16x1xf32>
    %23 = arith.divf %21, %22 : vector<16x1xf32>
    %24 = math.sqrt %23 : vector<16x1xf32>
    %25 = vector.broadcast %11 : vector<1x32xf32> to vector<16x32xf32>
    %26 = arith.mulf %25, %18 : vector<16x32xf32>
    %cst_14 = arith.constant 9.99999997E-7 : f32
    %27 = vector.broadcast %cst_14 : f32 to vector<16x1xf32>
    %28 = arith.addf %24, %27 : vector<16x1xf32>
    %29 = tpu.reciprocal %28 {approx = true} : vector<16x1xf32> -> vector<16x1xf32>
    %30 = vector.broadcast %29 : vector<16x1xf32> to vector<16x32xf32>
    %31 = arith.mulf %26, %30 : vector<16x32xf32>
    %32 = vector.broadcast %12 : vector<1x32xf32> to vector<16x32xf32>
    %33 = arith.addf %31, %32 : vector<16x32xf32>
    %c0_15 = arith.constant 0 : index
    %c0_16 = arith.constant 0 : index
    %c0_17 = arith.constant 0 : index
    %34 = vector.load %arg2[%c0_15, %c0_16, %c0_17] : memref<1x1x16xf32, #tpu.memory_space<vmem>>, vector<1x1x16xf32>
    %35 = vector.shape_cast %34 : vector<1x1x16xf32> to vector<1x16xf32>
    %cst_18 = arith.constant 5.000000e-01 : f32
    %36 = vector.broadcast %cst_18 : f32 to vector<1x16xf32>
    %37 = arith.cmpf ogt, %35, %36 : vector<1x16xf32>
    %38 = tpu.iota {dimensions = array<i32: 1>} : vector<1x32xi32>
    %c0_i32 = arith.constant 0 : i32
    %39 = vector.broadcast %c0_i32 : i32 to vector<1x32xi32>
    %40 = arith.cmpi sge, %38, %39 : vector<1x32xi32>
    %c8_i32 = arith.constant 8 : i32
    %41 = vector.broadcast %c8_i32 : i32 to vector<1x32xi32>
    %42 = arith.cmpi slt, %38, %41 : vector<1x32xi32>
    %43 = arith.andi %40, %42 : vector<1x32xi1>
    %44 = arith.extui %43 : vector<1x32xi1> to vector<1x32xi32>
    %45 = arith.sitofp %44 : vector<1x32xi32> to vector<1x32xf32>
    %c8_i32_19 = arith.constant 8 : i32
    %46 = vector.broadcast %c8_i32_19 : i32 to vector<1x32xi32>
    %47 = arith.cmpi sge, %38, %46 : vector<1x32xi32>
    %c16_i32 = arith.constant 16 : i32
    %48 = vector.broadcast %c16_i32 : i32 to vector<1x32xi32>
    %49 = arith.cmpi slt, %38, %48 : vector<1x32xi32>
    %50 = arith.andi %47, %49 : vector<1x32xi1>
    %51 = arith.extui %50 : vector<1x32xi1> to vector<1x32xi32>
    %52 = arith.sitofp %51 : vector<1x32xi32> to vector<1x32xf32>
    %c16_i32_20 = arith.constant 16 : i32
    %53 = vector.broadcast %c16_i32_20 : i32 to vector<1x32xi32>
    %54 = arith.cmpi sge, %38, %53 : vector<1x32xi32>
    %c24_i32 = arith.constant 24 : i32
    %55 = vector.broadcast %c24_i32 : i32 to vector<1x32xi32>
    %56 = arith.cmpi slt, %38, %55 : vector<1x32xi32>
    %57 = arith.andi %54, %56 : vector<1x32xi1>
    %58 = arith.extui %57 : vector<1x32xi1> to vector<1x32xi32>
    %59 = arith.sitofp %58 : vector<1x32xi32> to vector<1x32xf32>
    %c24_i32_21 = arith.constant 24 : i32
    %60 = vector.broadcast %c24_i32_21 : i32 to vector<1x32xi32>
    %61 = arith.cmpi sge, %38, %60 : vector<1x32xi32>
    %c32_i32 = arith.constant 32 : i32
    %62 = vector.broadcast %c32_i32 : i32 to vector<1x32xi32>
    %63 = arith.cmpi slt, %38, %62 : vector<1x32xi32>
    %64 = arith.andi %61, %63 : vector<1x32xi1>
    %65 = arith.extui %64 : vector<1x32xi1> to vector<1x32xi32>
    %66 = arith.sitofp %65 : vector<1x32xi32> to vector<1x32xf32>
    %c0_22 = arith.constant 0 : index
    %c0_23 = arith.constant 0 : index
    %c0_24 = arith.constant 0 : index
    %67 = vector.load %arg17[%c0_22, %c0_23, %c0_24] : memref<2x1x32xf32, #tpu.memory_space<vmem>>, vector<1x1x32xf32>
    %68 = vector.shape_cast %67 : vector<1x1x32xf32> to vector<1x32xf32>
    %c0_25 = arith.constant 0 : index
    %c0_26 = arith.constant 0 : index
    %c0_27 = arith.constant 0 : index
    %69 = vector.load %arg18[%c0_25, %c0_26, %c0_27] : memref<2x1x32xf32, #tpu.memory_space<vmem>>, vector<1x1x32xf32>
    %70 = vector.shape_cast %69 : vector<1x1x32xf32> to vector<1x32xf32>
    %cst_28 = arith.constant dense<0.000000e+00> : vector<16xf32>
    %71 = vector.multi_reduction <add>, %33, %cst_28 [1] : vector<16x32xf32> to vector<16xf32>
    %72 = vector.shape_cast %71 : vector<16xf32> to vector<16x1xf32>
    %cst_29 = arith.constant 3.200000e+01 : f32
    %73 = vector.broadcast %cst_29 : f32 to vector<16x1xf32>
    %74 = arith.divf %72, %73 : vector<16x1xf32>
    %75 = vector.broadcast %74 : vector<16x1xf32> to vector<16x32xf32>
    %76 = arith.subf %33, %75 : vector<16x32xf32>
    %77 = arith.mulf %76, %76 : vector<16x32xf32>
    %cst_30 = arith.constant dense<0.000000e+00> : vector<16xf32>
    %78 = vector.multi_reduction <add>, %77, %cst_30 [1] : vector<16x32xf32> to vector<16xf32>
    %79 = vector.shape_cast %78 : vector<16xf32> to vector<16x1xf32>
    %cst_31 = arith.constant 3.100000e+01 : f32
    %80 = vector.broadcast %cst_31 : f32 to vector<16x1xf32>
    %81 = arith.divf %79, %80 : vector<16x1xf32>
    %82 = math.sqrt %81 : vector<16x1xf32>
    %83 = vector.broadcast %68 : vector<1x32xf32> to vector<16x32xf32>
    %84 = arith.mulf %83, %76 : vector<16x32xf32>
    %cst_32 = arith.constant 9.99999997E-7 : f32
    %85 = vector.broadcast %cst_32 : f32 to vector<16x1xf32>
    %86 = arith.addf %82, %85 : vector<16x1xf32>
    %87 = tpu.reciprocal %86 {approx = true} : vector<16x1xf32> -> vector<16x1xf32>
    %88 = vector.broadcast %87 : vector<16x1xf32> to vector<16x32xf32>
    %89 = arith.mulf %84, %88 : vector<16x32xf32>
    %90 = vector.broadcast %70 : vector<1x32xf32> to vector<16x32xf32>
    %91 = arith.addf %89, %90 : vector<16x32xf32>
    %c0_33 = arith.constant 0 : index
    %c0_34 = arith.constant 0 : index
    %c0_35 = arith.constant 0 : index
    %92 = vector.load %arg9[%c0_33, %c0_34, %c0_35] : memref<2x32x96xf32, #tpu.memory_space<vmem>>, vector<1x32x96xf32>
    %93 = vector.shape_cast %92 : vector<1x32x96xf32> to vector<32x96xf32>
    %cst_36 = arith.constant dense<0.000000e+00> : vector<16x96xf32>
    %94 = tpu.matmul %91, %93, %cst_36 {dimension_numbers = #tpu.dot_dimension_numbers<[1], [0], [0], [1], [0, 0, 1, 1], [], []>} : vector<16x32xf32>, vector<32x96xf32>, vector<16x96xf32> -> vector<16x96xf32>
    %c0_37 = arith.constant 0 : index
    %c0_38 = arith.constant 0 : index
    %c0_39 = arith.constant 0 : index
    %95 = vector.load %arg10[%c0_37, %c0_38, %c0_39] : memref<2x1x96xf32, #tpu.memory_space<vmem>>, vector<1x1x96xf32>
    %96 = vector.shape_cast %95 : vector<1x1x96xf32> to vector<1x96xf32>
    %97 = vector.broadcast %96 : vector<1x96xf32> to vector<16x96xf32>
    %98 = arith.addf %94, %97 : vector<16x96xf32>
    %99 = vector.extract_strided_slice %98 {offsets = [0, 0], sizes = [16, 32], strides = [1, 1]} : vector<16x96xf32> to vector<16x32xf32>
    %100 = vector.extract_strided_slice %98 {offsets = [0, 32], sizes = [16, 32], strides = [1, 1]} : vector<16x96xf32> to vector<16x32xf32>
    %101 = vector.extract_strided_slice %98 {offsets = [0, 64], sizes = [16, 32], strides = [1, 1]} : vector<16x96xf32> to vector<16x32xf32>
    %cst_40 = arith.constant 0.000000e+00 : f32
    %102 = vector.broadcast %cst_40 : f32 to vector<16x32xf32>
    %103 = vector.broadcast %45 : vector<1x32xf32> to vector<16x32xf32>
    %104 = arith.mulf %99, %103 : vector<16x32xf32>
    "tpu.trace_start"() <{level = 10 : i32, message = "qd,kd->qk"}> : () -> ()
    %cst_41 = arith.constant dense<0.000000e+00> : vector<16x16xf32>
    %105 = tpu.matmul %104, %100, %cst_41 {dimension_numbers = #tpu.dot_dimension_numbers<[1], [1], [0], [0], [0, 0, 1, 0], [], []>} : vector<16x32xf32>, vector<16x32xf32>, vector<16x16xf32> -> vector<16x16xf32>
    "tpu.trace_stop"() : () -> ()
    %cst_42 = arith.constant 0.353553385 : f32
    %106 = vector.broadcast %cst_42 : f32 to vector<16x16xf32>
    %107 = arith.mulf %105, %106 : vector<16x16xf32>
    %cst_43 = arith.constant -1.000000e+09 : f32
    %108 = vector.shape_cast %37 : vector<1x16xi1> to vector<1x16xi1>
    %109 = vector.broadcast %108 : vector<1x16xi1> to vector<16x16xi1>
    %110 = vector.broadcast %cst_43 : f32 to vector<16x16xf32>
    %111 = arith.select %109, %107, %110 : vector<16x16xi1>, vector<16x16xf32>
    %cst_44 = arith.constant dense<0xFF800000> : vector<16xf32>
    %112 = vector.multi_reduction <maximumf>, %111, %cst_44 [1] : vector<16x16xf32> to vector<16xf32>
    %113 = vector.shape_cast %112 : vector<16xf32> to vector<16x1xf32>
    %114 = vector.broadcast %113 : vector<16x1xf32> to vector<16x16xf32>
    %115 = arith.subf %111, %114 : vector<16x16xf32>
    %116 = math.exp %115 : vector<16x16xf32>
    %cst_45 = arith.constant dense<0.000000e+00> : vector<16xf32>
    %117 = vector.multi_reduction <add>, %116, %cst_45 [1] : vector<16x16xf32> to vector<16xf32>
    %118 = vector.shape_cast %117 : vector<16xf32> to vector<16x1xf32>
    %119 = tpu.reciprocal %118 {approx = true} : vector<16x1xf32> -> vector<16x1xf32>
    %120 = vector.broadcast %119 : vector<16x1xf32> to vector<16x16xf32>
    %121 = arith.mulf %116, %120 : vector<16x16xf32>
    %cst_46 = arith.constant dense<0.000000e+00> : vector<16x32xf32>
    %122 = tpu.matmul %121, %101, %cst_46 {dimension_numbers = #tpu.dot_dimension_numbers<[1], [0], [0], [1], [0, 0, 1, 1], [], []>} : vector<16x16xf32>, vector<16x32xf32>, vector<16x32xf32> -> vector<16x32xf32>
    %123 = vector.broadcast %45 : vector<1x32xf32> to vector<16x32xf32>
    %124 = arith.mulf %122, %123 : vector<16x32xf32>
    %125 = arith.addf %102, %124 : vector<16x32xf32>
    %126 = vector.broadcast %52 : vector<1x32xf32> to vector<16x32xf32>
    %127 = arith.mulf %99, %126 : vector<16x32xf32>
    "tpu.trace_start"() <{level = 10 : i32, message = "qd,kd->qk"}> : () -> ()
    %cst_47 = arith.constant dense<0.000000e+00> : vector<16x16xf32>
    %128 = tpu.matmul %127, %100, %cst_47 {dimension_numbers = #tpu.dot_dimension_numbers<[1], [1], [0], [0], [0, 0, 1, 0], [], []>} : vector<16x32xf32>, vector<16x32xf32>, vector<16x16xf32> -> vector<16x16xf32>
    "tpu.trace_stop"() : () -> ()
    %cst_48 = arith.constant 0.353553385 : f32
    %129 = vector.broadcast %cst_48 : f32 to vector<16x16xf32>
    %130 = arith.mulf %128, %129 : vector<16x16xf32>
    %cst_49 = arith.constant -1.000000e+09 : f32
    %131 = vector.shape_cast %37 : vector<1x16xi1> to vector<1x16xi1>
    %132 = vector.broadcast %131 : vector<1x16xi1> to vector<16x16xi1>
    %133 = vector.broadcast %cst_49 : f32 to vector<16x16xf32>
    %134 = arith.select %132, %130, %133 : vector<16x16xi1>, vector<16x16xf32>
    %cst_50 = arith.constant dense<0xFF800000> : vector<16xf32>
    %135 = vector.multi_reduction <maximumf>, %134, %cst_50 [1] : vector<16x16xf32> to vector<16xf32>
    %136 = vector.shape_cast %135 : vector<16xf32> to vector<16x1xf32>
    %137 = vector.broadcast %136 : vector<16x1xf32> to vector<16x16xf32>
    %138 = arith.subf %134, %137 : vector<16x16xf32>
    %139 = math.exp %138 : vector<16x16xf32>
    %cst_51 = arith.constant dense<0.000000e+00> : vector<16xf32>
    %140 = vector.multi_reduction <add>, %139, %cst_51 [1] : vector<16x16xf32> to vector<16xf32>
    %141 = vector.shape_cast %140 : vector<16xf32> to vector<16x1xf32>
    %142 = tpu.reciprocal %141 {approx = true} : vector<16x1xf32> -> vector<16x1xf32>
    %143 = vector.broadcast %142 : vector<16x1xf32> to vector<16x16xf32>
    %144 = arith.mulf %139, %143 : vector<16x16xf32>
    %cst_52 = arith.constant dense<0.000000e+00> : vector<16x32xf32>
    %145 = tpu.matmul %144, %101, %cst_52 {dimension_numbers = #tpu.dot_dimension_numbers<[1], [0], [0], [1], [0, 0, 1, 1], [], []>} : vector<16x16xf32>, vector<16x32xf32>, vector<16x32xf32> -> vector<16x32xf32>
    %146 = vector.broadcast %52 : vector<1x32xf32> to vector<16x32xf32>
    %147 = arith.mulf %145, %146 : vector<16x32xf32>
    %148 = arith.addf %125, %147 : vector<16x32xf32>
    %149 = vector.broadcast %59 : vector<1x32xf32> to vector<16x32xf32>
    %150 = arith.mulf %99, %149 : vector<16x32xf32>
    "tpu.trace_start"() <{level = 10 : i32, message = "qd,kd->qk"}> : () -> ()
    %cst_53 = arith.constant dense<0.000000e+00> : vector<16x16xf32>
    %151 = tpu.matmul %150, %100, %cst_53 {dimension_numbers = #tpu.dot_dimension_numbers<[1], [1], [0], [0], [0, 0, 1, 0], [], []>} : vector<16x32xf32>, vector<16x32xf32>, vector<16x16xf32> -> vector<16x16xf32>
    "tpu.trace_stop"() : () -> ()
    %cst_54 = arith.constant 0.353553385 : f32
    %152 = vector.broadcast %cst_54 : f32 to vector<16x16xf32>
    %153 = arith.mulf %151, %152 : vector<16x16xf32>
    %cst_55 = arith.constant -1.000000e+09 : f32
    %154 = vector.shape_cast %37 : vector<1x16xi1> to vector<1x16xi1>
    %155 = vector.broadcast %154 : vector<1x16xi1> to vector<16x16xi1>
    %156 = vector.broadcast %cst_55 : f32 to vector<16x16xf32>
    %157 = arith.select %155, %153, %156 : vector<16x16xi1>, vector<16x16xf32>
    %cst_56 = arith.constant dense<0xFF800000> : vector<16xf32>
    %158 = vector.multi_reduction <maximumf>, %157, %cst_56 [1] : vector<16x16xf32> to vector<16xf32>
    %159 = vector.shape_cast %158 : vector<16xf32> to vector<16x1xf32>
    %160 = vector.broadcast %159 : vector<16x1xf32> to vector<16x16xf32>
    %161 = arith.subf %157, %160 : vector<16x16xf32>
    %162 = math.exp %161 : vector<16x16xf32>
    %cst_57 = arith.constant dense<0.000000e+00> : vector<16xf32>
    %163 = vector.multi_reduction <add>, %162, %cst_57 [1] : vector<16x16xf32> to vector<16xf32>
    %164 = vector.shape_cast %163 : vector<16xf32> to vector<16x1xf32>
    %165 = tpu.reciprocal %164 {approx = true} : vector<16x1xf32> -> vector<16x1xf32>
    %166 = vector.broadcast %165 : vector<16x1xf32> to vector<16x16xf32>
    %167 = arith.mulf %162, %166 : vector<16x16xf32>
    %cst_58 = arith.constant dense<0.000000e+00> : vector<16x32xf32>
    %168 = tpu.matmul %167, %101, %cst_58 {dimension_numbers = #tpu.dot_dimension_numbers<[1], [0], [0], [1], [0, 0, 1, 1], [], []>} : vector<16x16xf32>, vector<16x32xf32>, vector<16x32xf32> -> vector<16x32xf32>
    %169 = vector.broadcast %59 : vector<1x32xf32> to vector<16x32xf32>
    %170 = arith.mulf %168, %169 : vector<16x32xf32>
    %171 = arith.addf %148, %170 : vector<16x32xf32>
    %172 = vector.broadcast %66 : vector<1x32xf32> to vector<16x32xf32>
    %173 = arith.mulf %99, %172 : vector<16x32xf32>
    "tpu.trace_start"() <{level = 10 : i32, message = "qd,kd->qk"}> : () -> ()
    %cst_59 = arith.constant dense<0.000000e+00> : vector<16x16xf32>
    %174 = tpu.matmul %173, %100, %cst_59 {dimension_numbers = #tpu.dot_dimension_numbers<[1], [1], [0], [0], [0, 0, 1, 0], [], []>} : vector<16x32xf32>, vector<16x32xf32>, vector<16x16xf32> -> vector<16x16xf32>
    "tpu.trace_stop"() : () -> ()
    %cst_60 = arith.constant 0.353553385 : f32
    %175 = vector.broadcast %cst_60 : f32 to vector<16x16xf32>
    %176 = arith.mulf %174, %175 : vector<16x16xf32>
    %cst_61 = arith.constant -1.000000e+09 : f32
    %177 = vector.shape_cast %37 : vector<1x16xi1> to vector<1x16xi1>
    %178 = vector.broadcast %177 : vector<1x16xi1> to vector<16x16xi1>
    %179 = vector.broadcast %cst_61 : f32 to vector<16x16xf32>
    %180 = arith.select %178, %176, %179 : vector<16x16xi1>, vector<16x16xf32>
    %cst_62 = arith.constant dense<0xFF800000> : vector<16xf32>
    %181 = vector.multi_reduction <maximumf>, %180, %cst_62 [1] : vector<16x16xf32> to vector<16xf32>
    %182 = vector.shape_cast %181 : vector<16xf32> to vector<16x1xf32>
    %183 = vector.broadcast %182 : vector<16x1xf32> to vector<16x16xf32>
    %184 = arith.subf %180, %183 : vector<16x16xf32>
    %185 = math.exp %184 : vector<16x16xf32>
    %cst_63 = arith.constant dense<0.000000e+00> : vector<16xf32>
    %186 = vector.multi_reduction <add>, %185, %cst_63 [1] : vector<16x16xf32> to vector<16xf32>
    %187 = vector.shape_cast %186 : vector<16xf32> to vector<16x1xf32>
    %188 = tpu.reciprocal %187 {approx = true} : vector<16x1xf32> -> vector<16x1xf32>
    %189 = vector.broadcast %188 : vector<16x1xf32> to vector<16x16xf32>
    %190 = arith.mulf %185, %189 : vector<16x16xf32>
    %cst_64 = arith.constant dense<0.000000e+00> : vector<16x32xf32>
    %191 = tpu.matmul %190, %101, %cst_64 {dimension_numbers = #tpu.dot_dimension_numbers<[1], [0], [0], [1], [0, 0, 1, 1], [], []>} : vector<16x16xf32>, vector<16x32xf32>, vector<16x32xf32> -> vector<16x32xf32>
    %192 = vector.broadcast %66 : vector<1x32xf32> to vector<16x32xf32>
    %193 = arith.mulf %191, %192 : vector<16x32xf32>
    %194 = arith.addf %171, %193 : vector<16x32xf32>
    %c0_65 = arith.constant 0 : index
    %c0_66 = arith.constant 0 : index
    %c0_67 = arith.constant 0 : index
    %195 = vector.load %arg11[%c0_65, %c0_66, %c0_67] : memref<2x32x32xf32, #tpu.memory_space<vmem>>, vector<1x32x32xf32>
    %196 = vector.shape_cast %195 : vector<1x32x32xf32> to vector<32x32xf32>
    %cst_68 = arith.constant dense<0.000000e+00> : vector<16x32xf32>
    %197 = tpu.matmul %194, %196, %cst_68 {dimension_numbers = #tpu.dot_dimension_numbers<[1], [0], [0], [1], [0, 0, 1, 1], [], []>} : vector<16x32xf32>, vector<32x32xf32>, vector<16x32xf32> -> vector<16x32xf32>
    %c0_69 = arith.constant 0 : index
    %c0_70 = arith.constant 0 : index
    %c0_71 = arith.constant 0 : index
    %198 = vector.load %arg12[%c0_69, %c0_70, %c0_71] : memref<2x1x32xf32, #tpu.memory_space<vmem>>, vector<1x1x32xf32>
    %199 = vector.shape_cast %198 : vector<1x1x32xf32> to vector<1x32xf32>
    %200 = vector.broadcast %199 : vector<1x32xf32> to vector<16x32xf32>
    %201 = arith.addf %197, %200 : vector<16x32xf32>
    %202 = arith.addf %33, %201 : vector<16x32xf32>
    %c0_72 = arith.constant 0 : index
    %c0_73 = arith.constant 0 : index
    %c0_74 = arith.constant 0 : index
    %203 = vector.load %arg19[%c0_72, %c0_73, %c0_74] : memref<2x1x32xf32, #tpu.memory_space<vmem>>, vector<1x1x32xf32>
    %204 = vector.shape_cast %203 : vector<1x1x32xf32> to vector<1x32xf32>
    %c0_75 = arith.constant 0 : index
    %c0_76 = arith.constant 0 : index
    %c0_77 = arith.constant 0 : index
    %205 = vector.load %arg20[%c0_75, %c0_76, %c0_77] : memref<2x1x32xf32, #tpu.memory_space<vmem>>, vector<1x1x32xf32>
    %206 = vector.shape_cast %205 : vector<1x1x32xf32> to vector<1x32xf32>
    %cst_78 = arith.constant dense<0.000000e+00> : vector<16xf32>
    %207 = vector.multi_reduction <add>, %202, %cst_78 [1] : vector<16x32xf32> to vector<16xf32>
    %208 = vector.shape_cast %207 : vector<16xf32> to vector<16x1xf32>
    %cst_79 = arith.constant 3.200000e+01 : f32
    %209 = vector.broadcast %cst_79 : f32 to vector<16x1xf32>
    %210 = arith.divf %208, %209 : vector<16x1xf32>
    %211 = vector.broadcast %210 : vector<16x1xf32> to vector<16x32xf32>
    %212 = arith.subf %202, %211 : vector<16x32xf32>
    %213 = arith.mulf %212, %212 : vector<16x32xf32>
    %cst_80 = arith.constant dense<0.000000e+00> : vector<16xf32>
    %214 = vector.multi_reduction <add>, %213, %cst_80 [1] : vector<16x32xf32> to vector<16xf32>
    %215 = vector.shape_cast %214 : vector<16xf32> to vector<16x1xf32>
    %cst_81 = arith.constant 3.100000e+01 : f32
    %216 = vector.broadcast %cst_81 : f32 to vector<16x1xf32>
    %217 = arith.divf %215, %216 : vector<16x1xf32>
    %218 = math.sqrt %217 : vector<16x1xf32>
    %219 = vector.broadcast %204 : vector<1x32xf32> to vector<16x32xf32>
    %220 = arith.mulf %219, %212 : vector<16x32xf32>
    %cst_82 = arith.constant 9.99999997E-7 : f32
    %221 = vector.broadcast %cst_82 : f32 to vector<16x1xf32>
    %222 = arith.addf %218, %221 : vector<16x1xf32>
    %223 = tpu.reciprocal %222 {approx = true} : vector<16x1xf32> -> vector<16x1xf32>
    %224 = vector.broadcast %223 : vector<16x1xf32> to vector<16x32xf32>
    %225 = arith.mulf %220, %224 : vector<16x32xf32>
    %226 = vector.broadcast %206 : vector<1x32xf32> to vector<16x32xf32>
    %227 = arith.addf %225, %226 : vector<16x32xf32>
    %c0_83 = arith.constant 0 : index
    %c0_84 = arith.constant 0 : index
    %c0_85 = arith.constant 0 : index
    %228 = vector.load %arg13[%c0_83, %c0_84, %c0_85] : memref<2x32x64xf32, #tpu.memory_space<vmem>>, vector<1x32x64xf32>
    %229 = vector.shape_cast %228 : vector<1x32x64xf32> to vector<32x64xf32>
    %cst_86 = arith.constant dense<0.000000e+00> : vector<16x64xf32>
    %230 = tpu.matmul %227, %229, %cst_86 {dimension_numbers = #tpu.dot_dimension_numbers<[1], [0], [0], [1], [0, 0, 1, 1], [], []>} : vector<16x32xf32>, vector<32x64xf32>, vector<16x64xf32> -> vector<16x64xf32>
    %c0_87 = arith.constant 0 : index
    %c0_88 = arith.constant 0 : index
    %c0_89 = arith.constant 0 : index
    %231 = vector.load %arg14[%c0_87, %c0_88, %c0_89] : memref<2x1x64xf32, #tpu.memory_space<vmem>>, vector<1x1x64xf32>
    %232 = vector.shape_cast %231 : vector<1x1x64xf32> to vector<1x64xf32>
    %233 = vector.broadcast %232 : vector<1x64xf32> to vector<16x64xf32>
    %234 = arith.addf %230, %233 : vector<16x64xf32>
    %cst_90 = arith.constant 0.000000e+00 : f32
    %235 = vector.broadcast %cst_90 : f32 to vector<16x64xf32>
    %236 = arith.maximumf %234, %235 : vector<16x64xf32>
    %c0_91 = arith.constant 0 : index
    %c0_92 = arith.constant 0 : index
    %c0_93 = arith.constant 0 : index
    %237 = vector.load %arg15[%c0_91, %c0_92, %c0_93] : memref<2x64x32xf32, #tpu.memory_space<vmem>>, vector<1x64x32xf32>
    %238 = vector.shape_cast %237 : vector<1x64x32xf32> to vector<64x32xf32>
    %cst_94 = arith.constant dense<0.000000e+00> : vector<16x32xf32>
    %239 = tpu.matmul %236, %238, %cst_94 {dimension_numbers = #tpu.dot_dimension_numbers<[1], [0], [0], [1], [0, 0, 1, 1], [], []>} : vector<16x64xf32>, vector<64x32xf32>, vector<16x32xf32> -> vector<16x32xf32>
    %240 = arith.addf %202, %239 : vector<16x32xf32>
    %c0_95 = arith.constant 0 : index
    %c0_96 = arith.constant 0 : index
    %c0_97 = arith.constant 0 : index
    %241 = vector.load %arg16[%c0_95, %c0_96, %c0_97] : memref<2x1x32xf32, #tpu.memory_space<vmem>>, vector<1x1x32xf32>
    %242 = vector.shape_cast %241 : vector<1x1x32xf32> to vector<1x32xf32>
    %243 = vector.broadcast %242 : vector<1x32xf32> to vector<16x32xf32>
    %244 = arith.addf %240, %243 : vector<16x32xf32>
    %c0_98 = arith.constant 0 : index
    %c0_99 = arith.constant 0 : index
    %c0_100 = arith.constant 0 : index
    %245 = vector.load %arg21[%c0_98, %c0_99, %c0_100] : memref<2x1x32xf32, #tpu.memory_space<vmem>>, vector<1x1x32xf32>
    %246 = vector.shape_cast %245 : vector<1x1x32xf32> to vector<1x32xf32>
    %c0_101 = arith.constant 0 : index
    %c0_102 = arith.constant 0 : index
    %c0_103 = arith.constant 0 : index
    %247 = vector.load %arg22[%c0_101, %c0_102, %c0_103] : memref<2x1x32xf32, #tpu.memory_space<vmem>>, vector<1x1x32xf32>
    %248 = vector.shape_cast %247 : vector<1x1x32xf32> to vector<1x32xf32>
    %cst_104 = arith.constant dense<0.000000e+00> : vector<16xf32>
    %249 = vector.multi_reduction <add>, %244, %cst_104 [1] : vector<16x32xf32> to vector<16xf32>
    %250 = vector.shape_cast %249 : vector<16xf32> to vector<16x1xf32>
    %cst_105 = arith.constant 3.200000e+01 : f32
    %251 = vector.broadcast %cst_105 : f32 to vector<16x1xf32>
    %252 = arith.divf %250, %251 : vector<16x1xf32>
    %253 = vector.broadcast %252 : vector<16x1xf32> to vector<16x32xf32>
    %254 = arith.subf %244, %253 : vector<16x32xf32>
    %255 = arith.mulf %254, %254 : vector<16x32xf32>
    %cst_106 = arith.constant dense<0.000000e+00> : vector<16xf32>
    %256 = vector.multi_reduction <add>, %255, %cst_106 [1] : vector<16x32xf32> to vector<16xf32>
    %257 = vector.shape_cast %256 : vector<16xf32> to vector<16x1xf32>
    %cst_107 = arith.constant 3.100000e+01 : f32
    %258 = vector.broadcast %cst_107 : f32 to vector<16x1xf32>
    %259 = arith.divf %257, %258 : vector<16x1xf32>
    %260 = math.sqrt %259 : vector<16x1xf32>
    %261 = vector.broadcast %246 : vector<1x32xf32> to vector<16x32xf32>
    %262 = arith.mulf %261, %254 : vector<16x32xf32>
    %cst_108 = arith.constant 9.99999997E-7 : f32
    %263 = vector.broadcast %cst_108 : f32 to vector<16x1xf32>
    %264 = arith.addf %260, %263 : vector<16x1xf32>
    %265 = tpu.reciprocal %264 {approx = true} : vector<16x1xf32> -> vector<16x1xf32>
    %266 = vector.broadcast %265 : vector<16x1xf32> to vector<16x32xf32>
    %267 = arith.mulf %262, %266 : vector<16x32xf32>
    %268 = vector.broadcast %248 : vector<1x32xf32> to vector<16x32xf32>
    %269 = arith.addf %267, %268 : vector<16x32xf32>
    %c1 = arith.constant 1 : index
    %c0_109 = arith.constant 0 : index
    %c0_110 = arith.constant 0 : index
    %270 = vector.load %arg17[%c1, %c0_109, %c0_110] : memref<2x1x32xf32, #tpu.memory_space<vmem>>, vector<1x1x32xf32>
    %271 = vector.shape_cast %270 : vector<1x1x32xf32> to vector<1x32xf32>
    %c1_111 = arith.constant 1 : index
    %c0_112 = arith.constant 0 : index
    %c0_113 = arith.constant 0 : index
    %272 = vector.load %arg18[%c1_111, %c0_112, %c0_113] : memref<2x1x32xf32, #tpu.memory_space<vmem>>, vector<1x1x32xf32>
    %273 = vector.shape_cast %272 : vector<1x1x32xf32> to vector<1x32xf32>
    %cst_114 = arith.constant dense<0.000000e+00> : vector<16xf32>
    %274 = vector.multi_reduction <add>, %269, %cst_114 [1] : vector<16x32xf32> to vector<16xf32>
    %275 = vector.shape_cast %274 : vector<16xf32> to vector<16x1xf32>
    %cst_115 = arith.constant 3.200000e+01 : f32
    %276 = vector.broadcast %cst_115 : f32 to vector<16x1xf32>
    %277 = arith.divf %275, %276 : vector<16x1xf32>
    %278 = vector.broadcast %277 : vector<16x1xf32> to vector<16x32xf32>
    %279 = arith.subf %269, %278 : vector<16x32xf32>
    %280 = arith.mulf %279, %279 : vector<16x32xf32>
    %cst_116 = arith.constant dense<0.000000e+00> : vector<16xf32>
    %281 = vector.multi_reduction <add>, %280, %cst_116 [1] : vector<16x32xf32> to vector<16xf32>
    %282 = vector.shape_cast %281 : vector<16xf32> to vector<16x1xf32>
    %cst_117 = arith.constant 3.100000e+01 : f32
    %283 = vector.broadcast %cst_117 : f32 to vector<16x1xf32>
    %284 = arith.divf %282, %283 : vector<16x1xf32>
    %285 = math.sqrt %284 : vector<16x1xf32>
    %286 = vector.broadcast %271 : vector<1x32xf32> to vector<16x32xf32>
    %287 = arith.mulf %286, %279 : vector<16x32xf32>
    %cst_118 = arith.constant 9.99999997E-7 : f32
    %288 = vector.broadcast %cst_118 : f32 to vector<16x1xf32>
    %289 = arith.addf %285, %288 : vector<16x1xf32>
    %290 = tpu.reciprocal %289 {approx = true} : vector<16x1xf32> -> vector<16x1xf32>
    %291 = vector.broadcast %290 : vector<16x1xf32> to vector<16x32xf32>
    %292 = arith.mulf %287, %291 : vector<16x32xf32>
    %293 = vector.broadcast %273 : vector<1x32xf32> to vector<16x32xf32>
    %294 = arith.addf %292, %293 : vector<16x32xf32>
    %c1_119 = arith.constant 1 : index
    %c0_120 = arith.constant 0 : index
    %c0_121 = arith.constant 0 : index
    %295 = vector.load %arg9[%c1_119, %c0_120, %c0_121] : memref<2x32x96xf32, #tpu.memory_space<vmem>>, vector<1x32x96xf32>
    %296 = vector.shape_cast %295 : vector<1x32x96xf32> to vector<32x96xf32>
    %cst_122 = arith.constant dense<0.000000e+00> : vector<16x96xf32>
    %297 = tpu.matmul %294, %296, %cst_122 {dimension_numbers = #tpu.dot_dimension_numbers<[1], [0], [0], [1], [0, 0, 1, 1], [], []>} : vector<16x32xf32>, vector<32x96xf32>, vector<16x96xf32> -> vector<16x96xf32>
    %c1_123 = arith.constant 1 : index
    %c0_124 = arith.constant 0 : index
    %c0_125 = arith.constant 0 : index
    %298 = vector.load %arg10[%c1_123, %c0_124, %c0_125] : memref<2x1x96xf32, #tpu.memory_space<vmem>>, vector<1x1x96xf32>
    %299 = vector.shape_cast %298 : vector<1x1x96xf32> to vector<1x96xf32>
    %300 = vector.broadcast %299 : vector<1x96xf32> to vector<16x96xf32>
    %301 = arith.addf %297, %300 : vector<16x96xf32>
    %302 = vector.extract_strided_slice %301 {offsets = [0, 0], sizes = [16, 32], strides = [1, 1]} : vector<16x96xf32> to vector<16x32xf32>
    %303 = vector.extract_strided_slice %301 {offsets = [0, 32], sizes = [16, 32], strides = [1, 1]} : vector<16x96xf32> to vector<16x32xf32>
    %304 = vector.extract_strided_slice %301 {offsets = [0, 64], sizes = [16, 32], strides = [1, 1]} : vector<16x96xf32> to vector<16x32xf32>
    %cst_126 = arith.constant 0.000000e+00 : f32
    %305 = vector.broadcast %cst_126 : f32 to vector<16x32xf32>
    %306 = vector.broadcast %45 : vector<1x32xf32> to vector<16x32xf32>
    %307 = arith.mulf %302, %306 : vector<16x32xf32>
    "tpu.trace_start"() <{level = 10 : i32, message = "qd,kd->qk"}> : () -> ()
    %cst_127 = arith.constant dense<0.000000e+00> : vector<16x16xf32>
    %308 = tpu.matmul %307, %303, %cst_127 {dimension_numbers = #tpu.dot_dimension_numbers<[1], [1], [0], [0], [0, 0, 1, 0], [], []>} : vector<16x32xf32>, vector<16x32xf32>, vector<16x16xf32> -> vector<16x16xf32>
    "tpu.trace_stop"() : () -> ()
    %cst_128 = arith.constant 0.353553385 : f32
    %309 = vector.broadcast %cst_128 : f32 to vector<16x16xf32>
    %310 = arith.mulf %308, %309 : vector<16x16xf32>
    %cst_129 = arith.constant -1.000000e+09 : f32
    %311 = vector.shape_cast %37 : vector<1x16xi1> to vector<1x16xi1>
    %312 = vector.broadcast %311 : vector<1x16xi1> to vector<16x16xi1>
    %313 = vector.broadcast %cst_129 : f32 to vector<16x16xf32>
    %314 = arith.select %312, %310, %313 : vector<16x16xi1>, vector<16x16xf32>
    %cst_130 = arith.constant dense<0xFF800000> : vector<16xf32>
    %315 = vector.multi_reduction <maximumf>, %314, %cst_130 [1] : vector<16x16xf32> to vector<16xf32>
    %316 = vector.shape_cast %315 : vector<16xf32> to vector<16x1xf32>
    %317 = vector.broadcast %316 : vector<16x1xf32> to vector<16x16xf32>
    %318 = arith.subf %314, %317 : vector<16x16xf32>
    %319 = math.exp %318 : vector<16x16xf32>
    %cst_131 = arith.constant dense<0.000000e+00> : vector<16xf32>
    %320 = vector.multi_reduction <add>, %319, %cst_131 [1] : vector<16x16xf32> to vector<16xf32>
    %321 = vector.shape_cast %320 : vector<16xf32> to vector<16x1xf32>
    %322 = tpu.reciprocal %321 {approx = true} : vector<16x1xf32> -> vector<16x1xf32>
    %323 = vector.broadcast %322 : vector<16x1xf32> to vector<16x16xf32>
    %324 = arith.mulf %319, %323 : vector<16x16xf32>
    %cst_132 = arith.constant dense<0.000000e+00> : vector<16x32xf32>
    %325 = tpu.matmul %324, %304, %cst_132 {dimension_numbers = #tpu.dot_dimension_numbers<[1], [0], [0], [1], [0, 0, 1, 1], [], []>} : vector<16x16xf32>, vector<16x32xf32>, vector<16x32xf32> -> vector<16x32xf32>
    %326 = vector.broadcast %45 : vector<1x32xf32> to vector<16x32xf32>
    %327 = arith.mulf %325, %326 : vector<16x32xf32>
    %328 = arith.addf %305, %327 : vector<16x32xf32>
    %329 = vector.broadcast %52 : vector<1x32xf32> to vector<16x32xf32>
    %330 = arith.mulf %302, %329 : vector<16x32xf32>
    "tpu.trace_start"() <{level = 10 : i32, message = "qd,kd->qk"}> : () -> ()
    %cst_133 = arith.constant dense<0.000000e+00> : vector<16x16xf32>
    %331 = tpu.matmul %330, %303, %cst_133 {dimension_numbers = #tpu.dot_dimension_numbers<[1], [1], [0], [0], [0, 0, 1, 0], [], []>} : vector<16x32xf32>, vector<16x32xf32>, vector<16x16xf32> -> vector<16x16xf32>
    "tpu.trace_stop"() : () -> ()
    %cst_134 = arith.constant 0.353553385 : f32
    %332 = vector.broadcast %cst_134 : f32 to vector<16x16xf32>
    %333 = arith.mulf %331, %332 : vector<16x16xf32>
    %cst_135 = arith.constant -1.000000e+09 : f32
    %334 = vector.shape_cast %37 : vector<1x16xi1> to vector<1x16xi1>
    %335 = vector.broadcast %334 : vector<1x16xi1> to vector<16x16xi1>
    %336 = vector.broadcast %cst_135 : f32 to vector<16x16xf32>
    %337 = arith.select %335, %333, %336 : vector<16x16xi1>, vector<16x16xf32>
    %cst_136 = arith.constant dense<0xFF800000> : vector<16xf32>
    %338 = vector.multi_reduction <maximumf>, %337, %cst_136 [1] : vector<16x16xf32> to vector<16xf32>
    %339 = vector.shape_cast %338 : vector<16xf32> to vector<16x1xf32>
    %340 = vector.broadcast %339 : vector<16x1xf32> to vector<16x16xf32>
    %341 = arith.subf %337, %340 : vector<16x16xf32>
    %342 = math.exp %341 : vector<16x16xf32>
    %cst_137 = arith.constant dense<0.000000e+00> : vector<16xf32>
    %343 = vector.multi_reduction <add>, %342, %cst_137 [1] : vector<16x16xf32> to vector<16xf32>
    %344 = vector.shape_cast %343 : vector<16xf32> to vector<16x1xf32>
    %345 = tpu.reciprocal %344 {approx = true} : vector<16x1xf32> -> vector<16x1xf32>
    %346 = vector.broadcast %345 : vector<16x1xf32> to vector<16x16xf32>
    %347 = arith.mulf %342, %346 : vector<16x16xf32>
    %cst_138 = arith.constant dense<0.000000e+00> : vector<16x32xf32>
    %348 = tpu.matmul %347, %304, %cst_138 {dimension_numbers = #tpu.dot_dimension_numbers<[1], [0], [0], [1], [0, 0, 1, 1], [], []>} : vector<16x16xf32>, vector<16x32xf32>, vector<16x32xf32> -> vector<16x32xf32>
    %349 = vector.broadcast %52 : vector<1x32xf32> to vector<16x32xf32>
    %350 = arith.mulf %348, %349 : vector<16x32xf32>
    %351 = arith.addf %328, %350 : vector<16x32xf32>
    %352 = vector.broadcast %59 : vector<1x32xf32> to vector<16x32xf32>
    %353 = arith.mulf %302, %352 : vector<16x32xf32>
    "tpu.trace_start"() <{level = 10 : i32, message = "qd,kd->qk"}> : () -> ()
    %cst_139 = arith.constant dense<0.000000e+00> : vector<16x16xf32>
    %354 = tpu.matmul %353, %303, %cst_139 {dimension_numbers = #tpu.dot_dimension_numbers<[1], [1], [0], [0], [0, 0, 1, 0], [], []>} : vector<16x32xf32>, vector<16x32xf32>, vector<16x16xf32> -> vector<16x16xf32>
    "tpu.trace_stop"() : () -> ()
    %cst_140 = arith.constant 0.353553385 : f32
    %355 = vector.broadcast %cst_140 : f32 to vector<16x16xf32>
    %356 = arith.mulf %354, %355 : vector<16x16xf32>
    %cst_141 = arith.constant -1.000000e+09 : f32
    %357 = vector.shape_cast %37 : vector<1x16xi1> to vector<1x16xi1>
    %358 = vector.broadcast %357 : vector<1x16xi1> to vector<16x16xi1>
    %359 = vector.broadcast %cst_141 : f32 to vector<16x16xf32>
    %360 = arith.select %358, %356, %359 : vector<16x16xi1>, vector<16x16xf32>
    %cst_142 = arith.constant dense<0xFF800000> : vector<16xf32>
    %361 = vector.multi_reduction <maximumf>, %360, %cst_142 [1] : vector<16x16xf32> to vector<16xf32>
    %362 = vector.shape_cast %361 : vector<16xf32> to vector<16x1xf32>
    %363 = vector.broadcast %362 : vector<16x1xf32> to vector<16x16xf32>
    %364 = arith.subf %360, %363 : vector<16x16xf32>
    %365 = math.exp %364 : vector<16x16xf32>
    %cst_143 = arith.constant dense<0.000000e+00> : vector<16xf32>
    %366 = vector.multi_reduction <add>, %365, %cst_143 [1] : vector<16x16xf32> to vector<16xf32>
    %367 = vector.shape_cast %366 : vector<16xf32> to vector<16x1xf32>
    %368 = tpu.reciprocal %367 {approx = true} : vector<16x1xf32> -> vector<16x1xf32>
    %369 = vector.broadcast %368 : vector<16x1xf32> to vector<16x16xf32>
    %370 = arith.mulf %365, %369 : vector<16x16xf32>
    %cst_144 = arith.constant dense<0.000000e+00> : vector<16x32xf32>
    %371 = tpu.matmul %370, %304, %cst_144 {dimension_numbers = #tpu.dot_dimension_numbers<[1], [0], [0], [1], [0, 0, 1, 1], [], []>} : vector<16x16xf32>, vector<16x32xf32>, vector<16x32xf32> -> vector<16x32xf32>
    %372 = vector.broadcast %59 : vector<1x32xf32> to vector<16x32xf32>
    %373 = arith.mulf %371, %372 : vector<16x32xf32>
    %374 = arith.addf %351, %373 : vector<16x32xf32>
    %375 = vector.broadcast %66 : vector<1x32xf32> to vector<16x32xf32>
    %376 = arith.mulf %302, %375 : vector<16x32xf32>
    "tpu.trace_start"() <{level = 10 : i32, message = "qd,kd->qk"}> : () -> ()
    %cst_145 = arith.constant dense<0.000000e+00> : vector<16x16xf32>
    %377 = tpu.matmul %376, %303, %cst_145 {dimension_numbers = #tpu.dot_dimension_numbers<[1], [1], [0], [0], [0, 0, 1, 0], [], []>} : vector<16x32xf32>, vector<16x32xf32>, vector<16x16xf32> -> vector<16x16xf32>
    "tpu.trace_stop"() : () -> ()
    %cst_146 = arith.constant 0.353553385 : f32
    %378 = vector.broadcast %cst_146 : f32 to vector<16x16xf32>
    %379 = arith.mulf %377, %378 : vector<16x16xf32>
    %cst_147 = arith.constant -1.000000e+09 : f32
    %380 = vector.shape_cast %37 : vector<1x16xi1> to vector<1x16xi1>
    %381 = vector.broadcast %380 : vector<1x16xi1> to vector<16x16xi1>
    %382 = vector.broadcast %cst_147 : f32 to vector<16x16xf32>
    %383 = arith.select %381, %379, %382 : vector<16x16xi1>, vector<16x16xf32>
    %cst_148 = arith.constant dense<0xFF800000> : vector<16xf32>
    %384 = vector.multi_reduction <maximumf>, %383, %cst_148 [1] : vector<16x16xf32> to vector<16xf32>
    %385 = vector.shape_cast %384 : vector<16xf32> to vector<16x1xf32>
    %386 = vector.broadcast %385 : vector<16x1xf32> to vector<16x16xf32>
    %387 = arith.subf %383, %386 : vector<16x16xf32>
    %388 = math.exp %387 : vector<16x16xf32>
    %cst_149 = arith.constant dense<0.000000e+00> : vector<16xf32>
    %389 = vector.multi_reduction <add>, %388, %cst_149 [1] : vector<16x16xf32> to vector<16xf32>
    %390 = vector.shape_cast %389 : vector<16xf32> to vector<16x1xf32>
    %391 = tpu.reciprocal %390 {approx = true} : vector<16x1xf32> -> vector<16x1xf32>
    %392 = vector.broadcast %391 : vector<16x1xf32> to vector<16x16xf32>
    %393 = arith.mulf %388, %392 : vector<16x16xf32>
    %cst_150 = arith.constant dense<0.000000e+00> : vector<16x32xf32>
    %394 = tpu.matmul %393, %304, %cst_150 {dimension_numbers = #tpu.dot_dimension_numbers<[1], [0], [0], [1], [0, 0, 1, 1], [], []>} : vector<16x16xf32>, vector<16x32xf32>, vector<16x32xf32> -> vector<16x32xf32>
    %395 = vector.broadcast %66 : vector<1x32xf32> to vector<16x32xf32>
    %396 = arith.mulf %394, %395 : vector<16x32xf32>
    %397 = arith.addf %374, %396 : vector<16x32xf32>
    %c1_151 = arith.constant 1 : index
    %c0_152 = arith.constant 0 : index
    %c0_153 = arith.constant 0 : index
    %398 = vector.load %arg11[%c1_151, %c0_152, %c0_153] : memref<2x32x32xf32, #tpu.memory_space<vmem>>, vector<1x32x32xf32>
    %399 = vector.shape_cast %398 : vector<1x32x32xf32> to vector<32x32xf32>
    %cst_154 = arith.constant dense<0.000000e+00> : vector<16x32xf32>
    %400 = tpu.matmul %397, %399, %cst_154 {dimension_numbers = #tpu.dot_dimension_numbers<[1], [0], [0], [1], [0, 0, 1, 1], [], []>} : vector<16x32xf32>, vector<32x32xf32>, vector<16x32xf32> -> vector<16x32xf32>
    %c1_155 = arith.constant 1 : index
    %c0_156 = arith.constant 0 : index
    %c0_157 = arith.constant 0 : index
    %401 = vector.load %arg12[%c1_155, %c0_156, %c0_157] : memref<2x1x32xf32, #tpu.memory_space<vmem>>, vector<1x1x32xf32>
    %402 = vector.shape_cast %401 : vector<1x1x32xf32> to vector<1x32xf32>
    %403 = vector.broadcast %402 : vector<1x32xf32> to vector<16x32xf32>
    %404 = arith.addf %400, %403 : vector<16x32xf32>
    %405 = arith.addf %269, %404 : vector<16x32xf32>
    %c1_158 = arith.constant 1 : index
    %c0_159 = arith.constant 0 : index
    %c0_160 = arith.constant 0 : index
    %406 = vector.load %arg19[%c1_158, %c0_159, %c0_160] : memref<2x1x32xf32, #tpu.memory_space<vmem>>, vector<1x1x32xf32>
    %407 = vector.shape_cast %406 : vector<1x1x32xf32> to vector<1x32xf32>
    %c1_161 = arith.constant 1 : index
    %c0_162 = arith.constant 0 : index
    %c0_163 = arith.constant 0 : index
    %408 = vector.load %arg20[%c1_161, %c0_162, %c0_163] : memref<2x1x32xf32, #tpu.memory_space<vmem>>, vector<1x1x32xf32>
    %409 = vector.shape_cast %408 : vector<1x1x32xf32> to vector<1x32xf32>
    %cst_164 = arith.constant dense<0.000000e+00> : vector<16xf32>
    %410 = vector.multi_reduction <add>, %405, %cst_164 [1] : vector<16x32xf32> to vector<16xf32>
    %411 = vector.shape_cast %410 : vector<16xf32> to vector<16x1xf32>
    %cst_165 = arith.constant 3.200000e+01 : f32
    %412 = vector.broadcast %cst_165 : f32 to vector<16x1xf32>
    %413 = arith.divf %411, %412 : vector<16x1xf32>
    %414 = vector.broadcast %413 : vector<16x1xf32> to vector<16x32xf32>
    %415 = arith.subf %405, %414 : vector<16x32xf32>
    %416 = arith.mulf %415, %415 : vector<16x32xf32>
    %cst_166 = arith.constant dense<0.000000e+00> : vector<16xf32>
    %417 = vector.multi_reduction <add>, %416, %cst_166 [1] : vector<16x32xf32> to vector<16xf32>
    %418 = vector.shape_cast %417 : vector<16xf32> to vector<16x1xf32>
    %cst_167 = arith.constant 3.100000e+01 : f32
    %419 = vector.broadcast %cst_167 : f32 to vector<16x1xf32>
    %420 = arith.divf %418, %419 : vector<16x1xf32>
    %421 = math.sqrt %420 : vector<16x1xf32>
    %422 = vector.broadcast %407 : vector<1x32xf32> to vector<16x32xf32>
    %423 = arith.mulf %422, %415 : vector<16x32xf32>
    %cst_168 = arith.constant 9.99999997E-7 : f32
    %424 = vector.broadcast %cst_168 : f32 to vector<16x1xf32>
    %425 = arith.addf %421, %424 : vector<16x1xf32>
    %426 = tpu.reciprocal %425 {approx = true} : vector<16x1xf32> -> vector<16x1xf32>
    %427 = vector.broadcast %426 : vector<16x1xf32> to vector<16x32xf32>
    %428 = arith.mulf %423, %427 : vector<16x32xf32>
    %429 = vector.broadcast %409 : vector<1x32xf32> to vector<16x32xf32>
    %430 = arith.addf %428, %429 : vector<16x32xf32>
    %c1_169 = arith.constant 1 : index
    %c0_170 = arith.constant 0 : index
    %c0_171 = arith.constant 0 : index
    %431 = vector.load %arg13[%c1_169, %c0_170, %c0_171] : memref<2x32x64xf32, #tpu.memory_space<vmem>>, vector<1x32x64xf32>
    %432 = vector.shape_cast %431 : vector<1x32x64xf32> to vector<32x64xf32>
    %cst_172 = arith.constant dense<0.000000e+00> : vector<16x64xf32>
    %433 = tpu.matmul %430, %432, %cst_172 {dimension_numbers = #tpu.dot_dimension_numbers<[1], [0], [0], [1], [0, 0, 1, 1], [], []>} : vector<16x32xf32>, vector<32x64xf32>, vector<16x64xf32> -> vector<16x64xf32>
    %c1_173 = arith.constant 1 : index
    %c0_174 = arith.constant 0 : index
    %c0_175 = arith.constant 0 : index
    %434 = vector.load %arg14[%c1_173, %c0_174, %c0_175] : memref<2x1x64xf32, #tpu.memory_space<vmem>>, vector<1x1x64xf32>
    %435 = vector.shape_cast %434 : vector<1x1x64xf32> to vector<1x64xf32>
    %436 = vector.broadcast %435 : vector<1x64xf32> to vector<16x64xf32>
    %437 = arith.addf %433, %436 : vector<16x64xf32>
    %cst_176 = arith.constant 0.000000e+00 : f32
    %438 = vector.broadcast %cst_176 : f32 to vector<16x64xf32>
    %439 = arith.maximumf %437, %438 : vector<16x64xf32>
    %c1_177 = arith.constant 1 : index
    %c0_178 = arith.constant 0 : index
    %c0_179 = arith.constant 0 : index
    %440 = vector.load %arg15[%c1_177, %c0_178, %c0_179] : memref<2x64x32xf32, #tpu.memory_space<vmem>>, vector<1x64x32xf32>
    %441 = vector.shape_cast %440 : vector<1x64x32xf32> to vector<64x32xf32>
    %cst_180 = arith.constant dense<0.000000e+00> : vector<16x32xf32>
    %442 = tpu.matmul %439, %441, %cst_180 {dimension_numbers = #tpu.dot_dimension_numbers<[1], [0], [0], [1], [0, 0, 1, 1], [], []>} : vector<16x64xf32>, vector<64x32xf32>, vector<16x32xf32> -> vector<16x32xf32>
    %443 = arith.addf %405, %442 : vector<16x32xf32>
    %c1_181 = arith.constant 1 : index
    %c0_182 = arith.constant 0 : index
    %c0_183 = arith.constant 0 : index
    %444 = vector.load %arg16[%c1_181, %c0_182, %c0_183] : memref<2x1x32xf32, #tpu.memory_space<vmem>>, vector<1x1x32xf32>
    %445 = vector.shape_cast %444 : vector<1x1x32xf32> to vector<1x32xf32>
    %446 = vector.broadcast %445 : vector<1x32xf32> to vector<16x32xf32>
    %447 = arith.addf %443, %446 : vector<16x32xf32>
    %c1_184 = arith.constant 1 : index
    %c0_185 = arith.constant 0 : index
    %c0_186 = arith.constant 0 : index
    %448 = vector.load %arg21[%c1_184, %c0_185, %c0_186] : memref<2x1x32xf32, #tpu.memory_space<vmem>>, vector<1x1x32xf32>
    %449 = vector.shape_cast %448 : vector<1x1x32xf32> to vector<1x32xf32>
    %c1_187 = arith.constant 1 : index
    %c0_188 = arith.constant 0 : index
    %c0_189 = arith.constant 0 : index
    %450 = vector.load %arg22[%c1_187, %c0_188, %c0_189] : memref<2x1x32xf32, #tpu.memory_space<vmem>>, vector<1x1x32xf32>
    %451 = vector.shape_cast %450 : vector<1x1x32xf32> to vector<1x32xf32>
    %cst_190 = arith.constant dense<0.000000e+00> : vector<16xf32>
    %452 = vector.multi_reduction <add>, %447, %cst_190 [1] : vector<16x32xf32> to vector<16xf32>
    %453 = vector.shape_cast %452 : vector<16xf32> to vector<16x1xf32>
    %cst_191 = arith.constant 3.200000e+01 : f32
    %454 = vector.broadcast %cst_191 : f32 to vector<16x1xf32>
    %455 = arith.divf %453, %454 : vector<16x1xf32>
    %456 = vector.broadcast %455 : vector<16x1xf32> to vector<16x32xf32>
    %457 = arith.subf %447, %456 : vector<16x32xf32>
    %458 = arith.mulf %457, %457 : vector<16x32xf32>
    %cst_192 = arith.constant dense<0.000000e+00> : vector<16xf32>
    %459 = vector.multi_reduction <add>, %458, %cst_192 [1] : vector<16x32xf32> to vector<16xf32>
    %460 = vector.shape_cast %459 : vector<16xf32> to vector<16x1xf32>
    %cst_193 = arith.constant 3.100000e+01 : f32
    %461 = vector.broadcast %cst_193 : f32 to vector<16x1xf32>
    %462 = arith.divf %460, %461 : vector<16x1xf32>
    %463 = math.sqrt %462 : vector<16x1xf32>
    %464 = vector.broadcast %449 : vector<1x32xf32> to vector<16x32xf32>
    %465 = arith.mulf %464, %457 : vector<16x32xf32>
    %cst_194 = arith.constant 9.99999997E-7 : f32
    %466 = vector.broadcast %cst_194 : f32 to vector<16x1xf32>
    %467 = arith.addf %463, %466 : vector<16x1xf32>
    %468 = tpu.reciprocal %467 {approx = true} : vector<16x1xf32> -> vector<16x1xf32>
    %469 = vector.broadcast %468 : vector<16x1xf32> to vector<16x32xf32>
    %470 = arith.mulf %465, %469 : vector<16x32xf32>
    %471 = vector.broadcast %451 : vector<1x32xf32> to vector<16x32xf32>
    %472 = arith.addf %470, %471 : vector<16x32xf32>
    %c0_195 = arith.constant 0 : index
    %c0_196 = arith.constant 0 : index
    %c0_197 = arith.constant 0 : index
    %473 = vector.load %arg29[%c0_195, %c0_196, %c0_197] : memref<1x16x32xf32, #tpu.memory_space<vmem>>, vector<1x16x32xf32>
    %474 = vector.shape_cast %473 : vector<1x16x32xf32> to vector<16x32xf32>
    %475 = vector.shape_cast %472 : vector<16x32xf32> to vector<1x16x32xf32>
    tpu.vector_store %arg29[%c0_195, %c0_196, %c0_197], %475 {strides = array<i32>} : memref<1x16x32xf32, #tpu.memory_space<vmem>>, vector<1x16x32xf32>,
    %c0_198 = arith.constant 0 : index
    %c0_199 = arith.constant 0 : index
    %476 = vector.load %arg23[%c0_198, %c0_199] : memref<32x5xf32, #tpu.memory_space<vmem>>, vector<32x5xf32>
    %cst_200 = arith.constant dense<0.000000e+00> : vector<16x5xf32>
    %477 = tpu.matmul %472, %476, %cst_200 {dimension_numbers = #tpu.dot_dimension_numbers<[1], [0], [0], [1], [0, 0, 1, 1], [], []>} : vector<16x32xf32>, vector<32x5xf32>, vector<16x5xf32> -> vector<16x5xf32>
    %c0_201 = arith.constant 0 : index
    %c0_202 = arith.constant 0 : index
    %478 = vector.load %arg24[%c0_201, %c0_202] : memref<1x5xf32, #tpu.memory_space<vmem>>, vector<1x5xf32>
    %479 = vector.broadcast %478 : vector<1x5xf32> to vector<16x5xf32>
    %480 = arith.addf %477, %479 : vector<16x5xf32>
    %c0_203 = arith.constant 0 : index
    %c0_204 = arith.constant 0 : index
    %c0_205 = arith.constant 0 : index
    %481 = vector.load %arg3[%c0_203, %c0_204, %c0_205] : memref<1x16x1xi32, #tpu.memory_space<vmem>>, vector<1x16x1xi32>
    %482 = vector.shape_cast %481 : vector<1x16x1xi32> to vector<16x1xi32>
    %cst_206 = arith.constant dense<0xFF800000> : vector<16xf32>
    %483 = vector.multi_reduction <maximumf>, %480, %cst_206 [1] : vector<16x5xf32> to vector<16xf32>
    %484 = vector.shape_cast %483 : vector<16xf32> to vector<16x1xf32>
    %485 = vector.broadcast %484 : vector<16x1xf32> to vector<16x5xf32>
    %486 = arith.subf %480, %485 : vector<16x5xf32>
    %487 = math.exp %486 : vector<16x5xf32>
    %cst_207 = arith.constant dense<0.000000e+00> : vector<16xf32>
    %488 = vector.multi_reduction <add>, %487, %cst_207 [1] : vector<16x5xf32> to vector<16xf32>
    %489 = vector.shape_cast %488 : vector<16xf32> to vector<16x1xf32>
    %490 = math.log %489 : vector<16x1xf32>
    %491 = vector.broadcast %490 : vector<16x1xf32> to vector<16x5xf32>
    %492 = arith.subf %486, %491 : vector<16x5xf32>
    %493 = tpu.iota {dimensions = array<i32: 1>} : vector<16x5xi32>
    %494 = vector.broadcast %482 : vector<16x1xi32> to vector<16x5xi32>
    %495 = arith.cmpi eq, %493, %494 : vector<16x5xi32>
    %496 = arith.extui %495 : vector<16x5xi1> to vector<16x5xi32>
    %497 = arith.sitofp %496 : vector<16x5xi32> to vector<16x5xf32>
    %498 = arith.mulf %492, %497 : vector<16x5xf32>
    %cst_208 = arith.constant dense<0.000000e+00> : vector<16xf32>
    %499 = vector.multi_reduction <add>, %498, %cst_208 [1] : vector<16x5xf32> to vector<16xf32>
    %500 = vector.shape_cast %499 : vector<16xf32> to vector<16x1xf32>
    %cst_209 = arith.constant 0.000000e+00 : f32
    %501 = vector.broadcast %cst_209 : f32 to vector<16x1xf32>
    %502 = arith.subf %501, %500 : vector<16x1xf32>
    %c0_i32_210 = arith.constant 0 : i32
    %503 = vector.broadcast %c0_i32_210 : i32 to vector<16x1xi32>
    %504 = arith.cmpi sge, %482, %503 : vector<16x1xi32>
    %505 = arith.extui %504 : vector<16x1xi1> to vector<16x1xi32>
    %506 = arith.sitofp %505 : vector<16x1xi32> to vector<16x1xf32>
    %507 = arith.mulf %502, %506 : vector<16x1xf32>
    %508 = vector.broadcast %484 : vector<16x1xf32> to vector<16x5xf32>
    %509 = arith.cmpf oge, %480, %508 : vector<16x5xf32>
    %510 = arith.sitofp %493 : vector<16x5xi32> to vector<16x5xf32>
    %cst_211 = arith.constant 5.000000e+00 : f32
    %511 = vector.broadcast %cst_211 : f32 to vector<16x5xf32>
    %512 = arith.select %509, %510, %511 : vector<16x5xi1>, vector<16x5xf32>
    %cst_212 = arith.constant dense<0x7F800000> : vector<16xf32>
    %513 = vector.multi_reduction <minimumf>, %512, %cst_212 [1] : vector<16x5xf32> to vector<16xf32>
    %514 = vector.shape_cast %513 : vector<16xf32> to vector<16x1xf32>
    %515 = arith.fptosi %514 : vector<16x1xf32> to vector<16x1xi32>
    %c0_213 = arith.constant 0 : index
    %c0_214 = arith.constant 0 : index
    %c0_215 = arith.constant 0 : index
    %516 = vector.load %arg30[%c0_213, %c0_214, %c0_215] : memref<1x16x1xf32, #tpu.memory_space<vmem>>, vector<1x16x1xf32>
    %517 = vector.shape_cast %516 : vector<1x16x1xf32> to vector<16x1xf32>
    %518 = vector.shape_cast %507 : vector<16x1xf32> to vector<1x16x1xf32>
    tpu.vector_store %arg30[%c0_213, %c0_214, %c0_215], %518 {strides = array<i32>} : memref<1x16x1xf32, #tpu.memory_space<vmem>>, vector<1x16x1xf32>,
    %c0_216 = arith.constant 0 : index
    %c0_217 = arith.constant 0 : index
    %c0_218 = arith.constant 0 : index
    %519 = vector.load %arg31[%c0_216, %c0_217, %c0_218] : memref<1x16x1xi32, #tpu.memory_space<vmem>>, vector<1x16x1xi32>
    %520 = vector.shape_cast %519 : vector<1x16x1xi32> to vector<16x1xi32>
    %521 = vector.shape_cast %515 : vector<16x1xi32> to vector<1x16x1xi32>
    tpu.vector_store %arg31[%c0_216, %c0_217, %c0_218], %521 {strides = array<i32>} : memref<1x16x1xi32, #tpu.memory_space<vmem>>, vector<1x16x1xi32>,
    %c0_219 = arith.constant 0 : index
    %c0_220 = arith.constant 0 : index
    %522 = vector.load %arg25[%c0_219, %c0_220] : memref<32x16xf32, #tpu.memory_space<vmem>>, vector<32x16xf32>
    %cst_221 = arith.constant dense<0.000000e+00> : vector<16x16xf32>
    %523 = tpu.matmul %472, %522, %cst_221 {dimension_numbers = #tpu.dot_dimension_numbers<[1], [0], [0], [1], [0, 0, 1, 1], [], []>} : vector<16x32xf32>, vector<32x16xf32>, vector<16x16xf32> -> vector<16x16xf32>
    %c0_222 = arith.constant 0 : index
    %c0_223 = arith.constant 0 : index
    %524 = vector.load %arg26[%c0_222, %c0_223] : memref<1x16xf32, #tpu.memory_space<vmem>>, vector<1x16xf32>
    %525 = vector.broadcast %524 : vector<1x16xf32> to vector<16x16xf32>
    %526 = arith.addf %523, %525 : vector<16x16xf32>
    %cst_224 = arith.constant 0.000000e+00 : f32
    %527 = vector.broadcast %cst_224 : f32 to vector<16x16xf32>
    %528 = arith.maximumf %526, %527 : vector<16x16xf32>
    %c0_225 = arith.constant 0 : index
    %c0_226 = arith.constant 0 : index
    %529 = vector.load %arg27[%c0_225, %c0_226] : memref<16x2xf32, #tpu.memory_space<vmem>>, vector<16x2xf32>
    %cst_227 = arith.constant dense<0.000000e+00> : vector<16x2xf32>
    %530 = tpu.matmul %528, %529, %cst_227 {dimension_numbers = #tpu.dot_dimension_numbers<[1], [0], [0], [1], [0, 0, 1, 1], [], []>} : vector<16x16xf32>, vector<16x2xf32>, vector<16x2xf32> -> vector<16x2xf32>
    %c0_228 = arith.constant 0 : index
    %c0_229 = arith.constant 0 : index
    %531 = vector.load %arg28[%c0_228, %c0_229] : memref<1x2xf32, #tpu.memory_space<vmem>>, vector<1x2xf32>
    %532 = vector.broadcast %531 : vector<1x2xf32> to vector<16x2xf32>
    %533 = arith.addf %530, %532 : vector<16x2xf32>
    %c0_230 = arith.constant 0 : index
    %c0_231 = arith.constant 0 : index
    %c0_232 = arith.constant 0 : index
    %534 = vector.load %arg4[%c0_230, %c0_231, %c0_232] : memref<1x16x1xi32, #tpu.memory_space<vmem>>, vector<1x16x1xi32>
    %535 = vector.shape_cast %534 : vector<1x16x1xi32> to vector<16x1xi32>
    %cst_233 = arith.constant dense<0xFF800000> : vector<16xf32>
    %536 = vector.multi_reduction <maximumf>, %533, %cst_233 [1] : vector<16x2xf32> to vector<16xf32>
    %537 = vector.shape_cast %536 : vector<16xf32> to vector<16x1xf32>
    %538 = vector.broadcast %537 : vector<16x1xf32> to vector<16x2xf32>
    %539 = arith.subf %533, %538 : vector<16x2xf32>
    %540 = math.exp %539 : vector<16x2xf32>
    %cst_234 = arith.constant dense<0.000000e+00> : vector<16xf32>
    %541 = vector.multi_reduction <add>, %540, %cst_234 [1] : vector<16x2xf32> to vector<16xf32>
    %542 = vector.shape_cast %541 : vector<16xf32> to vector<16x1xf32>
    %543 = math.log %542 : vector<16x1xf32>
    %544 = vector.broadcast %543 : vector<16x1xf32> to vector<16x2xf32>
    %545 = arith.subf %539, %544 : vector<16x2xf32>
    %546 = tpu.iota {dimensions = array<i32: 1>} : vector<16x2xi32>
    %547 = vector.broadcast %535 : vector<16x1xi32> to vector<16x2xi32>
    %548 = arith.cmpi eq, %546, %547 : vector<16x2xi32>
    %549 = arith.extui %548 : vector<16x2xi1> to vector<16x2xi32>
    %550 = arith.sitofp %549 : vector<16x2xi32> to vector<16x2xf32>
    %551 = arith.mulf %545, %550 : vector<16x2xf32>
    %cst_235 = arith.constant dense<0.000000e+00> : vector<16xf32>
    %552 = vector.multi_reduction <add>, %551, %cst_235 [1] : vector<16x2xf32> to vector<16xf32>
    %553 = vector.shape_cast %552 : vector<16xf32> to vector<16x1xf32>
    %cst_236 = arith.constant 0.000000e+00 : f32
    %554 = vector.broadcast %cst_236 : f32 to vector<16x1xf32>
    %555 = arith.subf %554, %553 : vector<16x1xf32>
    %c0_i32_237 = arith.constant 0 : i32
    %556 = vector.broadcast %c0_i32_237 : i32 to vector<16x1xi32>
    %557 = arith.cmpi sge, %535, %556 : vector<16x1xi32>
    %558 = arith.extui %557 : vector<16x1xi1> to vector<16x1xi32>
    %559 = arith.sitofp %558 : vector<16x1xi32> to vector<16x1xf32>
    %560 = arith.mulf %555, %559 : vector<16x1xf32>
    %561 = vector.broadcast %537 : vector<16x1xf32> to vector<16x2xf32>
    %562 = arith.cmpf oge, %533, %561 : vector<16x2xf32>
    %563 = arith.sitofp %546 : vector<16x2xi32> to vector<16x2xf32>
    %cst_238 = arith.constant 2.000000e+00 : f32
    %564 = vector.broadcast %cst_238 : f32 to vector<16x2xf32>
    %565 = arith.select %562, %563, %564 : vector<16x2xi1>, vector<16x2xf32>
    %cst_239 = arith.constant dense<0x7F800000> : vector<16xf32>
    %566 = vector.multi_reduction <minimumf>, %565, %cst_239 [1] : vector<16x2xf32> to vector<16xf32>
    %567 = vector.shape_cast %566 : vector<16xf32> to vector<16x1xf32>
    %568 = arith.fptosi %567 : vector<16x1xf32> to vector<16x1xi32>
    %c0_240 = arith.constant 0 : index
    %c0_241 = arith.constant 0 : index
    %c0_242 = arith.constant 0 : index
    %569 = vector.load %arg32[%c0_240, %c0_241, %c0_242] : memref<1x16x1xf32, #tpu.memory_space<vmem>>, vector<1x16x1xf32>
    %570 = vector.shape_cast %569 : vector<1x16x1xf32> to vector<16x1xf32>
    %571 = vector.shape_cast %560 : vector<16x1xf32> to vector<1x16x1xf32>
    tpu.vector_store %arg32[%c0_240, %c0_241, %c0_242], %571 {strides = array<i32>} : memref<1x16x1xf32, #tpu.memory_space<vmem>>, vector<1x16x1xf32>,
    %c0_243 = arith.constant 0 : index
    %c0_244 = arith.constant 0 : index
    %c0_245 = arith.constant 0 : index
    %572 = vector.load %arg33[%c0_243, %c0_244, %c0_245] : memref<1x16x1xi32, #tpu.memory_space<vmem>>, vector<1x16x1xi32>
    %573 = vector.shape_cast %572 : vector<1x16x1xi32> to vector<16x1xi32>
    %574 = vector.shape_cast %568 : vector<16x1xi32> to vector<1x16x1xi32>
    tpu.vector_store %arg33[%c0_243, %c0_244, %c0_245], %574 {strides = array<i32>} : memref<1x16x1xi32, #tpu.memory_space<vmem>>, vector<1x16x1xi32>,
    return
  }
  func.func @transform_0(%arg0: i32) -> (i32, i32, i32) {
    %c0_i32 = arith.constant 0 : i32
    %c0_i32_0 = arith.constant 0 : i32
    %c0_i32_1 = arith.constant 0 : i32
    return %arg0, %c0_i32, %c0_i32_0 : i32, i32, i32
  }
  func.func @transform_1(%arg0: i32) -> (i32, i32, i32) {
    %c0_i32 = arith.constant 0 : i32
    %c0_i32_0 = arith.constant 0 : i32
    %c0_i32_1 = arith.constant 0 : i32
    return %arg0, %c0_i32, %c0_i32_0 : i32, i32, i32
  }
  func.func @transform_2(%arg0: i32) -> (i32, i32, i32) {
    %c0_i32 = arith.constant 0 : i32
    %c0_i32_0 = arith.constant 0 : i32
    %c0_i32_1 = arith.constant 0 : i32
    return %arg0, %c0_i32, %c0_i32_0 : i32, i32, i32
  }
  func.func @transform_3(%arg0: i32) -> (i32, i32, i32) {
    %c0_i32 = arith.constant 0 : i32
    %c0_i32_0 = arith.constant 0 : i32
    %c0_i32_1 = arith.constant 0 : i32
    return %arg0, %c0_i32, %c0_i32_0 : i32, i32, i32
  }
  func.func @transform_4(%arg0: i32) -> (i32, i32) {
    %c0_i32 = arith.constant 0 : i32
    %c0_i32_0 = arith.constant 0 : i32
    %c0_i32_1 = arith.constant 0 : i32
    return %c0_i32, %c0_i32_0 : i32, i32
  }
  func.func @transform_5(%arg0: i32) -> (i32, i32) {
    %c0_i32 = arith.constant 0 : i32
    %c0_i32_0 = arith.constant 0 : i32
    %c0_i32_1 = arith.constant 0 : i32
    return %c0_i32, %c0_i32_0 : i32, i32
  }
  func.func @transform_6(%arg0: i32) -> (i32, i32) {
    %c0_i32 = arith.constant 0 : i32
    %c0_i32_0 = arith.constant 0 : i32
    %c0_i32_1 = arith.constant 0 : i32
    return %c0_i32, %c0_i32_0 : i32, i32
  }
  func.func @transform_7(%arg0: i32) -> (i32, i32) {
    %c0_i32 = arith.constant 0 : i32
    %c0_i32_0 = arith.constant 0 : i32
    %c0_i32_1 = arith.constant 0 : i32
    return %c0_i32, %c0_i32_0 : i32, i32
  }
  func.func @transform_8(%arg0: i32) -> (i32, i32, i32) {
    %c0_i32 = arith.constant 0 : i32
    %c0_i32_0 = arith.constant 0 : i32
    %c0_i32_1 = arith.constant 0 : i32
    %c0_i32_2 = arith.constant 0 : i32
    return %c0_i32, %c0_i32_0, %c0_i32_1 : i32, i32, i32
  }
  func.func @transform_9(%arg0: i32) -> (i32, i32, i32) {
    %c0_i32 = arith.constant 0 : i32
    %c0_i32_0 = arith.constant 0 : i32
    %c0_i32_1 = arith.constant 0 : i32
    %c0_i32_2 = arith.constant 0 : i32
    return %c0_i32, %c0_i32_0, %c0_i32_1 : i32, i32, i32
  }
  func.func @transform_10(%arg0: i32) -> (i32, i32, i32) {
    %c0_i32 = arith.constant 0 : i32
    %c0_i32_0 = arith.constant 0 : i32
    %c0_i32_1 = arith.constant 0 : i32
    %c0_i32_2 = arith.constant 0 : i32
    return %c0_i32, %c0_i32_0, %c0_i32_1 : i32, i32, i32
  }
  func.func @transform_11(%arg0: i32) -> (i32, i32, i32) {
    %c0_i32 = arith.constant 0 : i32
    %c0_i32_0 = arith.constant 0 : i32
    %c0_i32_1 = arith.constant 0 : i32
    %c0_i32_2 = arith.constant 0 : i32
    return %c0_i32, %c0_i32_0, %c0_i32_1 : i32, i32, i32
  }
  func.func @transform_12(%arg0: i32) -> (i32, i32, i32) {
    %c0_i32 = arith.constant 0 : i32
    %c0_i32_0 = arith.constant 0 : i32
    %c0_i32_1 = arith.constant 0 : i32
    %c0_i32_2 = arith.constant 0 : i32
    return %c0_i32, %c0_i32_0, %c0_i32_1 : i32, i32, i32
  }
  func.func @transform_13(%arg0: i32) -> (i32, i32, i32) {
    %c0_i32 = arith.constant 0 : i32
    %c0_i32_0 = arith.constant 0 : i32
    %c0_i32_1 = arith.constant 0 : i32
    %c0_i32_2 = arith.constant 0 : i32
    return %c0_i32, %c0_i32_0, %c0_i32_1 : i32, i32, i32
  }
  func.func @transform_14(%arg0: i32) -> (i32, i32, i32) {
    %c0_i32 = arith.constant 0 : i32
    %c0_i32_0 = arith.constant 0 : i32
    %c0_i32_1 = arith.constant 0 : i32
    %c0_i32_2 = arith.constant 0 : i32
    return %c0_i32, %c0_i32_0, %c0_i32_1 : i32, i32, i32
  }
  func.func @transform_15(%arg0: i32) -> (i32, i32, i32) {
    %c0_i32 = arith.constant 0 : i32
    %c0_i32_0 = arith.constant 0 : i32
    %c0_i32_1 = arith.constant 0 : i32
    %c0_i32_2 = arith.constant 0 : i32
    return %c0_i32, %c0_i32_0, %c0_i32_1 : i32, i32, i32
  }
  func.func @transform_16(%arg0: i32) -> (i32, i32, i32) {
    %c0_i32 = arith.constant 0 : i32
    %c0_i32_0 = arith.constant 0 : i32
    %c0_i32_1 = arith.constant 0 : i32
    %c0_i32_2 = arith.constant 0 : i32
    return %c0_i32, %c0_i32_0, %c0_i32_1 : i32, i32, i32
  }
  func.func @transform_17(%arg0: i32) -> (i32, i32, i32) {
    %c0_i32 = arith.constant 0 : i32
    %c0_i32_0 = arith.constant 0 : i32
    %c0_i32_1 = arith.constant 0 : i32
    %c0_i32_2 = arith.constant 0 : i32
    return %c0_i32, %c0_i32_0, %c0_i32_1 : i32, i32, i32
  }
  func.func @transform_18(%arg0: i32) -> (i32, i32, i32) {
    %c0_i32 = arith.constant 0 : i32
    %c0_i32_0 = arith.constant 0 : i32
    %c0_i32_1 = arith.constant 0 : i32
    %c0_i32_2 = arith.constant 0 : i32
    return %c0_i32, %c0_i32_0, %c0_i32_1 : i32, i32, i32
  }
  func.func @transform_19(%arg0: i32) -> (i32, i32, i32) {
    %c0_i32 = arith.constant 0 : i32
    %c0_i32_0 = arith.constant 0 : i32
    %c0_i32_1 = arith.constant 0 : i32
    %c0_i32_2 = arith.constant 0 : i32
    return %c0_i32, %c0_i32_0, %c0_i32_1 : i32, i32, i32
  }
  func.func @transform_20(%arg0: i32) -> (i32, i32, i32) {
    %c0_i32 = arith.constant 0 : i32
    %c0_i32_0 = arith.constant 0 : i32
    %c0_i32_1 = arith.constant 0 : i32
    %c0_i32_2 = arith.constant 0 : i32
    return %c0_i32, %c0_i32_0, %c0_i32_1 : i32, i32, i32
  }
  func.func @transform_21(%arg0: i32) -> (i32, i32, i32) {
    %c0_i32 = arith.constant 0 : i32
    %c0_i32_0 = arith.constant 0 : i32
    %c0_i32_1 = arith.constant 0 : i32
    %c0_i32_2 = arith.constant 0 : i32
    return %c0_i32, %c0_i32_0, %c0_i32_1 : i32, i32, i32
  }
  func.func @transform_22(%arg0: i32) -> (i32, i32) {
    %c0_i32 = arith.constant 0 : i32
    %c0_i32_0 = arith.constant 0 : i32
    %c0_i32_1 = arith.constant 0 : i32
    return %c0_i32, %c0_i32_0 : i32, i32
  }
  func.func @transform_23(%arg0: i32) -> (i32, i32) {
    %c0_i32 = arith.constant 0 : i32
    %c0_i32_0 = arith.constant 0 : i32
    %c0_i32_1 = arith.constant 0 : i32
    return %c0_i32, %c0_i32_0 : i32, i32
  }
  func.func @transform_24(%arg0: i32) -> (i32, i32) {
    %c0_i32 = arith.constant 0 : i32
    %c0_i32_0 = arith.constant 0 : i32
    %c0_i32_1 = arith.constant 0 : i32
    return %c0_i32, %c0_i32_0 : i32, i32
  }
  func.func @transform_25(%arg0: i32) -> (i32, i32) {
    %c0_i32 = arith.constant 0 : i32
    %c0_i32_0 = arith.constant 0 : i32
    %c0_i32_1 = arith.constant 0 : i32
    return %c0_i32, %c0_i32_0 : i32, i32
  }
  func.func @transform_26(%arg0: i32) -> (i32, i32) {
    %c0_i32 = arith.constant 0 : i32
    %c0_i32_0 = arith.constant 0 : i32
    %c0_i32_1 = arith.constant 0 : i32
    return %c0_i32, %c0_i32_0 : i32, i32
  }
  func.func @transform_27(%arg0: i32) -> (i32, i32) {
    %c0_i32 = arith.constant 0 : i32
    %c0_i32_0 = arith.constant 0 : i32
    %c0_i32_1 = arith.constant 0 : i32
    return %c0_i32, %c0_i32_0 : i32, i32
  }
  func.func @transform_28(%arg0: i32) -> (i32, i32, i32) {
    %c0_i32 = arith.constant 0 : i32
    %c0_i32_0 = arith.constant 0 : i32
    %c0_i32_1 = arith.constant 0 : i32
    return %arg0, %c0_i32, %c0_i32_0 : i32, i32, i32
  }
  func.func @transform_29(%arg0: i32) -> (i32, i32, i32) {
    %c0_i32 = arith.constant 0 : i32
    %c0_i32_0 = arith.constant 0 : i32
    %c0_i32_1 = arith.constant 0 : i32
    return %arg0, %c0_i32, %c0_i32_0 : i32, i32, i32
  }
  func.func @transform_30(%arg0: i32) -> (i32, i32, i32) {
    %c0_i32 = arith.constant 0 : i32
    %c0_i32_0 = arith.constant 0 : i32
    %c0_i32_1 = arith.constant 0 : i32
    return %arg0, %c0_i32, %c0_i32_0 : i32, i32, i32
  }
  func.func @transform_31(%arg0: i32) -> (i32, i32, i32) {
    %c0_i32 = arith.constant 0 : i32
    %c0_i32_0 = arith.constant 0 : i32
    %c0_i32_1 = arith.constant 0 : i32
    return %arg0, %c0_i32, %c0_i32_0 : i32, i32, i32
  }
  func.func @transform_32(%arg0: i32) -> (i32, i32, i32) {
    %c0_i32 = arith.constant 0 : i32
    %c0_i32_0 = arith.constant 0 : i32
    %c0_i32_1 = arith.constant 0 : i32
    return %arg0, %c0_i32, %c0_i32_0 : i32, i32, i32
  }
}

</mosaic_0001>

<llo_original>
// kernel: _lambda_.1
$region0: #{_lambda_.1}
  #allocation0 [shape = 'u32[]', space=smem, size = 0x4, offset = 0x4, fixed_abs, tag = 'smem constant byte address 0x4 - core index']
  #allocation1 [shape = 'u32[144,128]{1,0:T(1,128)}', space=vmem, size = 0x12000, scoped, tag = 'internal scratch']
  %s0 = inlined_call_operand.smem [shape: u32[33], index: -1, kind: input, shape index: {}]
  %s1 = sld [smem:[%s0]]
  %s2 = scalar_lea.smem %s0, 1
  %s3 = sld [smem:[%s2]]
  %s4 = scalar_lea.smem %s0, 2
  %s5 = sld [smem:[%s4]]
  %s6 = scalar_lea.smem %s0, 3
  %s7 = sld [smem:[%s6]]
  %s8 = scalar_lea.smem %s0, 4
  %s9 = sld [smem:[%s8]]
  %s10 = scalar_lea.smem %s0, 5
  %s11 = sld [smem:[%s10]]
  %s12 = scalar_lea.smem %s0, 6
  %s13 = sld [smem:[%s12]]
  %s14 = scalar_lea.smem %s0, 7
  %s15 = sld [smem:[%s14]]
  %s16 = scalar_lea.smem %s0, 8
  %s17 = sld [smem:[%s16]]
  %s18 = scalar_lea.smem %s0, 9
  %s19 = sld [smem:[%s18]]
  %s20 = scalar_lea.smem %s0, 10
  %s21 = sld [smem:[%s20]]
  %s22 = scalar_lea.smem %s0, 11
  %s23 = sld [smem:[%s22]]
  %s24 = scalar_lea.smem %s0, 12
  %s25 = sld [smem:[%s24]]
  %s26 = scalar_lea.smem %s0, 13
  %s27 = sld [smem:[%s26]]
  %s28 = scalar_lea.smem %s0, 14
  %s29 = sld [smem:[%s28]]
  %s30 = scalar_lea.smem %s0, 15
  %s31 = sld [smem:[%s30]]
  %s32 = scalar_lea.smem %s0, 16
  %s33 = sld [smem:[%s32]]
  %s34 = scalar_lea.smem %s0, 17
  %s35 = sld [smem:[%s34]]
  %s36 = scalar_lea.smem %s0, 18
  %s37 = sld [smem:[%s36]]
  %s38 = scalar_lea.smem %s0, 19
  %s39 = sld [smem:[%s38]]
  %s40 = scalar_lea.smem %s0, 20
  %s41 = sld [smem:[%s40]]
  %s42 = scalar_lea.smem %s0, 21
  %s43 = sld [smem:[%s42]]
  %s44 = scalar_lea.smem %s0, 22
  %s45 = sld [smem:[%s44]]
  %s46 = scalar_lea.smem %s0, 23
  %s47 = sld [smem:[%s46]]
  %s48 = scalar_lea.smem %s0, 24
  %s49 = sld [smem:[%s48]]
  %s50 = scalar_lea.smem %s0, 25
  %s51 = sld [smem:[%s50]]
  %s52 = scalar_lea.smem %s0, 26
  %s53 = sld [smem:[%s52]]
  %s54 = scalar_lea.smem %s0, 27
  %s55 = sld [smem:[%s54]]
  %s56 = scalar_lea.smem %s0, 28
  %s57 = sld [smem:[%s56]]
  %s58 = scalar_lea.smem %s0, 29
  %s59 = sld [smem:[%s58]]
  %s60 = scalar_lea.smem %s0, 30
  %s61 = sld [smem:[%s60]]
  %s62 = scalar_lea.smem %s0, 31
  %s63 = sld [smem:[%s62]]
  %s64 = scalar_lea.smem %s0, 32
  %s65 = sld [smem:[%s64]]
  %66 = xla_tuple %s57, %s59, %s61, %s63, %s65
  %s67 = sld [smem:[#allocation0]]
  $region177: #{_lambda_.1} parent=0
    _
  %s69 = ssub.s32 1, %s67
  %s70 = scalar_select 0, %s69, %s67
  $region1: #{_lambda_.1} parent=0
    #allocation2 [shape = 'u8[16384]{0}', space=vmem, size = 0x4000, scoped, tag = 'output window, operand 0']
    #allocation3 [shape = 's32[2]{0}', space=sflag, size = 0x8, scoped, tag = 'scoped memory for _lambda_.1']
    %71 = vsyncpa [#allocation3], 0
    %s72 = scalar_lea.sflag [#allocation3], 1
    %73 = vsyncpa %s72, 0
    loop: start=0, step=1, limit=6
    $region2: #{_lambda_.1} parent=1 // loop_pre_header
      _
    $region3: #{_lambda_.1} parent=1 // loop_header
      %s75 = sphi 0, %s79
      %p76 = scmp.ge.s32.totalorder %s75, 6
      %s85 = sphi 0, %s87
      %s88 = sphi 0, %s85
      %s89 = sphi 0, %s88
      %s105 = sphi 0, %s89
      %s111 = sphi 0, %s113
      %s114 = sphi 0, %s111
      %s115 = sphi 0, %s114
      %s131 = sphi 0, %s115
      %s137 = sphi 0, %s139
      %s140 = sphi 0, %s137
      %s141 = sphi 0, %s140
      %s157 = sphi 0, %s141
      %s163 = sphi 0, %s165
      %s166 = sphi 0, %s163
      %s167 = sphi 0, %s166
      %s183 = sphi 0, %s167
      %s187 = sphi 0, %s187
      %s189 = sphi 0, %s187
      %s190 = sphi 0, %s189
      %s204 = sphi 0, %s190
      %s208 = sphi 0, %s208
      %s210 = sphi 0, %s208
      %s211 = sphi 0, %s210
      %s225 = sphi 0, %s211
      %s229 = sphi 0, %s229
      %s231 = sphi 0, %s229
      %s232 = sphi 0, %s231
      %s246 = sphi 0, %s232
      %s250 = sphi 0, %s250
      %s252 = sphi 0, %s250
      %s253 = sphi 0, %s252
      %s267 = sphi 0, %s253
      %s271 = sphi 0, %s271
      %s273 = sphi 0, %s271
      %s274 = sphi 0, %s273
      %s288 = sphi 0, %s274
      %s292 = sphi 0, %s292
      %s294 = sphi 0, %s292
      %s295 = sphi 0, %s294
      %s309 = sphi 0, %s295
      %s313 = sphi 0, %s313
      %s315 = sphi 0, %s313
      %s316 = sphi 0, %s315
      %s330 = sphi 0, %s316
      %s334 = sphi 0, %s334
      %s336 = sphi 0, %s334
      %s337 = sphi 0, %s336
      %s351 = sphi 0, %s337
      %s355 = sphi 0, %s355
      %s357 = sphi 0, %s355
      %s358 = sphi 0, %s357
      %s372 = sphi 0, %s358
      %s376 = sphi 0, %s376
      %s378 = sphi 0, %s376
      %s379 = sphi 0, %s378
      %s393 = sphi 0, %s379
      %s397 = sphi 0, %s397
      %s399 = sphi 0, %s397
      %s400 = sphi 0, %s399
      %s414 = sphi 0, %s400
      %s418 = sphi 0, %s418
      %s420 = sphi 0, %s418
      %s421 = sphi 0, %s420
      %s435 = sphi 0, %s421
      %s439 = sphi 0, %s439
      %s441 = sphi 0, %s439
      %s442 = sphi 0, %s441
      %s456 = sphi 0, %s442
      %s460 = sphi 0, %s460
      %s462 = sphi 0, %s460
      %s463 = sphi 0, %s462
      %s477 = sphi 0, %s463
      %s481 = sphi 0, %s481
      %s483 = sphi 0, %s481
      %s484 = sphi 0, %s483
      %s498 = sphi 0, %s484
      %s502 = sphi 0, %s502
      %s504 = sphi 0, %s502
      %s505 = sphi 0, %s504
      %s519 = sphi 0, %s505
      %s523 = sphi 0, %s523
      %s525 = sphi 0, %s523
      %s526 = sphi 0, %s525
      %s540 = sphi 0, %s526
      %s544 = sphi 0, %s544
      %s546 = sphi 0, %s544
      %s547 = sphi 0, %s546
      %s561 = sphi 0, %s547
      %s565 = sphi 0, %s565
      %s567 = sphi 0, %s565
      %s568 = sphi 0, %s567
      %s582 = sphi 0, %s568
      %s586 = sphi 0, %s586
      %s588 = sphi 0, %s586
      %s589 = sphi 0, %s588
      %s603 = sphi 0, %s589
      %s607 = sphi 0, %s607
      %s609 = sphi 0, %s607
      %s610 = sphi 0, %s609
      %s624 = sphi 0, %s610
      %s628 = sphi 0, %s628
      %s630 = sphi 0, %s628
      %s631 = sphi 0, %s630
      %s645 = sphi 0, %s631
      %s649 = sphi 0, %s649
      %s651 = sphi 0, %s649
      %s652 = sphi 0, %s651
      %s666 = sphi 0, %s652
      %s670 = sphi 0, %s670
      %s672 = sphi 0, %s670
      %s673 = sphi 0, %s672
      %s687 = sphi 0, %s673
      %s693 = sphi 0, %s695
      %s696 = sphi 0, %s693
      %s697 = sphi 0, %s696
      %s713 = sphi 0, %s697
      %s719 = sphi 0, %s721
      %s722 = sphi 0, %s719
      %s723 = sphi 0, %s722
      %s739 = sphi 0, %s723
      %s745 = sphi 0, %s747
      %s748 = sphi 0, %s745
      %s749 = sphi 0, %s748
      %s765 = sphi 0, %s749
      %s771 = sphi 0, %s773
      %s774 = sphi 0, %s771
      %s775 = sphi 0, %s774
      %s791 = sphi 0, %s775
      %s797 = sphi 0, %s799
      %s800 = sphi 0, %s797
      %s801 = sphi 0, %s800
      %s817 = sphi 0, %s801
    $region4: #{_lambda_.1} parent=1 // loop_header_branch
      %78 = sbr.rel (%p76) target = $region8
    $region5: #{_lambda_.1} parent=1 // loop_body
      %s80 = ssub.s32 %s75, 1
      %s81 = ssub.s32 %s75, 2
      %s82 = sadd.s32 %s75, 1
      %s83 = ssub.s32 %s75, %s82
      %p84 = scmp.eq.s32.totalorder %s83, 0
      %s86 = sadd.s32 %s85, 1
      %s87 = scalar_select %p84, %s85, %s86
      %p90 = pneg %p84
      %p91 = scmp.eq.s32.totalorder %s75, 3
      %p92 = por %p90, %p91
      %p93 = scmp.ne.s32.totalorder %s85, %s88
      %p94 = scmp.eq.s32.totalorder %s75, 0
      %p95 = por %p93, %p94
      %p96 = scmp.ne.s32.totalorder %s85, %s88
      %p97 = scmp.eq.s32.totalorder %s80, 3
      %p98 = por %p96, %p97
      %p99 = scmp.ne.s32.totalorder %s88, %s89
      %p100 = scmp.eq.s32.totalorder %s80, 0
      %p101 = por %p99, %p100
      %p102 = scmp.ne.s32.totalorder %s88, %s89
      %p103 = scmp.eq.s32.totalorder %s81, 3
      %p104 = por %p102, %p103
      %p106 = scmp.ne.s32.totalorder %s89, %s105
      %p107 = scmp.eq.s32.totalorder %s81, 0
      %p108 = por %p106, %p107
      %s109 = ssub.s32 %s75, %s82
      %p110 = scmp.eq.s32.totalorder %s109, 0
      %s112 = sadd.s32 %s111, 1
      %s113 = scalar_select %p110, %s111, %s112
      %p116 = pneg %p110
      %p117 = scmp.eq.s32.totalorder %s75, 3
      %p118 = por %p116, %p117
      %p119 = scmp.ne.s32.totalorder %s111, %s114
      %p120 = scmp.eq.s32.totalorder %s75, 0
      %p121 = por %p119, %p120
      %p122 = scmp.ne.s32.totalorder %s111, %s114
      %p123 = scmp.eq.s32.totalorder %s80, 3
      %p124 = por %p122, %p123
      %p125 = scmp.ne.s32.totalorder %s114, %s115
      %p126 = scmp.eq.s32.totalorder %s80, 0
      %p127 = por %p125, %p126
      %p128 = scmp.ne.s32.totalorder %s114, %s115
      %p129 = scmp.eq.s32.totalorder %s81, 3
      %p130 = por %p128, %p129
      %p132 = scmp.ne.s32.totalorder %s115, %s131
      %p133 = scmp.eq.s32.totalorder %s81, 0
      %p134 = por %p132, %p133
      %s135 = ssub.s32 %s75, %s82
      %p136 = scmp.eq.s32.totalorder %s135, 0
      %s138 = sadd.s32 %s137, 1
      %s139 = scalar_select %p136, %s137, %s138
      %p142 = pneg %p136
      %p143 = scmp.eq.s32.totalorder %s75, 3
      %p144 = por %p142, %p143
      %p145 = scmp.ne.s32.totalorder %s137, %s140
      %p146 = scmp.eq.s32.totalorder %s75, 0
      %p147 = por %p145, %p146
      %p148 = scmp.ne.s32.totalorder %s137, %s140
      %p149 = scmp.eq.s32.totalorder %s80, 3
      %p150 = por %p148, %p149
      %p151 = scmp.ne.s32.totalorder %s140, %s141
      %p152 = scmp.eq.s32.totalorder %s80, 0
      %p153 = por %p151, %p152
      %p154 = scmp.ne.s32.totalorder %s140, %s141
      %p155 = scmp.eq.s32.totalorder %s81, 3
      %p156 = por %p154, %p155
      %p158 = scmp.ne.s32.totalorder %s141, %s157
      %p159 = scmp.eq.s32.totalorder %s81, 0
      %p160 = por %p158, %p159
      %s161 = ssub.s32 %s75, %s82
      %p162 = scmp.eq.s32.totalorder %s161, 0
      %s164 = sadd.s32 %s163, 1
      %s165 = scalar_select %p162, %s163, %s164
      %p168 = pneg %p162
      %p169 = scmp.eq.s32.totalorder %s75, 3
      %p170 = por %p168, %p169
      %p171 = scmp.ne.s32.totalorder %s163, %s166
      %p172 = scmp.eq.s32.totalorder %s75, 0
      %p173 = por %p171, %p172
      %p174 = scmp.ne.s32.totalorder %s163, %s166
      %p175 = scmp.eq.s32.totalorder %s80, 3
      %p176 = por %p174, %p175
      %p177 = scmp.ne.s32.totalorder %s166, %s167
      %p178 = scmp.eq.s32.totalorder %s80, 0
      %p179 = por %p177, %p178
      %p180 = scmp.ne.s32.totalorder %s166, %s167
      %p181 = scmp.eq.s32.totalorder %s81, 3
      %p182 = por %p180, %p181
      %p184 = scmp.ne.s32.totalorder %s167, %s183
      %p185 = scmp.eq.s32.totalorder %s81, 0
      %p186 = por %p184, %p185
      %s188 = sadd.s32 %s187, 1
      %p191 = scmp.eq.s32.totalorder %s75, 3
      %p192 = scmp.ne.s32.totalorder %s187, %s189
      %p193 = scmp.eq.s32.totalorder %s75, 0
      %p194 = por %p192, %p193
      %p195 = scmp.ne.s32.totalorder %s187, %s189
      %p196 = scmp.eq.s32.totalorder %s80, 3
      %p197 = por %p195, %p196
      %p198 = scmp.ne.s32.totalorder %s189, %s190
      %p199 = scmp.eq.s32.totalorder %s80, 0
      %p200 = por %p198, %p199
      %p201 = scmp.ne.s32.totalorder %s189, %s190
      %p202 = scmp.eq.s32.totalorder %s81, 3
      %p203 = por %p201, %p202
      %p205 = scmp.ne.s32.totalorder %s190, %s204
      %p206 = scmp.eq.s32.totalorder %s81, 0
      %p207 = por %p205, %p206
      %s209 = sadd.s32 %s208, 1
      %p212 = scmp.eq.s32.totalorder %s75, 3
      %p213 = scmp.ne.s32.totalorder %s208, %s210
      %p214 = scmp.eq.s32.totalorder %s75, 0
      %p215 = por %p213, %p214
      %p216 = scmp.ne.s32.totalorder %s208, %s210
      %p217 = scmp.eq.s32.totalorder %s80, 3
      %p218 = por %p216, %p217
      %p219 = scmp.ne.s32.totalorder %s210, %s211
      %p220 = scmp.eq.s32.totalorder %s80, 0
      %p221 = por %p219, %p220
      %p222 = scmp.ne.s32.totalorder %s210, %s211
      %p223 = scmp.eq.s32.totalorder %s81, 3
      %p224 = por %p222, %p223
      %p226 = scmp.ne.s32.totalorder %s211, %s225
      %p227 = scmp.eq.s32.totalorder %s81, 0
      %p228 = por %p226, %p227
      %s230 = sadd.s32 %s229, 1
      %p233 = scmp.eq.s32.totalorder %s75, 3
      %p234 = scmp.ne.s32.totalorder %s229, %s231
      %p235 = scmp.eq.s32.totalorder %s75, 0
      %p236 = por %p234, %p235
      %p237 = scmp.ne.s32.totalorder %s229, %s231
      %p238 = scmp.eq.s32.totalorder %s80, 3
      %p239 = por %p237, %p238
      %p240 = scmp.ne.s32.totalorder %s231, %s232
      %p241 = scmp.eq.s32.totalorder %s80, 0
      %p242 = por %p240, %p241
      %p243 = scmp.ne.s32.totalorder %s231, %s232
      %p244 = scmp.eq.s32.totalorder %s81, 3
      %p245 = por %p243, %p244
      %p247 = scmp.ne.s32.totalorder %s232, %s246
      %p248 = scmp.eq.s32.totalorder %s81, 0
      %p249 = por %p247, %p248
      %s251 = sadd.s32 %s250, 1
      %p254 = scmp.eq.s32.totalorder %s75, 3
      %p255 = scmp.ne.s32.totalorder %s250, %s252
      %p256 = scmp.eq.s32.totalorder %s75, 0
      %p257 = por %p255, %p256
      %p258 = scmp.ne.s32.totalorder %s250, %s252
      %p259 = scmp.eq.s32.totalorder %s80, 3
      %p260 = por %p258, %p259
      %p261 = scmp.ne.s32.totalorder %s252, %s253
      %p262 = scmp.eq.s32.totalorder %s80, 0
      %p263 = por %p261, %p262
      %p264 = scmp.ne.s32.totalorder %s252, %s253
      %p265 = scmp.eq.s32.totalorder %s81, 3
      %p266 = por %p264, %p265
      %p268 = scmp.ne.s32.totalorder %s253, %s267
      %p269 = scmp.eq.s32.totalorder %s81, 0
      %p270 = por %p268, %p269
      %s272 = sadd.s32 %s271, 1
      %p275 = scmp.eq.s32.totalorder %s75, 3
      %p276 = scmp.ne.s32.totalorder %s271, %s273
      %p277 = scmp.eq.s32.totalorder %s75, 0
      %p278 = por %p276, %p277
      %p279 = scmp.ne.s32.totalorder %s271, %s273
      %p280 = scmp.eq.s32.totalorder %s80, 3
      %p281 = por %p279, %p280
      %p282 = scmp.ne.s32.totalorder %s273, %s274
      %p283 = scmp.eq.s32.totalorder %s80, 0
      %p284 = por %p282, %p283
      %p285 = scmp.ne.s32.totalorder %s273, %s274
      %p286 = scmp.eq.s32.totalorder %s81, 3
      %p287 = por %p285, %p286
      %p289 = scmp.ne.s32.totalorder %s274, %s288
      %p290 = scmp.eq.s32.totalorder %s81, 0
      %p291 = por %p289, %p290
      %s293 = sadd.s32 %s292, 1
      %p296 = scmp.eq.s32.totalorder %s75, 3
      %p297 = scmp.ne.s32.totalorder %s292, %s294
      %p298 = scmp.eq.s32.totalorder %s75, 0
      %p299 = por %p297, %p298
      %p300 = scmp.ne.s32.totalorder %s292, %s294
      %p301 = scmp.eq.s32.totalorder %s80, 3
      %p302 = por %p300, %p301
      %p303 = scmp.ne.s32.totalorder %s294, %s295
      %p304 = scmp.eq.s32.totalorder %s80, 0
      %p305 = por %p303, %p304
      %p306 = scmp.ne.s32.totalorder %s294, %s295
      %p307 = scmp.eq.s32.totalorder %s81, 3
      %p308 = por %p306, %p307
      %p310 = scmp.ne.s32.totalorder %s295, %s309
      %p311 = scmp.eq.s32.totalorder %s81, 0
      %p312 = por %p310, %p311
      %s314 = sadd.s32 %s313, 1
      %p317 = scmp.eq.s32.totalorder %s75, 3
      %p318 = scmp.ne.s32.totalorder %s313, %s315
      %p319 = scmp.eq.s32.totalorder %s75, 0
      %p320 = por %p318, %p319
      %p321 = scmp.ne.s32.totalorder %s313, %s315
      %p322 = scmp.eq.s32.totalorder %s80, 3
      %p323 = por %p321, %p322
      %p324 = scmp.ne.s32.totalorder %s315, %s316
      %p325 = scmp.eq.s32.totalorder %s80, 0
      %p326 = por %p324, %p325
      %p327 = scmp.ne.s32.totalorder %s315, %s316
      %p328 = scmp.eq.s32.totalorder %s81, 3
      %p329 = por %p327, %p328
      %p331 = scmp.ne.s32.totalorder %s316, %s330
      %p332 = scmp.eq.s32.totalorder %s81, 0
      %p333 = por %p331, %p332
      %s335 = sadd.s32 %s334, 1
      %p338 = scmp.eq.s32.totalorder %s75, 3
      %p339 = scmp.ne.s32.totalorder %s334, %s336
      %p340 = scmp.eq.s32.totalorder %s75, 0
      %p341 = por %p339, %p340
      %p342 = scmp.ne.s32.totalorder %s334, %s336
      %p343 = scmp.eq.s32.totalorder %s80, 3
      %p344 = por %p342, %p343
      %p345 = scmp.ne.s32.totalorder %s336, %s337
      %p346 = scmp.eq.s32.totalorder %s80, 0
      %p347 = por %p345, %p346
      %p348 = scmp.ne.s32.totalorder %s336, %s337
      %p349 = scmp.eq.s32.totalorder %s81, 3
      %p350 = por %p348, %p349
      %p352 = scmp.ne.s32.totalorder %s337, %s351
      %p353 = scmp.eq.s32.totalorder %s81, 0
      %p354 = por %p352, %p353
      %s356 = sadd.s32 %s355, 1
      %p359 = scmp.eq.s32.totalorder %s75, 3
      %p360 = scmp.ne.s32.totalorder %s355, %s357
      %p361 = scmp.eq.s32.totalorder %s75, 0
      %p362 = por %p360, %p361
      %p363 = scmp.ne.s32.totalorder %s355, %s357
      %p364 = scmp.eq.s32.totalorder %s80, 3
      %p365 = por %p363, %p364
      %p366 = scmp.ne.s32.totalorder %s357, %s358
      %p367 = scmp.eq.s32.totalorder %s80, 0
      %p368 = por %p366, %p367
      %p369 = scmp.ne.s32.totalorder %s357, %s358
      %p370 = scmp.eq.s32.totalorder %s81, 3
      %p371 = por %p369, %p370
      %p373 = scmp.ne.s32.totalorder %s358, %s372
      %p374 = scmp.eq.s32.totalorder %s81, 0
      %p375 = por %p373, %p374
      %s377 = sadd.s32 %s376, 1
      %p380 = scmp.eq.s32.totalorder %s75, 3
      %p381 = scmp.ne.s32.totalorder %s376, %s378
      %p382 = scmp.eq.s32.totalorder %s75, 0
      %p383 = por %p381, %p382
      %p384 = scmp.ne.s32.totalorder %s376, %s378
      %p385 = scmp.eq.s32.totalorder %s80, 3
      %p386 = por %p384, %p385
      %p387 = scmp.ne.s32.totalorder %s378, %s379
      %p388 = scmp.eq.s32.totalorder %s80, 0
      %p389 = por %p387, %p388
      %p390 = scmp.ne.s32.totalorder %s378, %s379
      %p391 = scmp.eq.s32.totalorder %s81, 3
      %p392 = por %p390, %p391
      %p394 = scmp.ne.s32.totalorder %s379, %s393
      %p395 = scmp.eq.s32.totalorder %s81, 0
      %p396 = por %p394, %p395
      %s398 = sadd.s32 %s397, 1
      %p401 = scmp.eq.s32.totalorder %s75, 3
      %p402 = scmp.ne.s32.totalorder %s397, %s399
      %p403 = scmp.eq.s32.totalorder %s75, 0
      %p404 = por %p402, %p403
      %p405 = scmp.ne.s32.totalorder %s397, %s399
      %p406 = scmp.eq.s32.totalorder %s80, 3
      %p407 = por %p405, %p406
      %p408 = scmp.ne.s32.totalorder %s399, %s400
      %p409 = scmp.eq.s32.totalorder %s80, 0
      %p410 = por %p408, %p409
      %p411 = scmp.ne.s32.totalorder %s399, %s400
      %p412 = scmp.eq.s32.totalorder %s81, 3
      %p413 = por %p411, %p412
      %p415 = scmp.ne.s32.totalorder %s400, %s414
      %p416 = scmp.eq.s32.totalorder %s81, 0
      %p417 = por %p415, %p416
      %s419 = sadd.s32 %s418, 1
      %p422 = scmp.eq.s32.totalorder %s75, 3
      %p423 = scmp.ne.s32.totalorder %s418, %s420
      %p424 = scmp.eq.s32.totalorder %s75, 0
      %p425 = por %p423, %p424
      %p426 = scmp.ne.s32.totalorder %s418, %s420
      %p427 = scmp.eq.s32.totalorder %s80, 3
      %p428 = por %p426, %p427
      %p429 = scmp.ne.s32.totalorder %s420, %s421
      %p430 = scmp.eq.s32.totalorder %s80, 0
      %p431 = por %p429, %p430
      %p432 = scmp.ne.s32.totalorder %s420, %s421
      %p433 = scmp.eq.s32.totalorder %s81, 3
      %p434 = por %p432, %p433
      %p436 = scmp.ne.s32.totalorder %s421, %s435
      %p437 = scmp.eq.s32.totalorder %s81, 0
      %p438 = por %p436, %p437
      %s440 = sadd.s32 %s439, 1
      %p443 = scmp.eq.s32.totalorder %s75, 3
      %p444 = scmp.ne.s32.totalorder %s439, %s441
      %p445 = scmp.eq.s32.totalorder %s75, 0
      %p446 = por %p444, %p445
      %p447 = scmp.ne.s32.totalorder %s439, %s441
      %p448 = scmp.eq.s32.totalorder %s80, 3
      %p449 = por %p447, %p448
      %p450 = scmp.ne.s32.totalorder %s441, %s442
      %p451 = scmp.eq.s32.totalorder %s80, 0
      %p452 = por %p450, %p451
      %p453 = scmp.ne.s32.totalorder %s441, %s442
      %p454 = scmp.eq.s32.totalorder %s81, 3
      %p455 = por %p453, %p454
      %p457 = scmp.ne.s32.totalorder %s442, %s456
      %p458 = scmp.eq.s32.totalorder %s81, 0
      %p459 = por %p457, %p458
      %s461 = sadd.s32 %s460, 1
      %p464 = scmp.eq.s32.totalorder %s75, 3
      %p465 = scmp.ne.s32.totalorder %s460, %s462
      %p466 = scmp.eq.s32.totalorder %s75, 0
      %p467 = por %p465, %p466
      %p468 = scmp.ne.s32.totalorder %s460, %s462
      %p469 = scmp.eq.s32.totalorder %s80, 3
      %p470 = por %p468, %p469
      %p471 = scmp.ne.s32.totalorder %s462, %s463
      %p472 = scmp.eq.s32.totalorder %s80, 0
      %p473 = por %p471, %p472
      %p474 = scmp.ne.s32.totalorder %s462, %s463
      %p475 = scmp.eq.s32.totalorder %s81, 3
      %p476 = por %p474, %p475
      %p478 = scmp.ne.s32.totalorder %s463, %s477
      %p479 = scmp.eq.s32.totalorder %s81, 0
      %p480 = por %p478, %p479
      %s482 = sadd.s32 %s481, 1
      %p485 = scmp.eq.s32.totalorder %s75, 3
      %p486 = scmp.ne.s32.totalorder %s481, %s483
      %p487 = scmp.eq.s32.totalorder %s75, 0
      %p488 = por %p486, %p487
      %p489 = scmp.ne.s32.totalorder %s481, %s483
      %p490 = scmp.eq.s32.totalorder %s80, 3
      %p491 = por %p489, %p490
      %p492 = scmp.ne.s32.totalorder %s483, %s484
      %p493 = scmp.eq.s32.totalorder %s80, 0
      %p494 = por %p492, %p493
      %p495 = scmp.ne.s32.totalorder %s483, %s484
      %p496 = scmp.eq.s32.totalorder %s81, 3
      %p497 = por %p495, %p496
      %p499 = scmp.ne.s32.totalorder %s484, %s498
      %p500 = scmp.eq.s32.totalorder %s81, 0
      %p501 = por %p499, %p500
      %s503 = sadd.s32 %s502, 1
      %p506 = scmp.eq.s32.totalorder %s75, 3
      %p507 = scmp.ne.s32.totalorder %s502, %s504
      %p508 = scmp.eq.s32.totalorder %s75, 0
      %p509 = por %p507, %p508
      %p510 = scmp.ne.s32.totalorder %s502, %s504
      %p511 = scmp.eq.s32.totalorder %s80, 3
      %p512 = por %p510, %p511
      %p513 = scmp.ne.s32.totalorder %s504, %s505
      %p514 = scmp.eq.s32.totalorder %s80, 0
      %p515 = por %p513, %p514
      %p516 = scmp.ne.s32.totalorder %s504, %s505
      %p517 = scmp.eq.s32.totalorder %s81, 3
      %p518 = por %p516, %p517
      %p520 = scmp.ne.s32.totalorder %s505, %s519
      %p521 = scmp.eq.s32.totalorder %s81, 0
      %p522 = por %p520, %p521
      %s524 = sadd.s32 %s523, 1
      %p527 = scmp.eq.s32.totalorder %s75, 3
      %p528 = scmp.ne.s32.totalorder %s523, %s525
      %p529 = scmp.eq.s32.totalorder %s75, 0
      %p530 = por %p528, %p529
      %p531 = scmp.ne.s32.totalorder %s523, %s525
      %p532 = scmp.eq.s32.totalorder %s80, 3
      %p533 = por %p531, %p532
      %p534 = scmp.ne.s32.totalorder %s525, %s526
      %p535 = scmp.eq.s32.totalorder %s80, 0
      %p536 = por %p534, %p535
      %p537 = scmp.ne.s32.totalorder %s525, %s526
      %p538 = scmp.eq.s32.totalorder %s81, 3
      %p539 = por %p537, %p538
      %p541 = scmp.ne.s32.totalorder %s526, %s540
      %p542 = scmp.eq.s32.totalorder %s81, 0
      %p543 = por %p541, %p542
      %s545 = sadd.s32 %s544, 1
      %p548 = scmp.eq.s32.totalorder %s75, 3
      %p549 = scmp.ne.s32.totalorder %s544, %s546
      %p550 = scmp.eq.s32.totalorder %s75, 0
      %p551 = por %p549, %p550
      %p552 = scmp.ne.s32.totalorder %s544, %s546
      %p553 = scmp.eq.s32.totalorder %s80, 3
      %p554 = por %p552, %p553
      %p555 = scmp.ne.s32.totalorder %s546, %s547
      %p556 = scmp.eq.s32.totalorder %s80, 0
      %p557 = por %p555, %p556
      %p558 = scmp.ne.s32.totalorder %s546, %s547
      %p559 = scmp.eq.s32.totalorder %s81, 3
      %p560 = por %p558, %p559
      %p562 = scmp.ne.s32.totalorder %s547, %s561
      %p563 = scmp.eq.s32.totalorder %s81, 0
      %p564 = por %p562, %p563
      %s566 = sadd.s32 %s565, 1
      %p569 = scmp.eq.s32.totalorder %s75, 3
      %p570 = scmp.ne.s32.totalorder %s565, %s567
      %p571 = scmp.eq.s32.totalorder %s75, 0
      %p572 = por %p570, %p571
      %p573 = scmp.ne.s32.totalorder %s565, %s567
      %p574 = scmp.eq.s32.totalorder %s80, 3
      %p575 = por %p573, %p574
      %p576 = scmp.ne.s32.totalorder %s567, %s568
      %p577 = scmp.eq.s32.totalorder %s80, 0
      %p578 = por %p576, %p577
      %p579 = scmp.ne.s32.totalorder %s567, %s568
      %p580 = scmp.eq.s32.totalorder %s81, 3
      %p581 = por %p579, %p580
      %p583 = scmp.ne.s32.totalorder %s568, %s582
      %p584 = scmp.eq.s32.totalorder %s81, 0
      %p585 = por %p583, %p584
      %s587 = sadd.s32 %s586, 1
      %p590 = scmp.eq.s32.totalorder %s75, 3
      %p591 = scmp.ne.s32.totalorder %s586, %s588
      %p592 = scmp.eq.s32.totalorder %s75, 0
      %p593 = por %p591, %p592
      %p594 = scmp.ne.s32.totalorder %s586, %s588
      %p595 = scmp.eq.s32.totalorder %s80, 3
      %p596 = por %p594, %p595
      %p597 = scmp.ne.s32.totalorder %s588, %s589
      %p598 = scmp.eq.s32.totalorder %s80, 0
      %p599 = por %p597, %p598
      %p600 = scmp.ne.s32.totalorder %s588, %s589
      %p601 = scmp.eq.s32.totalorder %s81, 3
      %p602 = por %p600, %p601
      %p604 = scmp.ne.s32.totalorder %s589, %s603
      %p605 = scmp.eq.s32.totalorder %s81, 0
      %p606 = por %p604, %p605
      %s608 = sadd.s32 %s607, 1
      %p611 = scmp.eq.s32.totalorder %s75, 3
      %p612 = scmp.ne.s32.totalorder %s607, %s609
      %p613 = scmp.eq.s32.totalorder %s75, 0
      %p614 = por %p612, %p613
      %p615 = scmp.ne.s32.totalorder %s607, %s609
      %p616 = scmp.eq.s32.totalorder %s80, 3
      %p617 = por %p615, %p616
      %p618 = scmp.ne.s32.totalorder %s609, %s610
      %p619 = scmp.eq.s32.totalorder %s80, 0
      %p620 = por %p618, %p619
      %p621 = scmp.ne.s32.totalorder %s609, %s610
      %p622 = scmp.eq.s32.totalorder %s81, 3
      %p623 = por %p621, %p622
      %p625 = scmp.ne.s32.totalorder %s610, %s624
      %p626 = scmp.eq.s32.totalorder %s81, 0
      %p627 = por %p625, %p626
      %s629 = sadd.s32 %s628, 1
      %p632 = scmp.eq.s32.totalorder %s75, 3
      %p633 = scmp.ne.s32.totalorder %s628, %s630
      %p634 = scmp.eq.s32.totalorder %s75, 0
      %p635 = por %p633, %p634
      %p636 = scmp.ne.s32.totalorder %s628, %s630
      %p637 = scmp.eq.s32.totalorder %s80, 3
      %p638 = por %p636, %p637
      %p639 = scmp.ne.s32.totalorder %s630, %s631
      %p640 = scmp.eq.s32.totalorder %s80, 0
      %p641 = por %p639, %p640
      %p642 = scmp.ne.s32.totalorder %s630, %s631
      %p643 = scmp.eq.s32.totalorder %s81, 3
      %p644 = por %p642, %p643
      %p646 = scmp.ne.s32.totalorder %s631, %s645
      %p647 = scmp.eq.s32.totalorder %s81, 0
      %p648 = por %p646, %p647
      %s650 = sadd.s32 %s649, 1
      %p653 = scmp.eq.s32.totalorder %s75, 3
      %p654 = scmp.ne.s32.totalorder %s649, %s651
      %p655 = scmp.eq.s32.totalorder %s75, 0
      %p656 = por %p654, %p655
      %p657 = scmp.ne.s32.totalorder %s649, %s651
      %p658 = scmp.eq.s32.totalorder %s80, 3
      %p659 = por %p657, %p658
      %p660 = scmp.ne.s32.totalorder %s651, %s652
      %p661 = scmp.eq.s32.totalorder %s80, 0
      %p662 = por %p660, %p661
      %p663 = scmp.ne.s32.totalorder %s651, %s652
      %p664 = scmp.eq.s32.totalorder %s81, 3
      %p665 = por %p663, %p664
      %p667 = scmp.ne.s32.totalorder %s652, %s666
      %p668 = scmp.eq.s32.totalorder %s81, 0
      %p669 = por %p667, %p668
      %s671 = sadd.s32 %s670, 1
      %p674 = scmp.eq.s32.totalorder %s75, 3
      %p675 = scmp.ne.s32.totalorder %s670, %s672
      %p676 = scmp.eq.s32.totalorder %s75, 0
      %p677 = por %p675, %p676
      %p678 = scmp.ne.s32.totalorder %s670, %s672
      %p679 = scmp.eq.s32.totalorder %s80, 3
      %p680 = por %p678, %p679
      %p681 = scmp.ne.s32.totalorder %s672, %s673
      %p682 = scmp.eq.s32.totalorder %s80, 0
      %p683 = por %p681, %p682
      %p684 = scmp.ne.s32.totalorder %s672, %s673
      %p685 = scmp.eq.s32.totalorder %s81, 3
      %p686 = por %p684, %p685
      %p688 = scmp.ne.s32.totalorder %s673, %s687
      %p689 = scmp.eq.s32.totalorder %s81, 0
      %p690 = por %p688, %p689
      %s691 = ssub.s32 %s75, %s82
      %p692 = scmp.eq.s32.totalorder %s691, 0
      %s694 = sadd.s32 %s693, 1
      %s695 = scalar_select %p692, %s693, %s694
      %p698 = pneg %p692
      %p699 = scmp.eq.s32.totalorder %s75, 3
      %p700 = por %p698, %p699
      %p701 = scmp.ne.s32.totalorder %s693, %s696
      %p702 = scmp.eq.s32.totalorder %s75, 0
      %p703 = por %p701, %p702
      %p704 = scmp.ne.s32.totalorder %s693, %s696
      %p705 = scmp.eq.s32.totalorder %s80, 3
      %p706 = por %p704, %p705
      %p707 = scmp.ne.s32.totalorder %s696, %s697
      %p708 = scmp.eq.s32.totalorder %s80, 0
      %p709 = por %p707, %p708
      %p710 = scmp.ne.s32.totalorder %s696, %s697
      %p711 = scmp.eq.s32.totalorder %s81, 3
      %p712 = por %p710, %p711
      %p714 = scmp.ne.s32.totalorder %s697, %s713
      %p715 = scmp.eq.s32.totalorder %s81, 0
      %p716 = por %p714, %p715
      %s717 = ssub.s32 %s75, %s82
      %p718 = scmp.eq.s32.totalorder %s717, 0
      %s720 = sadd.s32 %s719, 1
      %s721 = scalar_select %p718, %s719, %s720
      %p724 = pneg %p718
      %p725 = scmp.eq.s32.totalorder %s75, 3
      %p726 = por %p724, %p725
      %p727 = scmp.ne.s32.totalorder %s719, %s722
      %p728 = scmp.eq.s32.totalorder %s75, 0
      %p729 = por %p727, %p728
      %p730 = scmp.ne.s32.totalorder %s719, %s722
      %p731 = scmp.eq.s32.totalorder %s80, 3
      %p732 = por %p730, %p731
      %p733 = scmp.ne.s32.totalorder %s722, %s723
      %p734 = scmp.eq.s32.totalorder %s80, 0
      %p735 = por %p733, %p734
      %p736 = scmp.ne.s32.totalorder %s722, %s723
      %p737 = scmp.eq.s32.totalorder %s81, 3
      %p738 = por %p736, %p737
      %p740 = scmp.ne.s32.totalorder %s723, %s739
      %p741 = scmp.eq.s32.totalorder %s81, 0
      %p742 = por %p740, %p741
      %s743 = ssub.s32 %s75, %s82
      %p744 = scmp.eq.s32.totalorder %s743, 0
      %s746 = sadd.s32 %s745, 1
      %s747 = scalar_select %p744, %s745, %s746
      %p750 = pneg %p744
      %p751 = scmp.eq.s32.totalorder %s75, 3
      %p752 = por %p750, %p751
      %p753 = scmp.ne.s32.totalorder %s745, %s748
      %p754 = scmp.eq.s32.totalorder %s75, 0
      %p755 = por %p753, %p754
      %p756 = scmp.ne.s32.totalorder %s745, %s748
      %p757 = scmp.eq.s32.totalorder %s80, 3
      %p758 = por %p756, %p757
      %p759 = scmp.ne.s32.totalorder %s748, %s749
      %p760 = scmp.eq.s32.totalorder %s80, 0
      %p761 = por %p759, %p760
      %p762 = scmp.ne.s32.totalorder %s748, %s749
      %p763 = scmp.eq.s32.totalorder %s81, 3
      %p764 = por %p762, %p763
      %p766 = scmp.ne.s32.totalorder %s749, %s765
      %p767 = scmp.eq.s32.totalorder %s81, 0
      %p768 = por %p766, %p767
      %s769 = ssub.s32 %s75, %s82
      %p770 = scmp.eq.s32.totalorder %s769, 0
      %s772 = sadd.s32 %s771, 1
      %s773 = scalar_select %p770, %s771, %s772
      %p776 = pneg %p770
      %p777 = scmp.eq.s32.totalorder %s75, 3
      %p778 = por %p776, %p777
      %p779 = scmp.ne.s32.totalorder %s771, %s774
      %p780 = scmp.eq.s32.totalorder %s75, 0
      %p781 = por %p779, %p780
      %p782 = scmp.ne.s32.totalorder %s771, %s774
      %p783 = scmp.eq.s32.totalorder %s80, 3
      %p784 = por %p782, %p783
      %p785 = scmp.ne.s32.totalorder %s774, %s775
      %p786 = scmp.eq.s32.totalorder %s80, 0
      %p787 = por %p785, %p786
      %p788 = scmp.ne.s32.totalorder %s774, %s775
      %p789 = scmp.eq.s32.totalorder %s81, 3
      %p790 = por %p788, %p789
      %p792 = scmp.ne.s32.totalorder %s775, %s791
      %p793 = scmp.eq.s32.totalorder %s81, 0
      %p794 = por %p792, %p793
      %s795 = ssub.s32 %s75, %s82
      %p796 = scmp.eq.s32.totalorder %s795, 0
      %s798 = sadd.s32 %s797, 1
      %s799 = scalar_select %p796, %s797, %s798
      %p802 = pneg %p796
      %p803 = scmp.eq.s32.totalorder %s75, 3
      %p804 = por %p802, %p803
      %p805 = scmp.ne.s32.totalorder %s797, %s800
      %p806 = scmp.eq.s32.totalorder %s75, 0
      %p807 = por %p805, %p806
      %p808 = scmp.ne.s32.totalorder %s797, %s800
      %p809 = scmp.eq.s32.totalorder %s80, 3
      %p810 = por %p808, %p809
      %p811 = scmp.ne.s32.totalorder %s800, %s801
      %p812 = scmp.eq.s32.totalorder %s80, 0
      %p813 = por %p811, %p812
      %p814 = scmp.ne.s32.totalorder %s800, %s801
      %p815 = scmp.eq.s32.totalorder %s81, 3
      %p816 = por %p814, %p815
      %p818 = scmp.ne.s32.totalorder %s801, %s817
      %p819 = scmp.eq.s32.totalorder %s81, 0
      %p820 = por %p818, %p819
      %p821 = scmp.le.s32.totalorder 1, %s75
      %p822 = scmp.lt.s32.totalorder %s75, 5
      %p823 = pnand %p821, %p822
      %p824 = pneg %p823
      // Predicated region
      $region9: #{_lambda_.1} parent=5 // pred_check
        _
      $region10: #{_lambda_.1} parent=5 // pred_check_branch
        %826 = sbr.rel (%p823) target = $region12
      $region11: #{_lambda_.1} parent=5 // pred_region
        %s827 = ssub.s32 %s75, 1
        // Predicated region
        $region13: #{_lambda_.1} parent=11 // pred_check
          %p828 = pneg %p200
        $region14: #{_lambda_.1} parent=11 // pred_check_branch
          %830 = sbr.rel (%p828) target = $region16
        $region15: #{_lambda_.1} parent=11 // pred_region
          _
        $region16: #{_lambda_.1} parent=11 // pred_fallthru
          _
        // Predicated region
        $region17: #{_lambda_.1} parent=11 // pred_check
          %p831 = pneg %p221
        $region18: #{_lambda_.1} parent=11 // pred_check_branch
          %833 = sbr.rel (%p831) target = $region20
        $region19: #{_lambda_.1} parent=11 // pred_region
          _
        $region20: #{_lambda_.1} parent=11 // pred_fallthru
          _
        // Predicated region
        $region21: #{_lambda_.1} parent=11 // pred_check
          %p834 = pneg %p242
        $region22: #{_lambda_.1} parent=11 // pred_check_branch
          %836 = sbr.rel (%p834) target = $region24
        $region23: #{_lambda_.1} parent=11 // pred_region
          _
        $region24: #{_lambda_.1} parent=11 // pred_fallthru
          _
        // Predicated region
        $region25: #{_lambda_.1} parent=11 // pred_check
          %p837 = pneg %p263
        $region26: #{_lambda_.1} parent=11 // pred_check_branch
          %839 = sbr.rel (%p837) target = $region28
        $region27: #{_lambda_.1} parent=11 // pred_region
          _
        $region28: #{_lambda_.1} parent=11 // pred_fallthru
          _
        // Predicated region
        $region29: #{_lambda_.1} parent=11 // pred_check
          %p840 = pneg %p284
        $region30: #{_lambda_.1} parent=11 // pred_check_branch
          %842 = sbr.rel (%p840) target = $region32
        $region31: #{_lambda_.1} parent=11 // pred_region
          _
        $region32: #{_lambda_.1} parent=11 // pred_fallthru
          _
        // Predicated region
        $region33: #{_lambda_.1} parent=11 // pred_check
          %p843 = pneg %p305
        $region34: #{_lambda_.1} parent=11 // pred_check_branch
          %845 = sbr.rel (%p843) target = $region36
        $region35: #{_lambda_.1} parent=11 // pred_region
          _
        $region36: #{_lambda_.1} parent=11 // pred_fallthru
          _
        // Predicated region
        $region37: #{_lambda_.1} parent=11 // pred_check
          %p846 = pneg %p326
        $region38: #{_lambda_.1} parent=11 // pred_check_branch
          %848 = sbr.rel (%p846) target = $region40
        $region39: #{_lambda_.1} parent=11 // pred_region
          _
        $region40: #{_lambda_.1} parent=11 // pred_fallthru
          _
        // Predicated region
        $region41: #{_lambda_.1} parent=11 // pred_check
          %p849 = pneg %p347
        $region42: #{_lambda_.1} parent=11 // pred_check_branch
          %851 = sbr.rel (%p849) target = $region44
        $region43: #{_lambda_.1} parent=11 // pred_region
          _
        $region44: #{_lambda_.1} parent=11 // pred_fallthru
          _
        // Predicated region
        $region45: #{_lambda_.1} parent=11 // pred_check
          %p852 = pneg %p368
        $region46: #{_lambda_.1} parent=11 // pred_check_branch
          %854 = sbr.rel (%p852) target = $region48
        $region47: #{_lambda_.1} parent=11 // pred_region
          _
        $region48: #{_lambda_.1} parent=11 // pred_fallthru
          _
        // Predicated region
        $region49: #{_lambda_.1} parent=11 // pred_check
          %p855 = pneg %p389
        $region50: #{_lambda_.1} parent=11 // pred_check_branch
          %857 = sbr.rel (%p855) target = $region52
        $region51: #{_lambda_.1} parent=11 // pred_region
          _
        $region52: #{_lambda_.1} parent=11 // pred_fallthru
          _
        // Predicated region
        $region53: #{_lambda_.1} parent=11 // pred_check
          %p858 = pneg %p410
        $region54: #{_lambda_.1} parent=11 // pred_check_branch
          %860 = sbr.rel (%p858) target = $region56
        $region55: #{_lambda_.1} parent=11 // pred_region
          _
        $region56: #{_lambda_.1} parent=11 // pred_fallthru
          _
        // Predicated region
        $region57: #{_lambda_.1} parent=11 // pred_check
          %p861 = pneg %p431
        $region58: #{_lambda_.1} parent=11 // pred_check_branch
          %863 = sbr.rel (%p861) target = $region60
        $region59: #{_lambda_.1} parent=11 // pred_region
          _
        $region60: #{_lambda_.1} parent=11 // pred_fallthru
          _
        // Predicated region
        $region61: #{_lambda_.1} parent=11 // pred_check
          %p864 = pneg %p452
        $region62: #{_lambda_.1} parent=11 // pred_check_branch
          %866 = sbr.rel (%p864) target = $region64
        $region63: #{_lambda_.1} parent=11 // pred_region
          _
        $region64: #{_lambda_.1} parent=11 // pred_fallthru
          _
        // Predicated region
        $region65: #{_lambda_.1} parent=11 // pred_check
          %p867 = pneg %p473
        $region66: #{_lambda_.1} parent=11 // pred_check_branch
          %869 = sbr.rel (%p867) target = $region68
        $region67: #{_lambda_.1} parent=11 // pred_region
          _
        $region68: #{_lambda_.1} parent=11 // pred_fallthru
          _
        // Predicated region
        $region69: #{_lambda_.1} parent=11 // pred_check
          %p870 = pneg %p494
        $region70: #{_lambda_.1} parent=11 // pred_check_branch
          %872 = sbr.rel (%p870) target = $region72
        $region71: #{_lambda_.1} parent=11 // pred_region
          _
        $region72: #{_lambda_.1} parent=11 // pred_fallthru
          _
        // Predicated region
        $region73: #{_lambda_.1} parent=11 // pred_check
          %p873 = pneg %p515
        $region74: #{_lambda_.1} parent=11 // pred_check_branch
          %875 = sbr.rel (%p873) target = $region76
        $region75: #{_lambda_.1} parent=11 // pred_region
          _
        $region76: #{_lambda_.1} parent=11 // pred_fallthru
          _
        // Predicated region
        $region77: #{_lambda_.1} parent=11 // pred_check
          %p876 = pneg %p536
        $region78: #{_lambda_.1} parent=11 // pred_check_branch
          %878 = sbr.rel (%p876) target = $region80
        $region79: #{_lambda_.1} parent=11 // pred_region
          _
        $region80: #{_lambda_.1} parent=11 // pred_fallthru
          _
        // Predicated region
        $region81: #{_lambda_.1} parent=11 // pred_check
          %p879 = pneg %p557
        $region82: #{_lambda_.1} parent=11 // pred_check_branch
          %881 = sbr.rel (%p879) target = $region84
        $region83: #{_lambda_.1} parent=11 // pred_region
          _
        $region84: #{_lambda_.1} parent=11 // pred_fallthru
          _
        // Predicated region
        $region85: #{_lambda_.1} parent=11 // pred_check
          %p882 = pneg %p578
        $region86: #{_lambda_.1} parent=11 // pred_check_branch
          %884 = sbr.rel (%p882) target = $region88
        $region87: #{_lambda_.1} parent=11 // pred_region
          _
        $region88: #{_lambda_.1} parent=11 // pred_fallthru
          _
        // Predicated region
        $region89: #{_lambda_.1} parent=11 // pred_check
          %p885 = pneg %p599
        $region90: #{_lambda_.1} parent=11 // pred_check_branch
          %887 = sbr.rel (%p885) target = $region92
        $region91: #{_lambda_.1} parent=11 // pred_region
          _
        $region92: #{_lambda_.1} parent=11 // pred_fallthru
          _
        // Predicated region
        $region93: #{_lambda_.1} parent=11 // pred_check
          %p888 = pneg %p620
        $region94: #{_lambda_.1} parent=11 // pred_check_branch
          %890 = sbr.rel (%p888) target = $region96
        $region95: #{_lambda_.1} parent=11 // pred_region
          _
        $region96: #{_lambda_.1} parent=11 // pred_fallthru
          _
        // Predicated region
        $region97: #{_lambda_.1} parent=11 // pred_check
          %p891 = pneg %p641
        $region98: #{_lambda_.1} parent=11 // pred_check_branch
          %893 = sbr.rel (%p891) target = $region100
        $region99: #{_lambda_.1} parent=11 // pred_region
          _
        $region100: #{_lambda_.1} parent=11 // pred_fallthru
          _
        // Predicated region
        $region101: #{_lambda_.1} parent=11 // pred_check
          %p894 = pneg %p662
        $region102: #{_lambda_.1} parent=11 // pred_check_branch
          %896 = sbr.rel (%p894) target = $region104
        $region103: #{_lambda_.1} parent=11 // pred_region
          _
        $region104: #{_lambda_.1} parent=11 // pred_fallthru
          _
        // Predicated region
        $region105: #{_lambda_.1} parent=11 // pred_check
          %p897 = pneg %p683
        $region106: #{_lambda_.1} parent=11 // pred_check_branch
          %899 = sbr.rel (%p897) target = $region108
        $region107: #{_lambda_.1} parent=11 // pred_region
          _
        $region108: #{_lambda_.1} parent=11 // pred_fallthru
          _
      $region12: #{_lambda_.1} parent=5 // pred_fallthru
        _
      %p900 = scmp.lt.s32.totalorder %s75, 4
      // Predicated region
      $region109: #{_lambda_.1} parent=5 // pred_check
        %p901 = pneg %p900
      $region110: #{_lambda_.1} parent=5 // pred_check_branch
        %903 = sbr.rel (%p901) target = $region112
      $region111: #{_lambda_.1} parent=5 // pred_region
        // Predicated region
        $region113: #{_lambda_.1} parent=111 // pred_check
          %p904 = pneg %p95
        $region114: #{_lambda_.1} parent=111 // pred_check_branch
          %906 = sbr.rel (%p904) target = $region116
        $region115: #{_lambda_.1} parent=111 // pred_region
          %p907 = scmp.lt.s32.totalorder %s75, 3
          %s908 = scalar_select %p907, %s75, 3
          %s909 = smul.addr %s908, 2
          %s910 = smul.addr %s909, 8
          %s911 = scalar_lea.vmem %s1, %s910
        $region116: #{_lambda_.1} parent=111 // pred_fallthru
          _
        // Predicated region
        $region117: #{_lambda_.1} parent=111 // pred_check
          %p912 = pneg %p121
        $region118: #{_lambda_.1} parent=111 // pred_check_branch
          %914 = sbr.rel (%p912) target = $region120
        $region119: #{_lambda_.1} parent=111 // pred_region
          %p915 = scmp.lt.s32.totalorder %s75, 3
          %s916 = scalar_select %p915, %s75, 3
          %s917 = scalar_lea.vmem %s3, %s916
        $region120: #{_lambda_.1} parent=111 // pred_fallthru
          _
        // Predicated region
        $region121: #{_lambda_.1} parent=111 // pred_check
          %p918 = pneg %p147
        $region122: #{_lambda_.1} parent=111 // pred_check_branch
          %920 = sbr.rel (%p918) target = $region124
        $region123: #{_lambda_.1} parent=111 // pred_region
          %p921 = scmp.lt.s32.totalorder %s75, 3
          %s922 = scalar_select %p921, %s75, 3
          %s923 = smul.addr %s922, 2
          %s924 = smul.addr %s923, 8
          %s925 = scalar_lea.vmem %s5, %s924
        $region124: #{_lambda_.1} parent=111 // pred_fallthru
          _
        // Predicated region
        $region125: #{_lambda_.1} parent=111 // pred_check
          %p926 = pneg %p173
        $region126: #{_lambda_.1} parent=111 // pred_check_branch
          %928 = sbr.rel (%p926) target = $region128
        $region127: #{_lambda_.1} parent=111 // pred_region
          %p929 = scmp.lt.s32.totalorder %s75, 3
          %s930 = scalar_select %p929, %s75, 3
          %s931 = smul.addr %s930, 2
          %s932 = smul.addr %s931, 8
          %s933 = scalar_lea.vmem %s7, %s932
        $region128: #{_lambda_.1} parent=111 // pred_fallthru
          _
      $region112: #{_lambda_.1} parent=5 // pred_fallthru
        _
      %p934 = scmp.le.s32.totalorder 1, %s75
      %p935 = scmp.lt.s32.totalorder %s75, 5
      %p936 = pnand %p934, %p935
      %p937 = pneg %p936
      // Predicated region
      $region129: #{_lambda_.1} parent=5 // pred_check
        _
      $region130: #{_lambda_.1} parent=5 // pred_check_branch
        %939 = sbr.rel (%p936) target = $region132
      $region131: #{_lambda_.1} parent=5 // pred_region
        %s940 = ssub.s32 %s75, 1
        %p941 = scmp.lt.s32.totalorder %s80, 3
        %s942 = scalar_select %p941, %s80, 3
        %s943 = smul.addr %s942, 2
        %s944 = smul.addr %s943, 8
        %s945 = scalar_lea.vmem %s1, %s944
        %p946 = pneg %p101
        %p947 = pneg %p98
        %p948 = scmp.lt.s32.totalorder %s80, 3
        %s949 = scalar_select %p948, %s80, 3
        %s950 = scalar_lea.vmem %s3, %s949
        %p951 = pneg %p127
        %p952 = pneg %p124
        %p953 = scmp.lt.s32.totalorder %s80, 3
        %s954 = scalar_select %p953, %s80, 3
        %s955 = smul.addr %s954, 2
        %s956 = smul.addr %s955, 8
        %s957 = scalar_lea.vmem %s5, %s956
        %p958 = pneg %p153
        %p959 = pneg %p150
        %p960 = scmp.lt.s32.totalorder %s80, 3
        %s961 = scalar_select %p960, %s80, 3
        %s962 = smul.addr %s961, 2
        %s963 = smul.addr %s962, 8
        %s964 = scalar_lea.vmem %s7, %s963
        %p965 = pneg %p179
        %p966 = pneg %p176
        %p967 = pneg %p200
        %p968 = pneg %p197
        %p969 = pneg %p221
        %p970 = pneg %p218
        %p971 = pneg %p242
        %p972 = pneg %p239
        %p973 = pneg %p263
        %p974 = pneg %p260
        %p975 = pneg %p284
        %p976 = pneg %p281
        %p977 = pneg %p305
        %p978 = pneg %p302
        %p979 = pneg %p326
        %p980 = pneg %p323
        %p981 = pneg %p347
        %p982 = pneg %p344
        %p983 = pneg %p368
        %p984 = pneg %p365
        %p985 = pneg %p389
        %p986 = pneg %p386
        %p987 = pneg %p410
        %p988 = pneg %p407
        %p989 = pneg %p431
        %p990 = pneg %p428
        %p991 = pneg %p452
        %p992 = pneg %p449
        %p993 = pneg %p473
        %p994 = pneg %p470
        %p995 = pneg %p494
        %p996 = pneg %p491
        %p997 = pneg %p515
        %p998 = pneg %p512
        %p999 = pneg %p536
        %p1000 = pneg %p533
        %p1001 = pneg %p557
        %p1002 = pneg %p554
        %p1003 = pneg %p578
        %p1004 = pneg %p575
        %p1005 = pneg %p599
        %p1006 = pneg %p596
        %p1007 = pneg %p620
        %p1008 = pneg %p617
        %p1009 = pneg %p641
        %p1010 = pneg %p638
        %p1011 = pneg %p662
        %p1012 = pneg %p659
        %p1013 = pneg %p683
        %p1014 = pneg %p680
        %p1015 = pneg %p709
        %p1016 = pneg %p706
        %s1017 = sand.u32 %s696, 1
        %s1018 = scalar_lea.sflag [#allocation3], %s1017
        %s1019 = sand.u32 %s696, 1
        %s1020 = smul.addr %s1019, 16
        %s1021 = scalar_lea.vmem [#allocation2], %s1020
        %p1022 = pneg %p735
        %p1023 = pneg %p732
        %p1024 = scmp.lt.s32.totalorder %s80, 3
        %s1025 = scalar_select %p1024, %s80, 3
        %s1026 = smul.addr %s1025, 2
        %s1027 = smul.addr %s1026, 8
        %s1028 = scalar_lea.vmem %s59, %s1027
        %p1029 = pneg %p761
        %p1030 = pneg %p758
        %p1031 = scmp.lt.s32.totalorder %s80, 3
        %s1032 = scalar_select %p1031, %s80, 3
        %s1033 = smul.addr %s1032, 2
        %s1034 = smul.addr %s1033, 8
        %s1035 = scalar_lea.vmem %s61, %s1034
        %p1036 = pneg %p787
        %p1037 = pneg %p784
        %p1038 = scmp.lt.s32.totalorder %s80, 3
        %s1039 = scalar_select %p1038, %s80, 3
        %s1040 = smul.addr %s1039, 2
        %s1041 = smul.addr %s1040, 8
        %s1042 = scalar_lea.vmem %s63, %s1041
        %p1043 = pneg %p813
        %p1044 = pneg %p810
        %p1045 = scmp.lt.s32.totalorder %s80, 3
        %s1046 = scalar_select %p1045, %s80, 3
        %s1047 = smul.addr %s1046, 2
        %s1048 = smul.addr %s1047, 8
        %s1049 = scalar_lea.vmem %s65, %s1048
        %p1050 = scmp.lt.s32.totalorder %s80, 3
        %s1051 = scalar_select %p1050, %s80, 3
        %s1052 = smul.addr %s1051, 2
        %s1053 = smul.addr %s1052, 8
        %s1054 = scalar_lea.vmem %s1, %s1053
        %p1055 = scmp.lt.s32.totalorder %s80, 3
        %s1056 = scalar_select %p1055, %s80, 3
        %s1057 = scalar_lea.vmem %s3, %s1056
        %p1058 = scmp.lt.s32.totalorder %s80, 3
        %s1059 = scalar_select %p1058, %s80, 3
        %s1060 = smul.addr %s1059, 2
        %s1061 = smul.addr %s1060, 8
        %s1062 = scalar_lea.vmem %s5, %s1061
        %p1063 = scmp.lt.s32.totalorder %s80, 3
        %s1064 = scalar_select %p1063, %s80, 3
        %s1065 = smul.addr %s1064, 2
        %s1066 = smul.addr %s1065, 8
        %s1067 = scalar_lea.vmem %s7, %s1066
        %p1068 = scmp.lt.s32.totalorder %s80, 3
        %s1069 = scalar_select %p1068, %s80, 3
        %s1070 = smul.addr %s1069, 2
        %s1071 = smul.addr %s1070, 8
        %s1072 = scalar_lea.vmem %s59, %s1071
        %p1073 = scmp.lt.s32.totalorder %s80, 3
        %s1074 = scalar_select %p1073, %s80, 3
        %s1075 = smul.addr %s1074, 2
        %s1076 = smul.addr %s1075, 8
        %s1077 = scalar_lea.vmem %s61, %s1076
        %p1078 = scmp.lt.s32.totalorder %s80, 3
        %s1079 = scalar_select %p1078, %s80, 3
        %s1080 = smul.addr %s1079, 2
        %s1081 = smul.addr %s1080, 8
        %s1082 = scalar_lea.vmem %s63, %s1081
        %p1083 = scmp.lt.s32.totalorder %s80, 3
        %s1084 = scalar_select %p1083, %s80, 3
        %s1085 = smul.addr %s1084, 2
        %s1086 = smul.addr %s1085, 8
        %s1087 = scalar_lea.vmem %s65, %s1086
        %v1088 = vld [vmem:[%s1054] sm:$0xff]
        %v1089 = vld [vmem:[%s1054 + $0x8] sm:$0xff]
        %v1090 = vlaneseq
        %v1091 = vand.u32 %v1090, 127
        %1092 = vset.pattern.permute.xlu0 0
        %1093 = vperm.xlu0 %1092, %v1088
        %v1094 = vpop.permute.xlu0 %1093
        %1095 = vset.pattern.permute.xlu0 0
        %1096 = vperm.xlu0 %1095, %v1089
        %v1097 = vpop.permute.xlu0 %1096
        %vm1098 = vcmp.eq.s32.totalorder %v1091, %v1094
        %vm1099 = vcmp.eq.s32.totalorder %v1091, %v1097
        %v1100 = vsel %vm1098, 1, 0
        %v1101 = vsel %vm1099, 1, 0
        %v1102 = vcvt.s32.f32 %v1100
        %v1103 = vcvt.s32.f32 %v1101
        %v1104 = vld [vmem:[%s9] sm:$0xff]
        %v1105 = vld [vmem:[%s9 + $0x8] sm:$0xff]
        %v1106 = vld [vmem:[%s9 + $0x10] sm:$0xff]
        %v1107 = vld [vmem:[%s9 + $0x18] sm:$0xff]
        %v1108 = vld [vmem:[%s9 + $0x20] sm:$0xff]
        %v1109 = vld [vmem:[%s9 + $0x28] sm:$0xff]
        %v1110 = vld [vmem:[%s9 + $0x30] sm:$0xff]
        %v1111 = vld [vmem:[%s9 + $0x38] sm:$0xff]
        %v1112 = vld [vmem:[%s11] sm:$0xff]
        %v1113 = vld [vmem:[%s11 + $0x8] sm:$0xff]
        %vm1114 = vcmask 523264
        %v1116 = vsel %vm1114, %v1102, 0
        %v1119 = vsel %vm1114, %v1103, 0
        %1121 = vmatprep.subr.mxu0 0.0
        %1122 = vmatpush1.msra.mxu0 0.0
        %1123 = vmatprep.subr.mxu0 0.0
        %1124 = vmatpush1.msra.mxu0 0.0
        %1125 = vmatprep.subr.mxu0 0.0
        %1126 = vmatpush1.msra.mxu0 0.0
        %1127 = vmatprep.subr.mxu0 0.0
        %1128 = vmatpush1.msra.mxu0 0.0
        %1129 = vmatprep.subr.mxu0 0.0
        %1130 = vmatpush1.msra.mxu0 0.0
        %1131 = vmatprep.subr.mxu0 0.0
        %1132 = vmatpush1.msra.mxu0 0.0
        %1133 = vmatprep.subr.mxu0 0.0
        %1134 = vmatpush1.msra.mxu0 0.0
        %1135 = vmatprep.subr.mxu0 0.0
        %1136 = vmatpush1.msra.mxu0 0.0
        %1137 = vmatprep.subr.mxu0 0.0
        %1138 = vmatpush1.msra.mxu0 %v1111
        %1139 = vmatprep.subr.mxu0 0.0
        %1140 = vmatpush1.msra.mxu0 %v1110
        %1141 = vmatprep.subr.mxu0 0.0
        %1142 = vmatpush1.msra.mxu0 %v1109
        %1143 = vmatprep.subr.mxu0 0.0
        %1144 = vmatpush1.msra.mxu0 %v1108
        %1145 = vmatprep.subr.mxu0 0.0
        %1146 = vmatpush1.msra.mxu0 %v1107
        %1147 = vmatprep.subr.mxu0 0.0
        %1148 = vmatpush1.msra.mxu0 %v1106
        %1149 = vmatprep.subr.mxu0 0.0
        %1150 = vmatpush1.msra.mxu0 %v1105
        %1151 = vmatprep.subr.mxu0 0.0
        %1152 = vmatpush1.msra.mxu0 %v1104
        %1153 = vmatprep.subr.mxu0 0.0
        %1154 = vmatpush2.msra.mxu0 0.0
        %1155 = vmatprep.subr.mxu0 0.0
        %1156 = vmatpush2.msra.mxu0 0.0
        %1157 = vmatprep.subr.mxu0 0.0
        %1158 = vmatpush2.msra.mxu0 0.0
        %1159 = vmatprep.subr.mxu0 0.0
        %1160 = vmatpush2.msra.mxu0 0.0
        %1161 = vmatprep.subr.mxu0 0.0
        %1162 = vmatpush2.msra.mxu0 0.0
        %1163 = vmatprep.subr.mxu0 0.0
        %1164 = vmatpush2.msra.mxu0 0.0
        %1165 = vmatprep.subr.mxu0 0.0
        %1166 = vmatpush2.msra.mxu0 0.0
        %1167 = vmatprep.subr.mxu0 0.0
        %1168 = vmatpush2.msra.mxu0 0.0
        %1169 = vmatprep.subr.mxu0 0.0
        %1170 = vmatpush2.msra.mxu0 0.0
        %1171 = vmatprep.subr.mxu0 0.0
        %1172 = vmatpush2.msra.mxu0 0.0
        %1173 = vmatprep.subr.mxu0 0.0
        %1174 = vmatpush2.msra.mxu0 0.0
        %1175 = vmatprep.subr.mxu0 0.0
        %1176 = vmatpush2.msra.mxu0 0.0
        %1177 = vmatprep.subr.mxu0 0.0
        %1178 = vmatpush2.msra.mxu0 0.0
        %1179 = vmatprep.subr.mxu0 0.0
        %1180 = vmatpush2.msra.mxu0 0.0
        %1181 = vmatprep.subr.mxu0 0.0
        %1182 = vmatpush2.msra.mxu0 0.0
        %1183 = vmatprep.subr.mxu0 0.0
        %1184 = vmatpush2.msra.mxu0 0.0
        %1185 = vmatprep.mubr.f32.mxu0 0.0
        %1186 = vmatmul.mubr.f32.gmra.mxu0 %v1116
        %v1187 = vpop.f32.mrf.mxu0
        %v1188 = vadd.f32 %v1112, %v1187
        %v1189 = vpop.f32.mrf.mxu0
        %1190 = vmatprep.mubr.f32.mxu0 0.0
        %1191 = vmatmul.mubr.f32.gmra.mxu0 %v1119
        %v1192 = vpop.f32.mrf.mxu0
        %v1193 = vadd.f32 %v1113, %v1192
        %v1194 = vpop.f32.mrf.mxu0
        %1195 = vdwg.mxu0
        %v1196 = vld [vmem:[%s13] sm:$0x1]
        %v1197 = vld [vmem:[%s15] sm:$0x1]
        %vm1198 = vcmask 261120
        %v1199 = vsel %vm1198, %v1188, 0.0
        %1200 = vadd.xlane.f32.xlu0 %v1199
        %v1201 = vpop.xlane.xlu0 %1200
        %v1202 = vsel %vm1198, %v1193, 0.0
        %1203 = vadd.xlane.f32.xlu0 %v1202
        %v1204 = vpop.xlane.xlu0 %1203
        %v1205 = vrcp.pop 32.0
        %v1206 = vmul.f32 %v1201, %v1205
        %v1207 = vmul.f32 %v1204, %v1205
        %v1208 = vsub.f32 %v1188, %v1206
        %v1209 = vsub.f32 %v1193, %v1207
        %v1210 = vmul.f32 %v1208, %v1208
        %v1211 = vmul.f32 %v1209, %v1209
        %v1212 = vsel %vm1198, %v1210, 0.0
        %1213 = vadd.xlane.f32.xlu0 %v1212
        %v1214 = vpop.xlane.xlu0 %1213
        %v1215 = vsel %vm1198, %v1211, 0.0
        %1216 = vadd.xlane.f32.xlu0 %v1215
        %v1217 = vpop.xlane.xlu0 %1216
        %v1218 = vrcp.pop 31.0
        %v1219 = vmul.f32 %v1214, %v1218
        %v1220 = vmul.f32 %v1217, %v1218
        %v1221 = vrsqrt.pop %v1219
        %v1222 = vmul.f32 %v1219, %v1221
        %vm1223 = vcmp.eq.f32.partialorder %v1219, inf
        %v1224 = vsel %vm1223, %v1219, %v1222
        %vm1225 = vcmp.eq.f32.partialorder %v1219, 0.0
        %v1226 = vand.u32 %v1219, 2147483648
        %v1227 = vsel %vm1225, %v1226, %v1224
        %v1228 = vrsqrt.pop %v1220
        %v1229 = vmul.f32 %v1220, %v1228
        %vm1230 = vcmp.eq.f32.partialorder %v1220, inf
        %v1231 = vsel %vm1230, %v1220, %v1229
        %vm1232 = vcmp.eq.f32.partialorder %v1220, 0.0
        %v1233 = vand.u32 %v1220, 2147483648
        %v1234 = vsel %vm1232, %v1233, %v1231
        %v1236 = vlaneseq
        %v1237 = vshrl.u32 %v1236, 7
        %v1238 = vsub.s32 0, %v1237
        %v1239 = vrot.slane %v1196, %v1238
        %v1241 = vmul.f32 %v1239, %v1208
        %v1242 = vmul.f32 %v1239, %v1209
        %v1243 = vadd.f32 %v1227, 1e-06
        %v1244 = vadd.f32 %v1234, 1e-06
        %v1245 = vrcp.pop %v1243
        %v1246 = vrcp.pop %v1244
        %v1247 = vmul.f32 %v1241, %v1245
        %v1248 = vmul.f32 %v1242, %v1246
        %v1250 = vlaneseq
        %v1251 = vshrl.u32 %v1250, 7
        %v1252 = vsub.s32 0, %v1251
        %v1253 = vrot.slane %v1197, %v1252
        %v1255 = vadd.f32 %v1247, %v1253
        %v1256 = vadd.f32 %v1248, %v1253
        %v1257 = vld [vmem:[%s1057] sm:$0x1]
        %vm1258 = vcmp.gt.f32.partialorder %v1257, 0.5
        %vm1259 = vcmp.ge.s32.totalorder %v1091, 0
        %vm1260 = vcmp.lt.s32.totalorder %v1091, 8
        %vm1261 = vmand %vm1259, %vm1260
        %v1262 = vsel %vm1261, 1, 0
        %v1263 = vcvt.s32.f32 %v1262
        %vm1264 = vcmp.ge.s32.totalorder %v1091, 8
        %vm1265 = vcmp.lt.s32.totalorder %v1091, 16
        %vm1266 = vmand %vm1264, %vm1265
        %v1267 = vsel %vm1266, 1, 0
        %v1268 = vcvt.s32.f32 %v1267
        %vm1269 = vcmp.ge.s32.totalorder %v1091, 16
        %vm1270 = vcmp.lt.s32.totalorder %v1091, 24
        %vm1271 = vmand %vm1269, %vm1270
        %v1272 = vsel %vm1271, 1, 0
        %v1273 = vcvt.s32.f32 %v1272
        %vm1274 = vcmp.ge.s32.totalorder %v1091, 24
        %vm1275 = vcmp.lt.s32.totalorder %v1091, 32
        %vm1276 = vmand %vm1274, %vm1275
        %v1277 = vsel %vm1276, 1, 0
        %v1278 = vcvt.s32.f32 %v1277
        %v1279 = vld [vmem:[%s33] sm:$0x1]
        %v1280 = vld [vmem:[%s35] sm:$0x1]
        %v1281 = vsel %vm1198, %v1255, 0.0
        %1282 = vadd.xlane.f32.xlu0 %v1281
        %v1283 = vpop.xlane.xlu0 %1282
        %v1284 = vsel %vm1198, %v1256, 0.0
        %1285 = vadd.xlane.f32.xlu0 %v1284
        %v1286 = vpop.xlane.xlu0 %1285
        %v1287 = vmul.f32 %v1283, %v1205
        %v1288 = vmul.f32 %v1286, %v1205
        %v1289 = vsub.f32 %v1255, %v1287
        %v1290 = vsub.f32 %v1256, %v1288
        %v1291 = vmul.f32 %v1289, %v1289
        %v1292 = vmul.f32 %v1290, %v1290
        %v1293 = vsel %vm1198, %v1291, 0.0
        %1294 = vadd.xlane.f32.xlu0 %v1293
        %v1295 = vpop.xlane.xlu0 %1294
        %v1296 = vsel %vm1198, %v1292, 0.0
        %1297 = vadd.xlane.f32.xlu0 %v1296
        %v1298 = vpop.xlane.xlu0 %1297
        %v1299 = vmul.f32 %v1295, %v1218
        %v1300 = vmul.f32 %v1298, %v1218
        %v1301 = vrsqrt.pop %v1299
        %v1302 = vmul.f32 %v1299, %v1301
        %vm1303 = vcmp.eq.f32.partialorder %v1299, inf
        %v1304 = vsel %vm1303, %v1299, %v1302
        %vm1305 = vcmp.eq.f32.partialorder %v1299, 0.0
        %v1306 = vand.u32 %v1299, 2147483648
        %v1307 = vsel %vm1305, %v1306, %v1304
        %v1308 = vrsqrt.pop %v1300
        %v1309 = vmul.f32 %v1300, %v1308
        %vm1310 = vcmp.eq.f32.partialorder %v1300, inf
        %v1311 = vsel %vm1310, %v1300, %v1309
        %vm1312 = vcmp.eq.f32.partialorder %v1300, 0.0
        %v1313 = vand.u32 %v1300, 2147483648
        %v1314 = vsel %vm1312, %v1313, %v1311
        %v1316 = vlaneseq
        %v1317 = vshrl.u32 %v1316, 7
        %v1318 = vsub.s32 0, %v1317
        %v1319 = vrot.slane %v1279, %v1318
        %v1321 = vmul.f32 %v1319, %v1289
        %v1322 = vmul.f32 %v1319, %v1290
        %v1323 = vadd.f32 %v1307, 1e-06
        %v1324 = vadd.f32 %v1314, 1e-06
        %v1325 = vrcp.pop %v1323
        %v1326 = vrcp.pop %v1324
        %v1327 = vmul.f32 %v1321, %v1325
        %v1328 = vmul.f32 %v1322, %v1326
        %v1330 = vlaneseq
        %v1331 = vshrl.u32 %v1330, 7
        %v1332 = vsub.s32 0, %v1331
        %v1333 = vrot.slane %v1280, %v1332
        %v1335 = vadd.f32 %v1327, %v1333
        %v1336 = vadd.f32 %v1328, %v1333
        %v1337 = vld [vmem:[%s17] sm:$0xff]
        %v1338 = vld [vmem:[%s17 + $0x8] sm:$0xff]
        %v1339 = vld [vmem:[%s17 + $0x10] sm:$0xff]
        %v1340 = vld [vmem:[%s17 + $0x18] sm:$0xff]
        %v1341 = vld [vmem:[%s19] sm:$0x1]
        %v1343 = vlaneseq
        %v1344 = vshrl.u32 %v1343, 7
        %v1345 = vsub.s32 0, %v1344
        %v1346 = vrot.slane %v1341, %v1345
        %v1349 = vsel %vm1198, %v1335, 0
        %v1352 = vsel %vm1198, %v1336, 0
        %1354 = vmatprep.subr.mxu0 0.0
        %1355 = vmatpush1.msra.mxu0 0.0
        %1356 = vmatprep.subr.mxu0 0.0
        %1357 = vmatpush1.msra.mxu0 0.0
        %1358 = vmatprep.subr.mxu0 0.0
        %1359 = vmatpush1.msra.mxu0 0.0
        %1360 = vmatprep.subr.mxu0 0.0
        %1361 = vmatpush1.msra.mxu0 0.0
        %1362 = vmatprep.subr.mxu0 0.0
        %1363 = vmatpush1.msra.mxu0 0.0
        %1364 = vmatprep.subr.mxu0 0.0
        %1365 = vmatpush1.msra.mxu0 0.0
        %1366 = vmatprep.subr.mxu0 0.0
        %1367 = vmatpush1.msra.mxu0 0.0
        %1368 = vmatprep.subr.mxu0 0.0
        %1369 = vmatpush1.msra.mxu0 0.0
        %1370 = vmatprep.subr.mxu0 0.0
        %1371 = vmatpush1.msra.mxu0 0.0
        %1372 = vmatprep.subr.mxu0 0.0
        %1373 = vmatpush1.msra.mxu0 0.0
        %1374 = vmatprep.subr.mxu0 0.0
        %1375 = vmatpush1.msra.mxu0 0.0
        %1376 = vmatprep.subr.mxu0 0.0
        %1377 = vmatpush1.msra.mxu0 0.0
        %1378 = vmatprep.subr.mxu0 0.0
        %1379 = vmatpush1.msra.mxu0 %v1340
        %1380 = vmatprep.subr.mxu0 0.0
        %1381 = vmatpush1.msra.mxu0 %v1339
        %1382 = vmatprep.subr.mxu0 0.0
        %1383 = vmatpush1.msra.mxu0 %v1338
        %1384 = vmatprep.subr.mxu0 0.0
        %1385 = vmatpush1.msra.mxu0 %v1337
        %1386 = vmatprep.subr.mxu0 0.0
        %1387 = vmatpush2.msra.mxu0 0.0
        %1388 = vmatprep.subr.mxu0 0.0
        %1389 = vmatpush2.msra.mxu0 0.0
        %1390 = vmatprep.subr.mxu0 0.0
        %1391 = vmatpush2.msra.mxu0 0.0
        %1392 = vmatprep.subr.mxu0 0.0
        %1393 = vmatpush2.msra.mxu0 0.0
        %1394 = vmatprep.subr.mxu0 0.0
        %1395 = vmatpush2.msra.mxu0 0.0
        %1396 = vmatprep.subr.mxu0 0.0
        %1397 = vmatpush2.msra.mxu0 0.0
        %1398 = vmatprep.subr.mxu0 0.0
        %1399 = vmatpush2.msra.mxu0 0.0
        %1400 = vmatprep.subr.mxu0 0.0
        %1401 = vmatpush2.msra.mxu0 0.0
        %1402 = vmatprep.subr.mxu0 0.0
        %1403 = vmatpush2.msra.mxu0 0.0
        %1404 = vmatprep.subr.mxu0 0.0
        %1405 = vmatpush2.msra.mxu0 0.0
        %1406 = vmatprep.subr.mxu0 0.0
        %1407 = vmatpush2.msra.mxu0 0.0
        %1408 = vmatprep.subr.mxu0 0.0
        %1409 = vmatpush2.msra.mxu0 0.0
        %1410 = vmatprep.subr.mxu0 0.0
        %1411 = vmatpush2.msra.mxu0 0.0
        %1412 = vmatprep.subr.mxu0 0.0
        %1413 = vmatpush2.msra.mxu0 0.0
        %1414 = vmatprep.subr.mxu0 0.0
        %1415 = vmatpush2.msra.mxu0 0.0
        %1416 = vmatprep.subr.mxu0 0.0
        %1417 = vmatpush2.msra.mxu0 0.0
        %1418 = vmatprep.mubr.f32.mxu0 0.0
        %1419 = vmatmul.mubr.f32.gmra.mxu0 %v1349
        %v1420 = vpop.f32.mrf.mxu0
        %v1421 = vadd.f32 %v1346, %v1420
        %v1422 = vpop.f32.mrf.mxu0
        %1423 = vmatprep.mubr.f32.mxu0 0.0
        %1424 = vmatmul.mubr.f32.gmra.mxu0 %v1352
        %v1425 = vpop.f32.mrf.mxu0
        %v1426 = vadd.f32 %v1346, %v1425
        %v1427 = vpop.f32.mrf.mxu0
        %1428 = vdwg.mxu0
        %v1429 = vmul.f32 %v1421, %v1263
        %v1430 = vmul.f32 %v1426, %v1263
        %1433 = vrot.lane.b32.xlu0 %v1421, 96
        %v1434 = vpop.permute.xlu0 %1433
        %1435 = vrot.lane.b32.xlu0 %v1426, 96
        %v1436 = vpop.permute.xlu0 %1435
        %v1438 = vsel %vm1198, %v1429, 0
        %v1441 = vsel %vm1198, %v1430, 0
        %v1443 = vsel %vm1198, %v1434, 0
        %v1445 = vsel %vm1198, %v1436, 0
        %1447 = vmatprep.subr.mxu0 0.0
        %1448 = vmatpush1.xpose.msra.mxu0 0.0
        %1449 = vmatprep.subr.mxu0 0.0
        %1450 = vmatpush1.xpose.msra.mxu0 0.0
        %1451 = vmatprep.subr.mxu0 0.0
        %1452 = vmatpush1.xpose.msra.mxu0 0.0
        %1453 = vmatprep.subr.mxu0 0.0
        %1454 = vmatpush1.xpose.msra.mxu0 0.0
        %1455 = vmatprep.subr.mxu0 0.0
        %1456 = vmatpush1.xpose.msra.mxu0 0.0
        %1457 = vmatprep.subr.mxu0 0.0
        %1458 = vmatpush1.xpose.msra.mxu0 0.0
        %1459 = vmatprep.subr.mxu0 0.0
        %1460 = vmatpush1.xpose.msra.mxu0 0.0
        %1461 = vmatprep.subr.mxu0 0.0
        %1462 = vmatpush1.xpose.msra.mxu0 0.0
        %1463 = vmatprep.subr.mxu0 0.0
        %1464 = vmatpush1.xpose.msra.mxu0 0.0
        %1465 = vmatprep.subr.mxu0 0.0
        %1466 = vmatpush1.xpose.msra.mxu0 0.0
        %1467 = vmatprep.subr.mxu0 0.0
        %1468 = vmatpush1.xpose.msra.mxu0 0.0
        %1469 = vmatprep.subr.mxu0 0.0
        %1470 = vmatpush1.xpose.msra.mxu0 0.0
        %1471 = vmatprep.subr.mxu0 0.0
        %1472 = vmatpush1.xpose.msra.mxu0 0.0
        %1473 = vmatprep.subr.mxu0 0.0
        %1474 = vmatpush1.xpose.msra.mxu0 0.0
        %1475 = vmatprep.subr.mxu0 0.0
        %1476 = vmatpush1.xpose.msra.mxu0 %v1445
        %1477 = vmatprep.subr.mxu0 0.0
        %1478 = vmatpush1.xpose.msra.mxu0 %v1443
        %1479 = vmatprep.subr.mxu0 0.0
        %1480 = vmatpush2.xpose.msra.mxu0 0.0
        %1481 = vmatprep.subr.mxu0 0.0
        %1482 = vmatpush2.xpose.msra.mxu0 0.0
        %1483 = vmatprep.subr.mxu0 0.0
        %1484 = vmatpush2.xpose.msra.mxu0 0.0
        %1485 = vmatprep.subr.mxu0 0.0
        %1486 = vmatpush2.xpose.msra.mxu0 0.0
        %1487 = vmatprep.subr.mxu0 0.0
        %1488 = vmatpush2.xpose.msra.mxu0 0.0
        %1489 = vmatprep.subr.mxu0 0.0
        %1490 = vmatpush2.xpose.msra.mxu0 0.0
        %1491 = vmatprep.subr.mxu0 0.0
        %1492 = vmatpush2.xpose.msra.mxu0 0.0
        %1493 = vmatprep.subr.mxu0 0.0
        %1494 = vmatpush2.xpose.msra.mxu0 0.0
        %1495 = vmatprep.subr.mxu0 0.0
        %1496 = vmatpush2.xpose.msra.mxu0 0.0
        %1497 = vmatprep.subr.mxu0 0.0
        %1498 = vmatpush2.xpose.msra.mxu0 0.0
        %1499 = vmatprep.subr.mxu0 0.0
        %1500 = vmatpush2.xpose.msra.mxu0 0.0
        %1501 = vmatprep.subr.mxu0 0.0
        %1502 = vmatpush2.xpose.msra.mxu0 0.0
        %1503 = vmatprep.subr.mxu0 0.0
        %1504 = vmatpush2.xpose.msra.mxu0 0.0
        %1505 = vmatprep.subr.mxu0 0.0
        %1506 = vmatpush2.xpose.msra.mxu0 0.0
        %1507 = vmatprep.subr.mxu0 0.0
        %1508 = vmatpush2.xpose.msra.mxu0 0.0
        %1509 = vmatprep.subr.mxu0 0.0
        %1510 = vmatpush2.xpose.msra.mxu0 0.0
        %1511 = vmatprep.mubr.f32.mxu0 0.0
        %1512 = vmatmul.mubr.f32.gmra.mxu0 %v1438
        %v1513 = vpop.f32.mrf.mxu0
        %v1514 = vadd.f32 0.0, %v1513
        %v1515 = vpop.f32.mrf.mxu0
        %1516 = vmatprep.mubr.f32.mxu0 0.0
        %1517 = vmatmul.mubr.f32.gmra.mxu0 %v1441
        %v1518 = vpop.f32.mrf.mxu0
        %v1519 = vadd.f32 0.0, %v1518
        %v1520 = vpop.f32.mrf.mxu0
        %1521 = vdwg.mxu0
        %v1522 = vmul.f32 %v1514, 0.35355338
        %v1523 = vmul.f32 %v1519, 0.35355338
        %v1524 = vsel %vm1258, 1, 0
        %v1525 = vlaneseq
        %v1526 = vshrl.u32 %v1525, 7
        %v1527 = vsub.s32 0, %v1526
        %v1528 = vrot.slane %v1524, %v1527
        %vm1529 = vcmp.eq.s32.totalorder %v1528, 1
        %v1530 = vsel %vm1529, %v1522, -1e+09
        %v1531 = vsel %vm1529, %v1523, -1e+09
        %vm1532 = vcmask 130048
        %v1533 = vsel %vm1532, %v1530, -inf
        %1534 = vmax.xlane.f32.xlu0 %v1533
        %v1535 = vpop.xlane.xlu0 %1534
        %v1536 = vsel %vm1532, %v1531, -inf
        %1537 = vmax.xlane.f32.xlu0 %v1536
        %v1538 = vpop.xlane.xlu0 %1537
        %v1539 = vsub.f32 %v1530, %v1535
        %v1540 = vsub.f32 %v1531, %v1538
        %v1541 = vmul.f32 %v1539, 1.442695
        %v1542 = vpow.pop %v1541
        %v1543 = vmul.f32 %v1540, 1.442695
        %v1544 = vpow.pop %v1543
        %v1545 = vsel %vm1532, %v1542, 0.0
        %1546 = vadd.xlane.f32.xlu0 %v1545
        %v1547 = vpop.xlane.xlu0 %1546
        %v1548 = vsel %vm1532, %v1544, 0.0
        %1549 = vadd.xlane.f32.xlu0 %v1548
        %v1550 = vpop.xlane.xlu0 %1549
        %v1551 = vrcp.pop %v1547
        %v1552 = vrcp.pop %v1550
        %v1553 = vmul.f32 %v1542, %v1551
        %v1554 = vmul.f32 %v1544, %v1552
        %1555 = vrot.lane.b32.xlu0 %v1421, 64
        %v1556 = vpop.permute.xlu0 %1555
        %1557 = vrot.lane.b32.xlu0 %v1426, 64
        %v1558 = vpop.permute.xlu0 %1557
        %v1562 = vsel %vm1532, %v1553, 0
        %v1565 = vsel %vm1532, %v1554, 0
        %1567 = vmatprep.subr.mxu0 0.0
        %1568 = vmatpush1.msra.mxu0 0.0
        %1569 = vmatprep.subr.mxu0 0.0
        %1570 = vmatpush1.msra.mxu0 0.0
        %1571 = vmatprep.subr.mxu0 0.0
        %1572 = vmatpush1.msra.mxu0 0.0
        %1573 = vmatprep.subr.mxu0 0.0
        %1574 = vmatpush1.msra.mxu0 0.0
        %1575 = vmatprep.subr.mxu0 0.0
        %1576 = vmatpush1.msra.mxu0 0.0
        %1577 = vmatprep.subr.mxu0 0.0
        %1578 = vmatpush1.msra.mxu0 0.0
        %1579 = vmatprep.subr.mxu0 0.0
        %1580 = vmatpush1.msra.mxu0 0.0
        %1581 = vmatprep.subr.mxu0 0.0
        %1582 = vmatpush1.msra.mxu0 0.0
        %1583 = vmatprep.subr.mxu0 0.0
        %1584 = vmatpush1.msra.mxu0 0.0
        %1585 = vmatprep.subr.mxu0 0.0
        %1586 = vmatpush1.msra.mxu0 0.0
        %1587 = vmatprep.subr.mxu0 0.0
        %1588 = vmatpush1.msra.mxu0 0.0
        %1589 = vmatprep.subr.mxu0 0.0
        %1590 = vmatpush1.msra.mxu0 0.0
        %1591 = vmatprep.subr.mxu0 0.0
        %1592 = vmatpush1.msra.mxu0 0.0
        %1593 = vmatprep.subr.mxu0 0.0
        %1594 = vmatpush1.msra.mxu0 0.0
        %1595 = vmatprep.subr.mxu0 0.0
        %1596 = vmatpush1.msra.mxu0 %v1558
        %1597 = vmatprep.subr.mxu0 0.0
        %1598 = vmatpush1.msra.mxu0 %v1556
        %1599 = vmatprep.subr.mxu0 0.0
        %1600 = vmatpush2.msra.mxu0 0.0
        %1601 = vmatprep.subr.mxu0 0.0
        %1602 = vmatpush2.msra.mxu0 0.0
        %1603 = vmatprep.subr.mxu0 0.0
        %1604 = vmatpush2.msra.mxu0 0.0
        %1605 = vmatprep.subr.mxu0 0.0
        %1606 = vmatpush2.msra.mxu0 0.0
        %1607 = vmatprep.subr.mxu0 0.0
        %1608 = vmatpush2.msra.mxu0 0.0
        %1609 = vmatprep.subr.mxu0 0.0
        %1610 = vmatpush2.msra.mxu0 0.0
        %1611 = vmatprep.subr.mxu0 0.0
        %1612 = vmatpush2.msra.mxu0 0.0
        %1613 = vmatprep.subr.mxu0 0.0
        %1614 = vmatpush2.msra.mxu0 0.0
        %1615 = vmatprep.subr.mxu0 0.0
        %1616 = vmatpush2.msra.mxu0 0.0
        %1617 = vmatprep.subr.mxu0 0.0
        %1618 = vmatpush2.msra.mxu0 0.0
        %1619 = vmatprep.subr.mxu0 0.0
        %1620 = vmatpush2.msra.mxu0 0.0
        %1621 = vmatprep.subr.mxu0 0.0
        %1622 = vmatpush2.msra.mxu0 0.0
        %1623 = vmatprep.subr.mxu0 0.0
        %1624 = vmatpush2.msra.mxu0 0.0
        %1625 = vmatprep.subr.mxu0 0.0
        %1626 = vmatpush2.msra.mxu0 0.0
        %1627 = vmatprep.subr.mxu0 0.0
        %1628 = vmatpush2.msra.mxu0 0.0
        %1629 = vmatprep.subr.mxu0 0.0
        %1630 = vmatpush2.msra.mxu0 0.0
        %1631 = vmatprep.mubr.f32.mxu0 0.0
        %1632 = vmatmul.mubr.f32.gmra.mxu0 %v1562
        %v1633 = vpop.f32.mrf.mxu0
        %v1634 = vadd.f32 0.0, %v1633
        %v1635 = vpop.f32.mrf.mxu0
        %1636 = vmatprep.mubr.f32.mxu0 0.0
        %1637 = vmatmul.mubr.f32.gmra.mxu0 %v1565
        %v1638 = vpop.f32.mrf.mxu0
        %v1639 = vadd.f32 0.0, %v1638
        %v1640 = vpop.f32.mrf.mxu0
        %1641 = vdwg.mxu0
        %v1642 = vmul.f32 %v1634, %v1263
        %v1643 = vmul.f32 %v1639, %v1263
        %v1644 = vadd.f32 %v1642, 0.0
        %v1645 = vadd.f32 %v1643, 0.0
        %v1646 = vmul.f32 %v1421, %v1268
        %v1647 = vmul.f32 %v1426, %v1268
        %v1649 = vsel %vm1198, %v1646, 0
        %v1652 = vsel %vm1198, %v1647, 0
        %1654 = vmatprep.subr.mxu0 0.0
        %1655 = vmatpush1.xpose.msra.mxu0 0.0
        %1656 = vmatprep.subr.mxu0 0.0
        %1657 = vmatpush1.xpose.msra.mxu0 0.0
        %1658 = vmatprep.subr.mxu0 0.0
        %1659 = vmatpush1.xpose.msra.mxu0 0.0
        %1660 = vmatprep.subr.mxu0 0.0
        %1661 = vmatpush1.xpose.msra.mxu0 0.0
        %1662 = vmatprep.subr.mxu0 0.0
        %1663 = vmatpush1.xpose.msra.mxu0 0.0
        %1664 = vmatprep.subr.mxu0 0.0
        %1665 = vmatpush1.xpose.msra.mxu0 0.0
        %1666 = vmatprep.subr.mxu0 0.0
        %1667 = vmatpush1.xpose.msra.mxu0 0.0
        %1668 = vmatprep.subr.mxu0 0.0
        %1669 = vmatpush1.xpose.msra.mxu0 0.0
        %1670 = vmatprep.subr.mxu0 0.0
        %1671 = vmatpush1.xpose.msra.mxu0 0.0
        %1672 = vmatprep.subr.mxu0 0.0
        %1673 = vmatpush1.xpose.msra.mxu0 0.0
        %1674 = vmatprep.subr.mxu0 0.0
        %1675 = vmatpush1.xpose.msra.mxu0 0.0
        %1676 = vmatprep.subr.mxu0 0.0
        %1677 = vmatpush1.xpose.msra.mxu0 0.0
        %1678 = vmatprep.subr.mxu0 0.0
        %1679 = vmatpush1.xpose.msra.mxu0 0.0
        %1680 = vmatprep.subr.mxu0 0.0
        %1681 = vmatpush1.xpose.msra.mxu0 0.0
        %1682 = vmatprep.subr.mxu0 0.0
        %1683 = vmatpush1.xpose.msra.mxu0 %v1445
        %1684 = vmatprep.subr.mxu0 0.0
        %1685 = vmatpush1.xpose.msra.mxu0 %v1443
        %1686 = vmatprep.subr.mxu0 0.0
        %1687 = vmatpush2.xpose.msra.mxu0 0.0
        %1688 = vmatprep.subr.mxu0 0.0
        %1689 = vmatpush2.xpose.msra.mxu0 0.0
        %1690 = vmatprep.subr.mxu0 0.0
        %1691 = vmatpush2.xpose.msra.mxu0 0.0
        %1692 = vmatprep.subr.mxu0 0.0
        %1693 = vmatpush2.xpose.msra.mxu0 0.0
        %1694 = vmatprep.subr.mxu0 0.0
        %1695 = vmatpush2.xpose.msra.mxu0 0.0
        %1696 = vmatprep.subr.mxu0 0.0
        %1697 = vmatpush2.xpose.msra.mxu0 0.0
        %1698 = vmatprep.subr.mxu0 0.0
        %1699 = vmatpush2.xpose.msra.mxu0 0.0
        %1700 = vmatprep.subr.mxu0 0.0
        %1701 = vmatpush2.xpose.msra.mxu0 0.0
        %1702 = vmatprep.subr.mxu0 0.0
        %1703 = vmatpush2.xpose.msra.mxu0 0.0
        %1704 = vmatprep.subr.mxu0 0.0
        %1705 = vmatpush2.xpose.msra.mxu0 0.0
        %1706 = vmatprep.subr.mxu0 0.0
        %1707 = vmatpush2.xpose.msra.mxu0 0.0
        %1708 = vmatprep.subr.mxu0 0.0
        %1709 = vmatpush2.xpose.msra.mxu0 0.0
        %1710 = vmatprep.subr.mxu0 0.0
        %1711 = vmatpush2.xpose.msra.mxu0 0.0
        %1712 = vmatprep.subr.mxu0 0.0
        %1713 = vmatpush2.xpose.msra.mxu0 0.0
        %1714 = vmatprep.subr.mxu0 0.0
        %1715 = vmatpush2.xpose.msra.mxu0 0.0
        %1716 = vmatprep.subr.mxu0 0.0
        %1717 = vmatpush2.xpose.msra.mxu0 0.0
        %1718 = vmatprep.mubr.f32.mxu0 0.0
        %1719 = vmatmul.mubr.f32.gmra.mxu0 %v1649
        %v1720 = vpop.f32.mrf.mxu0
        %v1721 = vadd.f32 0.0, %v1720
        %v1722 = vpop.f32.mrf.mxu0
        %1723 = vmatprep.mubr.f32.mxu0 0.0
        %1724 = vmatmul.mubr.f32.gmra.mxu0 %v1652
        %v1725 = vpop.f32.mrf.mxu0
        %v1726 = vadd.f32 0.0, %v1725
        %v1727 = vpop.f32.mrf.mxu0
        %1728 = vdwg.mxu0
        %v1729 = vmul.f32 %v1721, 0.35355338
        %v1730 = vmul.f32 %v1726, 0.35355338
        %v1731 = vsel %vm1529, %v1729, -1e+09
        %v1732 = vsel %vm1529, %v1730, -1e+09
        %v1733 = vsel %vm1532, %v1731, -inf
        %1734 = vmax.xlane.f32.xlu0 %v1733
        %v1735 = vpop.xlane.xlu0 %1734
        %v1736 = vsel %vm1532, %v1732, -inf
        %1737 = vmax.xlane.f32.xlu0 %v1736
        %v1738 = vpop.xlane.xlu0 %1737
        %v1739 = vsub.f32 %v1731, %v1735
        %v1740 = vsub.f32 %v1732, %v1738
        %v1741 = vmul.f32 %v1739, 1.442695
        %v1742 = vpow.pop %v1741
        %v1743 = vmul.f32 %v1740, 1.442695
        %v1744 = vpow.pop %v1743
        %v1745 = vsel %vm1532, %v1742, 0.0
        %1746 = vadd.xlane.f32.xlu0 %v1745
        %v1747 = vpop.xlane.xlu0 %1746
        %v1748 = vsel %vm1532, %v1744, 0.0
        %1749 = vadd.xlane.f32.xlu0 %v1748
        %v1750 = vpop.xlane.xlu0 %1749
        %v1751 = vrcp.pop %v1747
        %v1752 = vrcp.pop %v1750
        %v1753 = vmul.f32 %v1742, %v1751
        %v1754 = vmul.f32 %v1744, %v1752
        %v1756 = vsel %vm1532, %v1753, 0
        %v1759 = vsel %vm1532, %v1754, 0
        %1761 = vmatprep.subr.mxu0 0.0
        %1762 = vmatpush1.msra.mxu0 0.0
        %1763 = vmatprep.subr.mxu0 0.0
        %1764 = vmatpush1.msra.mxu0 0.0
        %1765 = vmatprep.subr.mxu0 0.0
        %1766 = vmatpush1.msra.mxu0 0.0
        %1767 = vmatprep.subr.mxu0 0.0
        %1768 = vmatpush1.msra.mxu0 0.0
        %1769 = vmatprep.subr.mxu0 0.0
        %1770 = vmatpush1.msra.mxu0 0.0
        %1771 = vmatprep.subr.mxu0 0.0
        %1772 = vmatpush1.msra.mxu0 0.0
        %1773 = vmatprep.subr.mxu0 0.0
        %1774 = vmatpush1.msra.mxu0 0.0
        %1775 = vmatprep.subr.mxu0 0.0
        %1776 = vmatpush1.msra.mxu0 0.0
        %1777 = vmatprep.subr.mxu0 0.0
        %1778 = vmatpush1.msra.mxu0 0.0
        %1779 = vmatprep.subr.mxu0 0.0
        %1780 = vmatpush1.msra.mxu0 0.0
        %1781 = vmatprep.subr.mxu0 0.0
        %1782 = vmatpush1.msra.mxu0 0.0
        %1783 = vmatprep.subr.mxu0 0.0
        %1784 = vmatpush1.msra.mxu0 0.0
        %1785 = vmatprep.subr.mxu0 0.0
        %1786 = vmatpush1.msra.mxu0 0.0
        %1787 = vmatprep.subr.mxu0 0.0
        %1788 = vmatpush1.msra.mxu0 0.0
        %1789 = vmatprep.subr.mxu0 0.0
        %1790 = vmatpush1.msra.mxu0 %v1558
        %1791 = vmatprep.subr.mxu0 0.0
        %1792 = vmatpush1.msra.mxu0 %v1556
        %1793 = vmatprep.subr.mxu0 0.0
        %1794 = vmatpush2.msra.mxu0 0.0
        %1795 = vmatprep.subr.mxu0 0.0
        %1796 = vmatpush2.msra.mxu0 0.0
        %1797 = vmatprep.subr.mxu0 0.0
        %1798 = vmatpush2.msra.mxu0 0.0
        %1799 = vmatprep.subr.mxu0 0.0
        %1800 = vmatpush2.msra.mxu0 0.0
        %1801 = vmatprep.subr.mxu0 0.0
        %1802 = vmatpush2.msra.mxu0 0.0
        %1803 = vmatprep.subr.mxu0 0.0
        %1804 = vmatpush2.msra.mxu0 0.0
        %1805 = vmatprep.subr.mxu0 0.0
        %1806 = vmatpush2.msra.mxu0 0.0
        %1807 = vmatprep.subr.mxu0 0.0
        %1808 = vmatpush2.msra.mxu0 0.0
        %1809 = vmatprep.subr.mxu0 0.0
        %1810 = vmatpush2.msra.mxu0 0.0
        %1811 = vmatprep.subr.mxu0 0.0
        %1812 = vmatpush2.msra.mxu0 0.0
        %1813 = vmatprep.subr.mxu0 0.0
        %1814 = vmatpush2.msra.mxu0 0.0
        %1815 = vmatprep.subr.mxu0 0.0
        %1816 = vmatpush2.msra.mxu0 0.0
        %1817 = vmatprep.subr.mxu0 0.0
        %1818 = vmatpush2.msra.mxu0 0.0
        %1819 = vmatprep.subr.mxu0 0.0
        %1820 = vmatpush2.msra.mxu0 0.0
        %1821 = vmatprep.subr.mxu0 0.0
        %1822 = vmatpush2.msra.mxu0 0.0
        %1823 = vmatprep.subr.mxu0 0.0
        %1824 = vmatpush2.msra.mxu0 0.0
        %1825 = vmatprep.mubr.f32.mxu0 0.0
        %1826 = vmatmul.mubr.f32.gmra.mxu0 %v1756
        %v1827 = vpop.f32.mrf.mxu0
        %v1828 = vadd.f32 0.0, %v1827
        %v1829 = vpop.f32.mrf.mxu0
        %1830 = vmatprep.mubr.f32.mxu0 0.0
        %1831 = vmatmul.mubr.f32.gmra.mxu0 %v1759
        %v1832 = vpop.f32.mrf.mxu0
        %v1833 = vadd.f32 0.0, %v1832
        %v1834 = vpop.f32.mrf.mxu0
        %1835 = vdwg.mxu0
        %v1836 = vmul.f32 %v1828, %v1268
        %v1837 = vmul.f32 %v1833, %v1268
        %v1838 = vadd.f32 %v1644, %v1836
        %v1839 = vadd.f32 %v1645, %v1837
        %v1840 = vmul.f32 %v1421, %v1273
        %v1841 = vmul.f32 %v1426, %v1273
        %v1843 = vsel %vm1198, %v1840, 0
        %v1846 = vsel %vm1198, %v1841, 0
        %1848 = vmatprep.subr.mxu0 0.0
        %1849 = vmatpush1.xpose.msra.mxu0 0.0
        %1850 = vmatprep.subr.mxu0 0.0
        %1851 = vmatpush1.xpose.msra.mxu0 0.0
        %1852 = vmatprep.subr.mxu0 0.0
        %1853 = vmatpush1.xpose.msra.mxu0 0.0
        %1854 = vmatprep.subr.mxu0 0.0
        %1855 = vmatpush1.xpose.msra.mxu0 0.0
        %1856 = vmatprep.subr.mxu0 0.0
        %1857 = vmatpush1.xpose.msra.mxu0 0.0
        %1858 = vmatprep.subr.mxu0 0.0
        %1859 = vmatpush1.xpose.msra.mxu0 0.0
        %1860 = vmatprep.subr.mxu0 0.0
        %1861 = vmatpush1.xpose.msra.mxu0 0.0
        %1862 = vmatprep.subr.mxu0 0.0
        %1863 = vmatpush1.xpose.msra.mxu0 0.0
        %1864 = vmatprep.subr.mxu0 0.0
        %1865 = vmatpush1.xpose.msra.mxu0 0.0
        %1866 = vmatprep.subr.mxu0 0.0
        %1867 = vmatpush1.xpose.msra.mxu0 0.0
        %1868 = vmatprep.subr.mxu0 0.0
        %1869 = vmatpush1.xpose.msra.mxu0 0.0
        %1870 = vmatprep.subr.mxu0 0.0
        %1871 = vmatpush1.xpose.msra.mxu0 0.0
        %1872 = vmatprep.subr.mxu0 0.0
        %1873 = vmatpush1.xpose.msra.mxu0 0.0
        %1874 = vmatprep.subr.mxu0 0.0
        %1875 = vmatpush1.xpose.msra.mxu0 0.0
        %1876 = vmatprep.subr.mxu0 0.0
        %1877 = vmatpush1.xpose.msra.mxu0 %v1445
        %1878 = vmatprep.subr.mxu0 0.0
        %1879 = vmatpush1.xpose.msra.mxu0 %v1443
        %1880 = vmatprep.subr.mxu0 0.0
        %1881 = vmatpush2.xpose.msra.mxu0 0.0
        %1882 = vmatprep.subr.mxu0 0.0
        %1883 = vmatpush2.xpose.msra.mxu0 0.0
        %1884 = vmatprep.subr.mxu0 0.0
        %1885 = vmatpush2.xpose.msra.mxu0 0.0
        %1886 = vmatprep.subr.mxu0 0.0
        %1887 = vmatpush2.xpose.msra.mxu0 0.0
        %1888 = vmatprep.subr.mxu0 0.0
        %1889 = vmatpush2.xpose.msra.mxu0 0.0
        %1890 = vmatprep.subr.mxu0 0.0
        %1891 = vmatpush2.xpose.msra.mxu0 0.0
        %1892 = vmatprep.subr.mxu0 0.0
        %1893 = vmatpush2.xpose.msra.mxu0 0.0
        %1894 = vmatprep.subr.mxu0 0.0
        %1895 = vmatpush2.xpose.msra.mxu0 0.0
        %1896 = vmatprep.subr.mxu0 0.0
        %1897 = vmatpush2.xpose.msra.mxu0 0.0
        %1898 = vmatprep.subr.mxu0 0.0
        %1899 = vmatpush2.xpose.msra.mxu0 0.0
        %1900 = vmatprep.subr.mxu0 0.0
        %1901 = vmatpush2.xpose.msra.mxu0 0.0
        %1902 = vmatprep.subr.mxu0 0.0
        %1903 = vmatpush2.xpose.msra.mxu0 0.0
        %1904 = vmatprep.subr.mxu0 0.0
        %1905 = vmatpush2.xpose.msra.mxu0 0.0
        %1906 = vmatprep.subr.mxu0 0.0
        %1907 = vmatpush2.xpose.msra.mxu0 0.0
        %1908 = vmatprep.subr.mxu0 0.0
        %1909 = vmatpush2.xpose.msra.mxu0 0.0
        %1910 = vmatprep.subr.mxu0 0.0
        %1911 = vmatpush2.xpose.msra.mxu0 0.0
        %1912 = vmatprep.mubr.f32.mxu0 0.0
        %1913 = vmatmul.mubr.f32.gmra.mxu0 %v1843
        %v1914 = vpop.f32.mrf.mxu0
        %v1915 = vadd.f32 0.0, %v1914
        %v1916 = vpop.f32.mrf.mxu0
        %1917 = vmatprep.mubr.f32.mxu0 0.0
        %1918 = vmatmul.mubr.f32.gmra.mxu0 %v1846
        %v1919 = vpop.f32.mrf.mxu0
        %v1920 = vadd.f32 0.0, %v1919
        %v1921 = vpop.f32.mrf.mxu0
        %1922 = vdwg.mxu0
        %v1923 = vmul.f32 %v1915, 0.35355338
        %v1924 = vmul.f32 %v1920, 0.35355338
        %v1925 = vsel %vm1529, %v1923, -1e+09
        %v1926 = vsel %vm1529, %v1924, -1e+09
        %v1927 = vsel %vm1532, %v1925, -inf
        %1928 = vmax.xlane.f32.xlu0 %v1927
        %v1929 = vpop.xlane.xlu0 %1928
        %v1930 = vsel %vm1532, %v1926, -inf
        %1931 = vmax.xlane.f32.xlu0 %v1930
        %v1932 = vpop.xlane.xlu0 %1931
        %v1933 = vsub.f32 %v1925, %v1929
        %v1934 = vsub.f32 %v1926, %v1932
        %v1935 = vmul.f32 %v1933, 1.442695
        %v1936 = vpow.pop %v1935
        %v1937 = vmul.f32 %v1934, 1.442695
        %v1938 = vpow.pop %v1937
        %v1939 = vsel %vm1532, %v1936, 0.0
        %1940 = vadd.xlane.f32.xlu0 %v1939
        %v1941 = vpop.xlane.xlu0 %1940
        %v1942 = vsel %vm1532, %v1938, 0.0
        %1943 = vadd.xlane.f32.xlu0 %v1942
        %v1944 = vpop.xlane.xlu0 %1943
        %v1945 = vrcp.pop %v1941
        %v1946 = vrcp.pop %v1944
        %v1947 = vmul.f32 %v1936, %v1945
        %v1948 = vmul.f32 %v1938, %v1946
        %v1950 = vsel %vm1532, %v1947, 0
        %v1953 = vsel %vm1532, %v1948, 0
        %1955 = vmatprep.subr.mxu0 0.0
        %1956 = vmatpush1.msra.mxu0 0.0
        %1957 = vmatprep.subr.mxu0 0.0
        %1958 = vmatpush1.msra.mxu0 0.0
        %1959 = vmatprep.subr.mxu0 0.0
        %1960 = vmatpush1.msra.mxu0 0.0
        %1961 = vmatprep.subr.mxu0 0.0
        %1962 = vmatpush1.msra.mxu0 0.0
        %1963 = vmatprep.subr.mxu0 0.0
        %1964 = vmatpush1.msra.mxu0 0.0
        %1965 = vmatprep.subr.mxu0 0.0
        %1966 = vmatpush1.msra.mxu0 0.0
        %1967 = vmatprep.subr.mxu0 0.0
        %1968 = vmatpush1.msra.mxu0 0.0
        %1969 = vmatprep.subr.mxu0 0.0
        %1970 = vmatpush1.msra.mxu0 0.0
        %1971 = vmatprep.subr.mxu0 0.0
        %1972 = vmatpush1.msra.mxu0 0.0
        %1973 = vmatprep.subr.mxu0 0.0
        %1974 = vmatpush1.msra.mxu0 0.0
        %1975 = vmatprep.subr.mxu0 0.0
        %1976 = vmatpush1.msra.mxu0 0.0
        %1977 = vmatprep.subr.mxu0 0.0
        %1978 = vmatpush1.msra.mxu0 0.0
        %1979 = vmatprep.subr.mxu0 0.0
        %1980 = vmatpush1.msra.mxu0 0.0
        %1981 = vmatprep.subr.mxu0 0.0
        %1982 = vmatpush1.msra.mxu0 0.0
        %1983 = vmatprep.subr.mxu0 0.0
        %1984 = vmatpush1.msra.mxu0 %v1558
        %1985 = vmatprep.subr.mxu0 0.0
        %1986 = vmatpush1.msra.mxu0 %v1556
        %1987 = vmatprep.subr.mxu0 0.0
        %1988 = vmatpush2.msra.mxu0 0.0
        %1989 = vmatprep.subr.mxu0 0.0
        %1990 = vmatpush2.msra.mxu0 0.0
        %1991 = vmatprep.subr.mxu0 0.0
        %1992 = vmatpush2.msra.mxu0 0.0
        %1993 = vmatprep.subr.mxu0 0.0
        %1994 = vmatpush2.msra.mxu0 0.0
        %1995 = vmatprep.subr.mxu0 0.0
        %1996 = vmatpush2.msra.mxu0 0.0
        %1997 = vmatprep.subr.mxu0 0.0
        %1998 = vmatpush2.msra.mxu0 0.0
        %1999 = vmatprep.subr.mxu0 0.0
        %2000 = vmatpush2.msra.mxu0 0.0
        %2001 = vmatprep.subr.mxu0 0.0
        %2002 = vmatpush2.msra.mxu0 0.0
        %2003 = vmatprep.subr.mxu0 0.0
        %2004 = vmatpush2.msra.mxu0 0.0
        %2005 = vmatprep.subr.mxu0 0.0
        %2006 = vmatpush2.msra.mxu0 0.0
        %2007 = vmatprep.subr.mxu0 0.0
        %2008 = vmatpush2.msra.mxu0 0.0
        %2009 = vmatprep.subr.mxu0 0.0
        %2010 = vmatpush2.msra.mxu0 0.0
        %2011 = vmatprep.subr.mxu0 0.0
        %2012 = vmatpush2.msra.mxu0 0.0
        %2013 = vmatprep.subr.mxu0 0.0
        %2014 = vmatpush2.msra.mxu0 0.0
        %2015 = vmatprep.subr.mxu0 0.0
        %2016 = vmatpush2.msra.mxu0 0.0
        %2017 = vmatprep.subr.mxu0 0.0
        %2018 = vmatpush2.msra.mxu0 0.0
        %2019 = vmatprep.mubr.f32.mxu0 0.0
        %2020 = vmatmul.mubr.f32.gmra.mxu0 %v1950
        %v2021 = vpop.f32.mrf.mxu0
        %v2022 = vadd.f32 0.0, %v2021
        %v2023 = vpop.f32.mrf.mxu0
        %2024 = vmatprep.mubr.f32.mxu0 0.0
        %2025 = vmatmul.mubr.f32.gmra.mxu0 %v1953
        %v2026 = vpop.f32.mrf.mxu0
        %v2027 = vadd.f32 0.0, %v2026
        %v2028 = vpop.f32.mrf.mxu0
        %2029 = vdwg.mxu0
        %v2030 = vmul.f32 %v2022, %v1273
        %v2031 = vmul.f32 %v2027, %v1273
        %v2032 = vadd.f32 %v1838, %v2030
        %v2033 = vadd.f32 %v1839, %v2031
        %v2034 = vmul.f32 %v1421, %v1278
        %v2035 = vmul.f32 %v1426, %v1278
        %v2037 = vsel %vm1198, %v2034, 0
        %v2040 = vsel %vm1198, %v2035, 0
        %2042 = vmatprep.subr.mxu0 0.0
        %2043 = vmatpush1.xpose.msra.mxu0 0.0
        %2044 = vmatprep.subr.mxu0 0.0
        %2045 = vmatpush1.xpose.msra.mxu0 0.0
        %2046 = vmatprep.subr.mxu0 0.0
        %2047 = vmatpush1.xpose.msra.mxu0 0.0
        %2048 = vmatprep.subr.mxu0 0.0
        %2049 = vmatpush1.xpose.msra.mxu0 0.0
        %2050 = vmatprep.subr.mxu0 0.0
        %2051 = vmatpush1.xpose.msra.mxu0 0.0
        %2052 = vmatprep.subr.mxu0 0.0
        %2053 = vmatpush1.xpose.msra.mxu0 0.0
        %2054 = vmatprep.subr.mxu0 0.0
        %2055 = vmatpush1.xpose.msra.mxu0 0.0
        %2056 = vmatprep.subr.mxu0 0.0
        %2057 = vmatpush1.xpose.msra.mxu0 0.0
        %2058 = vmatprep.subr.mxu0 0.0
        %2059 = vmatpush1.xpose.msra.mxu0 0.0
        %2060 = vmatprep.subr.mxu0 0.0
        %2061 = vmatpush1.xpose.msra.mxu0 0.0
        %2062 = vmatprep.subr.mxu0 0.0
        %2063 = vmatpush1.xpose.msra.mxu0 0.0
        %2064 = vmatprep.subr.mxu0 0.0
        %2065 = vmatpush1.xpose.msra.mxu0 0.0
        %2066 = vmatprep.subr.mxu0 0.0
        %2067 = vmatpush1.xpose.msra.mxu0 0.0
        %2068 = vmatprep.subr.mxu0 0.0
        %2069 = vmatpush1.xpose.msra.mxu0 0.0
        %2070 = vmatprep.subr.mxu0 0.0
        %2071 = vmatpush1.xpose.msra.mxu0 %v1445
        %2072 = vmatprep.subr.mxu0 0.0
        %2073 = vmatpush1.xpose.msra.mxu0 %v1443
        %2074 = vmatprep.subr.mxu0 0.0
        %2075 = vmatpush2.xpose.msra.mxu0 0.0
        %2076 = vmatprep.subr.mxu0 0.0
        %2077 = vmatpush2.xpose.msra.mxu0 0.0
        %2078 = vmatprep.subr.mxu0 0.0
        %2079 = vmatpush2.xpose.msra.mxu0 0.0
        %2080 = vmatprep.subr.mxu0 0.0
        %2081 = vmatpush2.xpose.msra.mxu0 0.0
        %2082 = vmatprep.subr.mxu0 0.0
        %2083 = vmatpush2.xpose.msra.mxu0 0.0
        %2084 = vmatprep.subr.mxu0 0.0
        %2085 = vmatpush2.xpose.msra.mxu0 0.0
        %2086 = vmatprep.subr.mxu0 0.0
        %2087 = vmatpush2.xpose.msra.mxu0 0.0
        %2088 = vmatprep.subr.mxu0 0.0
        %2089 = vmatpush2.xpose.msra.mxu0 0.0
        %2090 = vmatprep.subr.mxu0 0.0
        %2091 = vmatpush2.xpose.msra.mxu0 0.0
        %2092 = vmatprep.subr.mxu0 0.0
        %2093 = vmatpush2.xpose.msra.mxu0 0.0
        %2094 = vmatprep.subr.mxu0 0.0
        %2095 = vmatpush2.xpose.msra.mxu0 0.0
        %2096 = vmatprep.subr.mxu0 0.0
        %2097 = vmatpush2.xpose.msra.mxu0 0.0
        %2098 = vmatprep.subr.mxu0 0.0
        %2099 = vmatpush2.xpose.msra.mxu0 0.0
        %2100 = vmatprep.subr.mxu0 0.0
        %2101 = vmatpush2.xpose.msra.mxu0 0.0
        %2102 = vmatprep.subr.mxu0 0.0
        %2103 = vmatpush2.xpose.msra.mxu0 0.0
        %2104 = vmatprep.subr.mxu0 0.0
        %2105 = vmatpush2.xpose.msra.mxu0 0.0
        %2106 = vmatprep.mubr.f32.mxu0 0.0
        %2107 = vmatmul.mubr.f32.gmra.mxu0 %v2037
        %v2108 = vpop.f32.mrf.mxu0
        %v2109 = vadd.f32 0.0, %v2108
        %v2110 = vpop.f32.mrf.mxu0
        %2111 = vmatprep.mubr.f32.mxu0 0.0
        %2112 = vmatmul.mubr.f32.gmra.mxu0 %v2040
        %v2113 = vpop.f32.mrf.mxu0
        %v2114 = vadd.f32 0.0, %v2113
        %v2115 = vpop.f32.mrf.mxu0
        %2116 = vdwg.mxu0
        %v2117 = vmul.f32 %v2109, 0.35355338
        %v2118 = vmul.f32 %v2114, 0.35355338
        %v2119 = vsel %vm1529, %v2117, -1e+09
        %v2120 = vsel %vm1529, %v2118, -1e+09
        %v2121 = vsel %vm1532, %v2119, -inf
        %2122 = vmax.xlane.f32.xlu0 %v2121
        %v2123 = vpop.xlane.xlu0 %2122
        %v2124 = vsel %vm1532, %v2120, -inf
        %2125 = vmax.xlane.f32.xlu0 %v2124
        %v2126 = vpop.xlane.xlu0 %2125
        %v2127 = vsub.f32 %v2119, %v2123
        %v2128 = vsub.f32 %v2120, %v2126
        %v2129 = vmul.f32 %v2127, 1.442695
        %v2130 = vpow.pop %v2129
        %v2131 = vmul.f32 %v2128, 1.442695
        %v2132 = vpow.pop %v2131
        %v2133 = vsel %vm1532, %v2130, 0.0
        %2134 = vadd.xlane.f32.xlu0 %v2133
        %v2135 = vpop.xlane.xlu0 %2134
        %v2136 = vsel %vm1532, %v2132, 0.0
        %2137 = vadd.xlane.f32.xlu0 %v2136
        %v2138 = vpop.xlane.xlu0 %2137
        %v2139 = vrcp.pop %v2135
        %v2140 = vrcp.pop %v2138
        %v2141 = vmul.f32 %v2130, %v2139
        %v2142 = vmul.f32 %v2132, %v2140
        %v2144 = vsel %vm1532, %v2141, 0
        %v2147 = vsel %vm1532, %v2142, 0
        %2149 = vmatprep.subr.mxu0 0.0
        %2150 = vmatpush1.msra.mxu0 0.0
        %2151 = vmatprep.subr.mxu0 0.0
        %2152 = vmatpush1.msra.mxu0 0.0
        %2153 = vmatprep.subr.mxu0 0.0
        %2154 = vmatpush1.msra.mxu0 0.0
        %2155 = vmatprep.subr.mxu0 0.0
        %2156 = vmatpush1.msra.mxu0 0.0
        %2157 = vmatprep.subr.mxu0 0.0
        %2158 = vmatpush1.msra.mxu0 0.0
        %2159 = vmatprep.subr.mxu0 0.0
        %2160 = vmatpush1.msra.mxu0 0.0
        %2161 = vmatprep.subr.mxu0 0.0
        %2162 = vmatpush1.msra.mxu0 0.0
        %2163 = vmatprep.subr.mxu0 0.0
        %2164 = vmatpush1.msra.mxu0 0.0
        %2165 = vmatprep.subr.mxu0 0.0
        %2166 = vmatpush1.msra.mxu0 0.0
        %2167 = vmatprep.subr.mxu0 0.0
        %2168 = vmatpush1.msra.mxu0 0.0
        %2169 = vmatprep.subr.mxu0 0.0
        %2170 = vmatpush1.msra.mxu0 0.0
        %2171 = vmatprep.subr.mxu0 0.0
        %2172 = vmatpush1.msra.mxu0 0.0
        %2173 = vmatprep.subr.mxu0 0.0
        %2174 = vmatpush1.msra.mxu0 0.0
        %2175 = vmatprep.subr.mxu0 0.0
        %2176 = vmatpush1.msra.mxu0 0.0
        %2177 = vmatprep.subr.mxu0 0.0
        %2178 = vmatpush1.msra.mxu0 %v1558
        %2179 = vmatprep.subr.mxu0 0.0
        %2180 = vmatpush1.msra.mxu0 %v1556
        %2181 = vmatprep.subr.mxu0 0.0
        %2182 = vmatpush2.msra.mxu0 0.0
        %2183 = vmatprep.subr.mxu0 0.0
        %2184 = vmatpush2.msra.mxu0 0.0
        %2185 = vmatprep.subr.mxu0 0.0
        %2186 = vmatpush2.msra.mxu0 0.0
        %2187 = vmatprep.subr.mxu0 0.0
        %2188 = vmatpush2.msra.mxu0 0.0
        %2189 = vmatprep.subr.mxu0 0.0
        %2190 = vmatpush2.msra.mxu0 0.0
        %2191 = vmatprep.subr.mxu0 0.0
        %2192 = vmatpush2.msra.mxu0 0.0
        %2193 = vmatprep.subr.mxu0 0.0
        %2194 = vmatpush2.msra.mxu0 0.0
        %2195 = vmatprep.subr.mxu0 0.0
        %2196 = vmatpush2.msra.mxu0 0.0
        %2197 = vmatprep.subr.mxu0 0.0
        %2198 = vmatpush2.msra.mxu0 0.0
        %2199 = vmatprep.subr.mxu0 0.0
        %2200 = vmatpush2.msra.mxu0 0.0
        %2201 = vmatprep.subr.mxu0 0.0
        %2202 = vmatpush2.msra.mxu0 0.0
        %2203 = vmatprep.subr.mxu0 0.0
        %2204 = vmatpush2.msra.mxu0 0.0
        %2205 = vmatprep.subr.mxu0 0.0
        %2206 = vmatpush2.msra.mxu0 0.0
        %2207 = vmatprep.subr.mxu0 0.0
        %2208 = vmatpush2.msra.mxu0 0.0
        %2209 = vmatprep.subr.mxu0 0.0
        %2210 = vmatpush2.msra.mxu0 0.0
        %2211 = vmatprep.subr.mxu0 0.0
        %2212 = vmatpush2.msra.mxu0 0.0
        %2213 = vmatprep.mubr.f32.mxu0 0.0
        %2214 = vmatmul.mubr.f32.gmra.mxu0 %v2144
        %v2215 = vpop.f32.mrf.mxu0
        %v2216 = vadd.f32 0.0, %v2215
        %v2217 = vpop.f32.mrf.mxu0
        %2218 = vmatprep.mubr.f32.mxu0 0.0
        %2219 = vmatmul.mubr.f32.gmra.mxu0 %v2147
        %v2220 = vpop.f32.mrf.mxu0
        %v2221 = vadd.f32 0.0, %v2220
        %v2222 = vpop.f32.mrf.mxu0
        %2223 = vdwg.mxu0
        %v2224 = vmul.f32 %v2216, %v1278
        %v2225 = vmul.f32 %v2221, %v1278
        %v2226 = vadd.f32 %v2032, %v2224
        %v2227 = vadd.f32 %v2033, %v2225
        %v2228 = vld [vmem:[%s21] sm:$0xff]
        %v2229 = vld [vmem:[%s21 + $0x8] sm:$0xff]
        %v2230 = vld [vmem:[%s21 + $0x10] sm:$0xff]
        %v2231 = vld [vmem:[%s21 + $0x18] sm:$0xff]
        %v2232 = vld [vmem:[%s23] sm:$0x1]
        %v2234 = vlaneseq
        %v2235 = vshrl.u32 %v2234, 7
        %v2236 = vsub.s32 0, %v2235
        %v2237 = vrot.slane %v2232, %v2236
        %v2240 = vsel %vm1198, %v2226, 0
        %v2243 = vsel %vm1198, %v2227, 0
        %2245 = vmatprep.subr.mxu0 0.0
        %2246 = vmatpush1.msra.mxu0 0.0
        %2247 = vmatprep.subr.mxu0 0.0
        %2248 = vmatpush1.msra.mxu0 0.0
        %2249 = vmatprep.subr.mxu0 0.0
        %2250 = vmatpush1.msra.mxu0 0.0
        %2251 = vmatprep.subr.mxu0 0.0
        %2252 = vmatpush1.msra.mxu0 0.0
        %2253 = vmatprep.subr.mxu0 0.0
        %2254 = vmatpush1.msra.mxu0 0.0
        %2255 = vmatprep.subr.mxu0 0.0
        %2256 = vmatpush1.msra.mxu0 0.0
        %2257 = vmatprep.subr.mxu0 0.0
        %2258 = vmatpush1.msra.mxu0 0.0
        %2259 = vmatprep.subr.mxu0 0.0
        %2260 = vmatpush1.msra.mxu0 0.0
        %2261 = vmatprep.subr.mxu0 0.0
        %2262 = vmatpush1.msra.mxu0 0.0
        %2263 = vmatprep.subr.mxu0 0.0
        %2264 = vmatpush1.msra.mxu0 0.0
        %2265 = vmatprep.subr.mxu0 0.0
        %2266 = vmatpush1.msra.mxu0 0.0
        %2267 = vmatprep.subr.mxu0 0.0
        %2268 = vmatpush1.msra.mxu0 0.0
        %2269 = vmatprep.subr.mxu0 0.0
        %2270 = vmatpush1.msra.mxu0 %v2231
        %2271 = vmatprep.subr.mxu0 0.0
        %2272 = vmatpush1.msra.mxu0 %v2230
        %2273 = vmatprep.subr.mxu0 0.0
        %2274 = vmatpush1.msra.mxu0 %v2229
        %2275 = vmatprep.subr.mxu0 0.0
        %2276 = vmatpush1.msra.mxu0 %v2228
        %2277 = vmatprep.subr.mxu0 0.0
        %2278 = vmatpush2.msra.mxu0 0.0
        %2279 = vmatprep.subr.mxu0 0.0
        %2280 = vmatpush2.msra.mxu0 0.0
        %2281 = vmatprep.subr.mxu0 0.0
        %2282 = vmatpush2.msra.mxu0 0.0
        %2283 = vmatprep.subr.mxu0 0.0
        %2284 = vmatpush2.msra.mxu0 0.0
        %2285 = vmatprep.subr.mxu0 0.0
        %2286 = vmatpush2.msra.mxu0 0.0
        %2287 = vmatprep.subr.mxu0 0.0
        %2288 = vmatpush2.msra.mxu0 0.0
        %2289 = vmatprep.subr.mxu0 0.0
        %2290 = vmatpush2.msra.mxu0 0.0
        %2291 = vmatprep.subr.mxu0 0.0
        %2292 = vmatpush2.msra.mxu0 0.0
        %2293 = vmatprep.subr.mxu0 0.0
        %2294 = vmatpush2.msra.mxu0 0.0
        %2295 = vmatprep.subr.mxu0 0.0
        %2296 = vmatpush2.msra.mxu0 0.0
        %2297 = vmatprep.subr.mxu0 0.0
        %2298 = vmatpush2.msra.mxu0 0.0
        %2299 = vmatprep.subr.mxu0 0.0
        %2300 = vmatpush2.msra.mxu0 0.0
        %2301 = vmatprep.subr.mxu0 0.0
        %2302 = vmatpush2.msra.mxu0 0.0
        %2303 = vmatprep.subr.mxu0 0.0
        %2304 = vmatpush2.msra.mxu0 0.0
        %2305 = vmatprep.subr.mxu0 0.0
        %2306 = vmatpush2.msra.mxu0 0.0
        %2307 = vmatprep.subr.mxu0 0.0
        %2308 = vmatpush2.msra.mxu0 0.0
        %2309 = vmatprep.mubr.f32.mxu0 0.0
        %2310 = vmatmul.mubr.f32.gmra.mxu0 %v2240
        %v2311 = vpop.f32.mrf.mxu0
        %v2312 = vadd.f32 %v2237, %v2311
        %v2313 = vpop.f32.mrf.mxu0
        %2314 = vmatprep.mubr.f32.mxu0 0.0
        %2315 = vmatmul.mubr.f32.gmra.mxu0 %v2243
        %v2316 = vpop.f32.mrf.mxu0
        %v2317 = vadd.f32 %v2237, %v2316
        %v2318 = vpop.f32.mrf.mxu0
        %2319 = vdwg.mxu0
        %v2320 = vadd.f32 %v1255, %v2312
        %v2321 = vadd.f32 %v1256, %v2317
        %v2322 = vld [vmem:[%s37] sm:$0x1]
        %v2323 = vld [vmem:[%s39] sm:$0x1]
        %v2324 = vsel %vm1198, %v2320, 0.0
        %2325 = vadd.xlane.f32.xlu0 %v2324
        %v2326 = vpop.xlane.xlu0 %2325
        %v2327 = vsel %vm1198, %v2321, 0.0
        %2328 = vadd.xlane.f32.xlu0 %v2327
        %v2329 = vpop.xlane.xlu0 %2328
        %v2330 = vmul.f32 %v2326, %v1205
        %v2331 = vmul.f32 %v2329, %v1205
        %v2332 = vsub.f32 %v2320, %v2330
        %v2333 = vsub.f32 %v2321, %v2331
        %v2334 = vmul.f32 %v2332, %v2332
        %v2335 = vmul.f32 %v2333, %v2333
        %v2336 = vsel %vm1198, %v2334, 0.0
        %2337 = vadd.xlane.f32.xlu0 %v2336
        %v2338 = vpop.xlane.xlu0 %2337
        %v2339 = vsel %vm1198, %v2335, 0.0
        %2340 = vadd.xlane.f32.xlu0 %v2339
        %v2341 = vpop.xlane.xlu0 %2340
        %v2342 = vmul.f32 %v2338, %v1218
        %v2343 = vmul.f32 %v2341, %v1218
        %v2344 = vrsqrt.pop %v2342
        %v2345 = vmul.f32 %v2342, %v2344
        %vm2346 = vcmp.eq.f32.partialorder %v2342, inf
        %v2347 = vsel %vm2346, %v2342, %v2345
        %vm2348 = vcmp.eq.f32.partialorder %v2342, 0.0
        %v2349 = vand.u32 %v2342, 2147483648
        %v2350 = vsel %vm2348, %v2349, %v2347
        %v2351 = vrsqrt.pop %v2343
        %v2352 = vmul.f32 %v2343, %v2351
        %vm2353 = vcmp.eq.f32.partialorder %v2343, inf
        %v2354 = vsel %vm2353, %v2343, %v2352
        %vm2355 = vcmp.eq.f32.partialorder %v2343, 0.0
        %v2356 = vand.u32 %v2343, 2147483648
        %v2357 = vsel %vm2355, %v2356, %v2354
        %v2359 = vlaneseq
        %v2360 = vshrl.u32 %v2359, 7
        %v2361 = vsub.s32 0, %v2360
        %v2362 = vrot.slane %v2322, %v2361
        %v2364 = vmul.f32 %v2362, %v2332
        %v2365 = vmul.f32 %v2362, %v2333
        %v2366 = vadd.f32 %v2350, 1e-06
        %v2367 = vadd.f32 %v2357, 1e-06
        %v2368 = vrcp.pop %v2366
        %v2369 = vrcp.pop %v2367
        %v2370 = vmul.f32 %v2364, %v2368
        %v2371 = vmul.f32 %v2365, %v2369
        %v2373 = vlaneseq
        %v2374 = vshrl.u32 %v2373, 7
        %v2375 = vsub.s32 0, %v2374
        %v2376 = vrot.slane %v2323, %v2375
        %v2378 = vadd.f32 %v2370, %v2376
        %v2379 = vadd.f32 %v2371, %v2376
        %v2380 = vld [vmem:[%s25] sm:$0xff]
        %v2381 = vld [vmem:[%s25 + $0x8] sm:$0xff]
        %v2382 = vld [vmem:[%s25 + $0x10] sm:$0xff]
        %v2383 = vld [vmem:[%s25 + $0x18] sm:$0xff]
        %v2384 = vld [vmem:[%s27] sm:$0x1]
        %v2386 = vlaneseq
        %v2387 = vshrl.u32 %v2386, 7
        %v2388 = vsub.s32 0, %v2387
        %v2389 = vrot.slane %v2384, %v2388
        %v2392 = vsel %vm1198, %v2378, 0
        %v2395 = vsel %vm1198, %v2379, 0
        %2397 = vmatprep.subr.mxu0 0.0
        %2398 = vmatpush1.msra.mxu0 0.0
        %2399 = vmatprep.subr.mxu0 0.0
        %2400 = vmatpush1.msra.mxu0 0.0
        %2401 = vmatprep.subr.mxu0 0.0
        %2402 = vmatpush1.msra.mxu0 0.0
        %2403 = vmatprep.subr.mxu0 0.0
        %2404 = vmatpush1.msra.mxu0 0.0
        %2405 = vmatprep.subr.mxu0 0.0
        %2406 = vmatpush1.msra.mxu0 0.0
        %2407 = vmatprep.subr.mxu0 0.0
        %2408 = vmatpush1.msra.mxu0 0.0
        %2409 = vmatprep.subr.mxu0 0.0
        %2410 = vmatpush1.msra.mxu0 0.0
        %2411 = vmatprep.subr.mxu0 0.0
        %2412 = vmatpush1.msra.mxu0 0.0
        %2413 = vmatprep.subr.mxu0 0.0
        %2414 = vmatpush1.msra.mxu0 0.0
        %2415 = vmatprep.subr.mxu0 0.0
        %2416 = vmatpush1.msra.mxu0 0.0
        %2417 = vmatprep.subr.mxu0 0.0
        %2418 = vmatpush1.msra.mxu0 0.0
        %2419 = vmatprep.subr.mxu0 0.0
        %2420 = vmatpush1.msra.mxu0 0.0
        %2421 = vmatprep.subr.mxu0 0.0
        %2422 = vmatpush1.msra.mxu0 %v2383
        %2423 = vmatprep.subr.mxu0 0.0
        %2424 = vmatpush1.msra.mxu0 %v2382
        %2425 = vmatprep.subr.mxu0 0.0
        %2426 = vmatpush1.msra.mxu0 %v2381
        %2427 = vmatprep.subr.mxu0 0.0
        %2428 = vmatpush1.msra.mxu0 %v2380
        %2429 = vmatprep.subr.mxu0 0.0
        %2430 = vmatpush2.msra.mxu0 0.0
        %2431 = vmatprep.subr.mxu0 0.0
        %2432 = vmatpush2.msra.mxu0 0.0
        %2433 = vmatprep.subr.mxu0 0.0
        %2434 = vmatpush2.msra.mxu0 0.0
        %2435 = vmatprep.subr.mxu0 0.0
        %2436 = vmatpush2.msra.mxu0 0.0
        %2437 = vmatprep.subr.mxu0 0.0
        %2438 = vmatpush2.msra.mxu0 0.0
        %2439 = vmatprep.subr.mxu0 0.0
        %2440 = vmatpush2.msra.mxu0 0.0
        %2441 = vmatprep.subr.mxu0 0.0
        %2442 = vmatpush2.msra.mxu0 0.0
        %2443 = vmatprep.subr.mxu0 0.0
        %2444 = vmatpush2.msra.mxu0 0.0
        %2445 = vmatprep.subr.mxu0 0.0
        %2446 = vmatpush2.msra.mxu0 0.0
        %2447 = vmatprep.subr.mxu0 0.0
        %2448 = vmatpush2.msra.mxu0 0.0
        %2449 = vmatprep.subr.mxu0 0.0
        %2450 = vmatpush2.msra.mxu0 0.0
        %2451 = vmatprep.subr.mxu0 0.0
        %2452 = vmatpush2.msra.mxu0 0.0
        %2453 = vmatprep.subr.mxu0 0.0
        %2454 = vmatpush2.msra.mxu0 0.0
        %2455 = vmatprep.subr.mxu0 0.0
        %2456 = vmatpush2.msra.mxu0 0.0
        %2457 = vmatprep.subr.mxu0 0.0
        %2458 = vmatpush2.msra.mxu0 0.0
        %2459 = vmatprep.subr.mxu0 0.0
        %2460 = vmatpush2.msra.mxu0 0.0
        %2461 = vmatprep.mubr.f32.mxu0 0.0
        %2462 = vmatmul.mubr.f32.gmra.mxu0 %v2392
        %v2463 = vpop.f32.mrf.mxu0
        %v2464 = vadd.f32 %v2389, %v2463
        %v2465 = vpop.f32.mrf.mxu0
        %2466 = vmatprep.mubr.f32.mxu0 0.0
        %2467 = vmatmul.mubr.f32.gmra.mxu0 %v2395
        %v2468 = vpop.f32.mrf.mxu0
        %v2469 = vadd.f32 %v2389, %v2468
        %v2470 = vpop.f32.mrf.mxu0
        %2471 = vdwg.mxu0
        %v2472 = vmax.f32 %v2464, 0.0
        %v2473 = vmax.f32 %v2469, 0.0
        %v2474 = vld [vmem:[%s29] sm:$0xff]
        %v2475 = vld [vmem:[%s29 + $0x8] sm:$0xff]
        %v2476 = vld [vmem:[%s29 + $0x10] sm:$0xff]
        %v2477 = vld [vmem:[%s29 + $0x18] sm:$0xff]
        %v2478 = vld [vmem:[%s29 + $0x20] sm:$0xff]
        %v2479 = vld [vmem:[%s29 + $0x28] sm:$0xff]
        %v2480 = vld [vmem:[%s29 + $0x30] sm:$0xff]
        %v2481 = vld [vmem:[%s29 + $0x38] sm:$0xff]
        %v2483 = vsel %vm1114, %v2472, 0
        %v2486 = vsel %vm1114, %v2473, 0
        %2488 = vmatprep.subr.mxu0 0.0
        %2489 = vmatpush1.msra.mxu0 0.0
        %2490 = vmatprep.subr.mxu0 0.0
        %2491 = vmatpush1.msra.mxu0 0.0
        %2492 = vmatprep.subr.mxu0 0.0
        %2493 = vmatpush1.msra.mxu0 0.0
        %2494 = vmatprep.subr.mxu0 0.0
        %2495 = vmatpush1.msra.mxu0 0.0
        %2496 = vmatprep.subr.mxu0 0.0
        %2497 = vmatpush1.msra.mxu0 0.0
        %2498 = vmatprep.subr.mxu0 0.0
        %2499 = vmatpush1.msra.mxu0 0.0
        %2500 = vmatprep.subr.mxu0 0.0
        %2501 = vmatpush1.msra.mxu0 0.0
        %2502 = vmatprep.subr.mxu0 0.0
        %2503 = vmatpush1.msra.mxu0 0.0
        %2504 = vmatprep.subr.mxu0 0.0
        %2505 = vmatpush1.msra.mxu0 %v2481
        %2506 = vmatprep.subr.mxu0 0.0
        %2507 = vmatpush1.msra.mxu0 %v2480
        %2508 = vmatprep.subr.mxu0 0.0
        %2509 = vmatpush1.msra.mxu0 %v2479
        %2510 = vmatprep.subr.mxu0 0.0
        %2511 = vmatpush1.msra.mxu0 %v2478
        %2512 = vmatprep.subr.mxu0 0.0
        %2513 = vmatpush1.msra.mxu0 %v2477
        %2514 = vmatprep.subr.mxu0 0.0
        %2515 = vmatpush1.msra.mxu0 %v2476
        %2516 = vmatprep.subr.mxu0 0.0
        %2517 = vmatpush1.msra.mxu0 %v2475
        %2518 = vmatprep.subr.mxu0 0.0
        %2519 = vmatpush1.msra.mxu0 %v2474
        %2520 = vmatprep.subr.mxu0 0.0
        %2521 = vmatpush2.msra.mxu0 0.0
        %2522 = vmatprep.subr.mxu0 0.0
        %2523 = vmatpush2.msra.mxu0 0.0
        %2524 = vmatprep.subr.mxu0 0.0
        %2525 = vmatpush2.msra.mxu0 0.0
        %2526 = vmatprep.subr.mxu0 0.0
        %2527 = vmatpush2.msra.mxu0 0.0
        %2528 = vmatprep.subr.mxu0 0.0
        %2529 = vmatpush2.msra.mxu0 0.0
        %2530 = vmatprep.subr.mxu0 0.0
        %2531 = vmatpush2.msra.mxu0 0.0
        %2532 = vmatprep.subr.mxu0 0.0
        %2533 = vmatpush2.msra.mxu0 0.0
        %2534 = vmatprep.subr.mxu0 0.0
        %2535 = vmatpush2.msra.mxu0 0.0
        %2536 = vmatprep.subr.mxu0 0.0
        %2537 = vmatpush2.msra.mxu0 0.0
        %2538 = vmatprep.subr.mxu0 0.0
        %2539 = vmatpush2.msra.mxu0 0.0
        %2540 = vmatprep.subr.mxu0 0.0
        %2541 = vmatpush2.msra.mxu0 0.0
        %2542 = vmatprep.subr.mxu0 0.0
        %2543 = vmatpush2.msra.mxu0 0.0
        %2544 = vmatprep.subr.mxu0 0.0
        %2545 = vmatpush2.msra.mxu0 0.0
        %2546 = vmatprep.subr.mxu0 0.0
        %2547 = vmatpush2.msra.mxu0 0.0
        %2548 = vmatprep.subr.mxu0 0.0
        %2549 = vmatpush2.msra.mxu0 0.0
        %2550 = vmatprep.subr.mxu0 0.0
        %2551 = vmatpush2.msra.mxu0 0.0
        %2552 = vmatprep.mubr.f32.mxu0 0.0
        %2553 = vmatmul.mubr.f32.gmra.mxu0 %v2483
        %v2554 = vpop.f32.mrf.mxu0
        %v2555 = vadd.f32 0.0, %v2554
        %v2556 = vpop.f32.mrf.mxu0
        %2557 = vmatprep.mubr.f32.mxu0 0.0
        %2558 = vmatmul.mubr.f32.gmra.mxu0 %v2486
        %v2559 = vpop.f32.mrf.mxu0
        %v2560 = vadd.f32 0.0, %v2559
        %v2561 = vpop.f32.mrf.mxu0
        %2562 = vdwg.mxu0
        %v2563 = vadd.f32 %v2320, %v2555
        %v2564 = vadd.f32 %v2321, %v2560
        %v2565 = vld [vmem:[%s31] sm:$0x1]
        %v2567 = vlaneseq
        %v2568 = vshrl.u32 %v2567, 7
        %v2569 = vsub.s32 0, %v2568
        %v2570 = vrot.slane %v2565, %v2569
        %v2572 = vadd.f32 %v2563, %v2570
        %v2573 = vadd.f32 %v2564, %v2570
        %v2574 = vld [vmem:[%s41] sm:$0x1]
        %v2575 = vld [vmem:[%s43] sm:$0x1]
        %v2576 = vsel %vm1198, %v2572, 0.0
        %2577 = vadd.xlane.f32.xlu0 %v2576
        %v2578 = vpop.xlane.xlu0 %2577
        %v2579 = vsel %vm1198, %v2573, 0.0
        %2580 = vadd.xlane.f32.xlu0 %v2579
        %v2581 = vpop.xlane.xlu0 %2580
        %v2582 = vmul.f32 %v2578, %v1205
        %v2583 = vmul.f32 %v2581, %v1205
        %v2584 = vsub.f32 %v2572, %v2582
        %v2585 = vsub.f32 %v2573, %v2583
        %v2586 = vmul.f32 %v2584, %v2584
        %v2587 = vmul.f32 %v2585, %v2585
        %v2588 = vsel %vm1198, %v2586, 0.0
        %2589 = vadd.xlane.f32.xlu0 %v2588
        %v2590 = vpop.xlane.xlu0 %2589
        %v2591 = vsel %vm1198, %v2587, 0.0
        %2592 = vadd.xlane.f32.xlu0 %v2591
        %v2593 = vpop.xlane.xlu0 %2592
        %v2594 = vmul.f32 %v2590, %v1218
        %v2595 = vmul.f32 %v2593, %v1218
        %v2596 = vrsqrt.pop %v2594
        %v2597 = vmul.f32 %v2594, %v2596
        %vm2598 = vcmp.eq.f32.partialorder %v2594, inf
        %v2599 = vsel %vm2598, %v2594, %v2597
        %vm2600 = vcmp.eq.f32.partialorder %v2594, 0.0
        %v2601 = vand.u32 %v2594, 2147483648
        %v2602 = vsel %vm2600, %v2601, %v2599
        %v2603 = vrsqrt.pop %v2595
        %v2604 = vmul.f32 %v2595, %v2603
        %vm2605 = vcmp.eq.f32.partialorder %v2595, inf
        %v2606 = vsel %vm2605, %v2595, %v2604
        %vm2607 = vcmp.eq.f32.partialorder %v2595, 0.0
        %v2608 = vand.u32 %v2595, 2147483648
        %v2609 = vsel %vm2607, %v2608, %v2606
        %v2611 = vlaneseq
        %v2612 = vshrl.u32 %v2611, 7
        %v2613 = vsub.s32 0, %v2612
        %v2614 = vrot.slane %v2574, %v2613
        %v2616 = vmul.f32 %v2614, %v2584
        %v2617 = vmul.f32 %v2614, %v2585
        %v2618 = vadd.f32 %v2602, 1e-06
        %v2619 = vadd.f32 %v2609, 1e-06
        %v2620 = vrcp.pop %v2618
        %v2621 = vrcp.pop %v2619
        %v2622 = vmul.f32 %v2616, %v2620
        %v2623 = vmul.f32 %v2617, %v2621
        %v2625 = vlaneseq
        %v2626 = vshrl.u32 %v2625, 7
        %v2627 = vsub.s32 0, %v2626
        %v2628 = vrot.slane %v2575, %v2627
        %v2630 = vadd.f32 %v2622, %v2628
        %v2631 = vadd.f32 %v2623, %v2628
        %s2632 = scalar_lea.vmem %s33, 1
        %v2633 = vld [vmem:[%s2632] sm:$0x1]
        %s2634 = scalar_lea.vmem %s35, 1
        %v2635 = vld [vmem:[%s2634] sm:$0x1]
        %v2636 = vsel %vm1198, %v2630, 0.0
        %2637 = vadd.xlane.f32.xlu0 %v2636
        %v2638 = vpop.xlane.xlu0 %2637
        %v2639 = vsel %vm1198, %v2631, 0.0
        %2640 = vadd.xlane.f32.xlu0 %v2639
        %v2641 = vpop.xlane.xlu0 %2640
        %v2642 = vmul.f32 %v2638, %v1205
        %v2643 = vmul.f32 %v2641, %v1205
        %v2644 = vsub.f32 %v2630, %v2642
        %v2645 = vsub.f32 %v2631, %v2643
        %v2646 = vmul.f32 %v2644, %v2644
        %v2647 = vmul.f32 %v2645, %v2645
        %v2648 = vsel %vm1198, %v2646, 0.0
        %2649 = vadd.xlane.f32.xlu0 %v2648
        %v2650 = vpop.xlane.xlu0 %2649
        %v2651 = vsel %vm1198, %v2647, 0.0
        %2652 = vadd.xlane.f32.xlu0 %v2651
        %v2653 = vpop.xlane.xlu0 %2652
        %v2654 = vmul.f32 %v2650, %v1218
        %v2655 = vmul.f32 %v2653, %v1218
        %v2656 = vrsqrt.pop %v2654
        %v2657 = vmul.f32 %v2654, %v2656
        %vm2658 = vcmp.eq.f32.partialorder %v2654, inf
        %v2659 = vsel %vm2658, %v2654, %v2657
        %vm2660 = vcmp.eq.f32.partialorder %v2654, 0.0
        %v2661 = vand.u32 %v2654, 2147483648
        %v2662 = vsel %vm2660, %v2661, %v2659
        %v2663 = vrsqrt.pop %v2655
        %v2664 = vmul.f32 %v2655, %v2663
        %vm2665 = vcmp.eq.f32.partialorder %v2655, inf
        %v2666 = vsel %vm2665, %v2655, %v2664
        %vm2667 = vcmp.eq.f32.partialorder %v2655, 0.0
        %v2668 = vand.u32 %v2655, 2147483648
        %v2669 = vsel %vm2667, %v2668, %v2666
        %v2671 = vlaneseq
        %v2672 = vshrl.u32 %v2671, 7
        %v2673 = vsub.s32 0, %v2672
        %v2674 = vrot.slane %v2633, %v2673
        %v2676 = vmul.f32 %v2674, %v2644
        %v2677 = vmul.f32 %v2674, %v2645
        %v2678 = vadd.f32 %v2662, 1e-06
        %v2679 = vadd.f32 %v2669, 1e-06
        %v2680 = vrcp.pop %v2678
        %v2681 = vrcp.pop %v2679
        %v2682 = vmul.f32 %v2676, %v2680
        %v2683 = vmul.f32 %v2677, %v2681
        %v2685 = vlaneseq
        %v2686 = vshrl.u32 %v2685, 7
        %v2687 = vsub.s32 0, %v2686
        %v2688 = vrot.slane %v2635, %v2687
        %v2690 = vadd.f32 %v2682, %v2688
        %v2691 = vadd.f32 %v2683, %v2688
        %s2692 = scalar_lea.vmem %s17, 32
        %v2693 = vld [vmem:[%s2692] sm:$0xff]
        %v2694 = vld [vmem:[%s2692 + $0x8] sm:$0xff]
        %v2695 = vld [vmem:[%s2692 + $0x10] sm:$0xff]
        %v2696 = vld [vmem:[%s2692 + $0x18] sm:$0xff]
        %s2697 = scalar_lea.vmem %s19, 1
        %v2698 = vld [vmem:[%s2697] sm:$0x1]
        %v2700 = vlaneseq
        %v2701 = vshrl.u32 %v2700, 7
        %v2702 = vsub.s32 0, %v2701
        %v2703 = vrot.slane %v2698, %v2702
        %v2706 = vsel %vm1198, %v2690, 0
        %v2709 = vsel %vm1198, %v2691, 0
        %2711 = vmatprep.subr.mxu0 0.0
        %2712 = vmatpush1.msra.mxu0 0.0
        %2713 = vmatprep.subr.mxu0 0.0
        %2714 = vmatpush1.msra.mxu0 0.0
        %2715 = vmatprep.subr.mxu0 0.0
        %2716 = vmatpush1.msra.mxu0 0.0
        %2717 = vmatprep.subr.mxu0 0.0
        %2718 = vmatpush1.msra.mxu0 0.0
        %2719 = vmatprep.subr.mxu0 0.0
        %2720 = vmatpush1.msra.mxu0 0.0
        %2721 = vmatprep.subr.mxu0 0.0
        %2722 = vmatpush1.msra.mxu0 0.0
        %2723 = vmatprep.subr.mxu0 0.0
        %2724 = vmatpush1.msra.mxu0 0.0
        %2725 = vmatprep.subr.mxu0 0.0
        %2726 = vmatpush1.msra.mxu0 0.0
        %2727 = vmatprep.subr.mxu0 0.0
        %2728 = vmatpush1.msra.mxu0 0.0
        %2729 = vmatprep.subr.mxu0 0.0
        %2730 = vmatpush1.msra.mxu0 0.0
        %2731 = vmatprep.subr.mxu0 0.0
        %2732 = vmatpush1.msra.mxu0 0.0
        %2733 = vmatprep.subr.mxu0 0.0
        %2734 = vmatpush1.msra.mxu0 0.0
        %2735 = vmatprep.subr.mxu0 0.0
        %2736 = vmatpush1.msra.mxu0 %v2696
        %2737 = vmatprep.subr.mxu0 0.0
        %2738 = vmatpush1.msra.mxu0 %v2695
        %2739 = vmatprep.subr.mxu0 0.0
        %2740 = vmatpush1.msra.mxu0 %v2694
        %2741 = vmatprep.subr.mxu0 0.0
        %2742 = vmatpush1.msra.mxu0 %v2693
        %2743 = vmatprep.subr.mxu0 0.0
        %2744 = vmatpush2.msra.mxu0 0.0
        %2745 = vmatprep.subr.mxu0 0.0
        %2746 = vmatpush2.msra.mxu0 0.0
        %2747 = vmatprep.subr.mxu0 0.0
        %2748 = vmatpush2.msra.mxu0 0.0
        %2749 = vmatprep.subr.mxu0 0.0
        %2750 = vmatpush2.msra.mxu0 0.0
        %2751 = vmatprep.subr.mxu0 0.0
        %2752 = vmatpush2.msra.mxu0 0.0
        %2753 = vmatprep.subr.mxu0 0.0
        %2754 = vmatpush2.msra.mxu0 0.0
        %2755 = vmatprep.subr.mxu0 0.0
        %2756 = vmatpush2.msra.mxu0 0.0
        %2757 = vmatprep.subr.mxu0 0.0
        %2758 = vmatpush2.msra.mxu0 0.0
        %2759 = vmatprep.subr.mxu0 0.0
        %2760 = vmatpush2.msra.mxu0 0.0
        %2761 = vmatprep.subr.mxu0 0.0
        %2762 = vmatpush2.msra.mxu0 0.0
        %2763 = vmatprep.subr.mxu0 0.0
        %2764 = vmatpush2.msra.mxu0 0.0
        %2765 = vmatprep.subr.mxu0 0.0
        %2766 = vmatpush2.msra.mxu0 0.0
        %2767 = vmatprep.subr.mxu0 0.0
        %2768 = vmatpush2.msra.mxu0 0.0
        %2769 = vmatprep.subr.mxu0 0.0
        %2770 = vmatpush2.msra.mxu0 0.0
        %2771 = vmatprep.subr.mxu0 0.0
        %2772 = vmatpush2.msra.mxu0 0.0
        %2773 = vmatprep.subr.mxu0 0.0
        %2774 = vmatpush2.msra.mxu0 0.0
        %2775 = vmatprep.mubr.f32.mxu0 0.0
        %2776 = vmatmul.mubr.f32.gmra.mxu0 %v2706
        %v2777 = vpop.f32.mrf.mxu0
        %v2778 = vadd.f32 %v2703, %v2777
        %v2779 = vpop.f32.mrf.mxu0
        %2780 = vmatprep.mubr.f32.mxu0 0.0
        %2781 = vmatmul.mubr.f32.gmra.mxu0 %v2709
        %v2782 = vpop.f32.mrf.mxu0
        %v2783 = vadd.f32 %v2703, %v2782
        %v2784 = vpop.f32.mrf.mxu0
        %2785 = vdwg.mxu0
        %v2786 = vmul.f32 %v2778, %v1263
        %v2787 = vmul.f32 %v2783, %v1263
        %2790 = vrot.lane.b32.xlu0 %v2778, 96
        %v2791 = vpop.permute.xlu0 %2790
        %2792 = vrot.lane.b32.xlu0 %v2783, 96
        %v2793 = vpop.permute.xlu0 %2792
        %v2795 = vsel %vm1198, %v2786, 0
        %v2798 = vsel %vm1198, %v2787, 0
        %v2800 = vsel %vm1198, %v2791, 0
        %v2802 = vsel %vm1198, %v2793, 0
        %2804 = vmatprep.subr.mxu0 0.0
        %2805 = vmatpush1.xpose.msra.mxu0 0.0
        %2806 = vmatprep.subr.mxu0 0.0
        %2807 = vmatpush1.xpose.msra.mxu0 0.0
        %2808 = vmatprep.subr.mxu0 0.0
        %2809 = vmatpush1.xpose.msra.mxu0 0.0
        %2810 = vmatprep.subr.mxu0 0.0
        %2811 = vmatpush1.xpose.msra.mxu0 0.0
        %2812 = vmatprep.subr.mxu0 0.0
        %2813 = vmatpush1.xpose.msra.mxu0 0.0
        %2814 = vmatprep.subr.mxu0 0.0
        %2815 = vmatpush1.xpose.msra.mxu0 0.0
        %2816 = vmatprep.subr.mxu0 0.0
        %2817 = vmatpush1.xpose.msra.mxu0 0.0
        %2818 = vmatprep.subr.mxu0 0.0
        %2819 = vmatpush1.xpose.msra.mxu0 0.0
        %2820 = vmatprep.subr.mxu0 0.0
        %2821 = vmatpush1.xpose.msra.mxu0 0.0
        %2822 = vmatprep.subr.mxu0 0.0
        %2823 = vmatpush1.xpose.msra.mxu0 0.0
        %2824 = vmatprep.subr.mxu0 0.0
        %2825 = vmatpush1.xpose.msra.mxu0 0.0
        %2826 = vmatprep.subr.mxu0 0.0
        %2827 = vmatpush1.xpose.msra.mxu0 0.0
        %2828 = vmatprep.subr.mxu0 0.0
        %2829 = vmatpush1.xpose.msra.mxu0 0.0
        %2830 = vmatprep.subr.mxu0 0.0
        %2831 = vmatpush1.xpose.msra.mxu0 0.0
        %2832 = vmatprep.subr.mxu0 0.0
        %2833 = vmatpush1.xpose.msra.mxu0 %v2802
        %2834 = vmatprep.subr.mxu0 0.0
        %2835 = vmatpush1.xpose.msra.mxu0 %v2800
        %2836 = vmatprep.subr.mxu0 0.0
        %2837 = vmatpush2.xpose.msra.mxu0 0.0
        %2838 = vmatprep.subr.mxu0 0.0
        %2839 = vmatpush2.xpose.msra.mxu0 0.0
        %2840 = vmatprep.subr.mxu0 0.0
        %2841 = vmatpush2.xpose.msra.mxu0 0.0
        %2842 = vmatprep.subr.mxu0 0.0
        %2843 = vmatpush2.xpose.msra.mxu0 0.0
        %2844 = vmatprep.subr.mxu0 0.0
        %2845 = vmatpush2.xpose.msra.mxu0 0.0
        %2846 = vmatprep.subr.mxu0 0.0
        %2847 = vmatpush2.xpose.msra.mxu0 0.0
        %2848 = vmatprep.subr.mxu0 0.0
        %2849 = vmatpush2.xpose.msra.mxu0 0.0
        %2850 = vmatprep.subr.mxu0 0.0
        %2851 = vmatpush2.xpose.msra.mxu0 0.0
        %2852 = vmatprep.subr.mxu0 0.0
        %2853 = vmatpush2.xpose.msra.mxu0 0.0
        %2854 = vmatprep.subr.mxu0 0.0
        %2855 = vmatpush2.xpose.msra.mxu0 0.0
        %2856 = vmatprep.subr.mxu0 0.0
        %2857 = vmatpush2.xpose.msra.mxu0 0.0
        %2858 = vmatprep.subr.mxu0 0.0
        %2859 = vmatpush2.xpose.msra.mxu0 0.0
        %2860 = vmatprep.subr.mxu0 0.0
        %2861 = vmatpush2.xpose.msra.mxu0 0.0
        %2862 = vmatprep.subr.mxu0 0.0
        %2863 = vmatpush2.xpose.msra.mxu0 0.0
        %2864 = vmatprep.subr.mxu0 0.0
        %2865 = vmatpush2.xpose.msra.mxu0 0.0
        %2866 = vmatprep.subr.mxu0 0.0
        %2867 = vmatpush2.xpose.msra.mxu0 0.0
        %2868 = vmatprep.mubr.f32.mxu0 0.0
        %2869 = vmatmul.mubr.f32.gmra.mxu0 %v2795
        %v2870 = vpop.f32.mrf.mxu0
        %v2871 = vadd.f32 0.0, %v2870
        %v2872 = vpop.f32.mrf.mxu0
        %2873 = vmatprep.mubr.f32.mxu0 0.0
        %2874 = vmatmul.mubr.f32.gmra.mxu0 %v2798
        %v2875 = vpop.f32.mrf.mxu0
        %v2876 = vadd.f32 0.0, %v2875
        %v2877 = vpop.f32.mrf.mxu0
        %2878 = vdwg.mxu0
        %v2879 = vmul.f32 %v2871, 0.35355338
        %v2880 = vmul.f32 %v2876, 0.35355338
        %v2881 = vsel %vm1529, %v2879, -1e+09
        %v2882 = vsel %vm1529, %v2880, -1e+09
        %v2883 = vsel %vm1532, %v2881, -inf
        %2884 = vmax.xlane.f32.xlu0 %v2883
        %v2885 = vpop.xlane.xlu0 %2884
        %v2886 = vsel %vm1532, %v2882, -inf
        %2887 = vmax.xlane.f32.xlu0 %v2886
        %v2888 = vpop.xlane.xlu0 %2887
        %v2889 = vsub.f32 %v2881, %v2885
        %v2890 = vsub.f32 %v2882, %v2888
        %v2891 = vmul.f32 %v2889, 1.442695
        %v2892 = vpow.pop %v2891
        %v2893 = vmul.f32 %v2890, 1.442695
        %v2894 = vpow.pop %v2893
        %v2895 = vsel %vm1532, %v2892, 0.0
        %2896 = vadd.xlane.f32.xlu0 %v2895
        %v2897 = vpop.xlane.xlu0 %2896
        %v2898 = vsel %vm1532, %v2894, 0.0
        %2899 = vadd.xlane.f32.xlu0 %v2898
        %v2900 = vpop.xlane.xlu0 %2899
        %v2901 = vrcp.pop %v2897
        %v2902 = vrcp.pop %v2900
        %v2903 = vmul.f32 %v2892, %v2901
        %v2904 = vmul.f32 %v2894, %v2902
        %2905 = vrot.lane.b32.xlu0 %v2778, 64
        %v2906 = vpop.permute.xlu0 %2905
        %2907 = vrot.lane.b32.xlu0 %v2783, 64
        %v2908 = vpop.permute.xlu0 %2907
        %v2912 = vsel %vm1532, %v2903, 0
        %v2915 = vsel %vm1532, %v2904, 0
        %2917 = vmatprep.subr.mxu0 0.0
        %2918 = vmatpush1.msra.mxu0 0.0
        %2919 = vmatprep.subr.mxu0 0.0
        %2920 = vmatpush1.msra.mxu0 0.0
        %2921 = vmatprep.subr.mxu0 0.0
        %2922 = vmatpush1.msra.mxu0 0.0
        %2923 = vmatprep.subr.mxu0 0.0
        %2924 = vmatpush1.msra.mxu0 0.0
        %2925 = vmatprep.subr.mxu0 0.0
        %2926 = vmatpush1.msra.mxu0 0.0
        %2927 = vmatprep.subr.mxu0 0.0
        %2928 = vmatpush1.msra.mxu0 0.0
        %2929 = vmatprep.subr.mxu0 0.0
        %2930 = vmatpush1.msra.mxu0 0.0
        %2931 = vmatprep.subr.mxu0 0.0
        %2932 = vmatpush1.msra.mxu0 0.0
        %2933 = vmatprep.subr.mxu0 0.0
        %2934 = vmatpush1.msra.mxu0 0.0
        %2935 = vmatprep.subr.mxu0 0.0
        %2936 = vmatpush1.msra.mxu0 0.0
        %2937 = vmatprep.subr.mxu0 0.0
        %2938 = vmatpush1.msra.mxu0 0.0
        %2939 = vmatprep.subr.mxu0 0.0
        %2940 = vmatpush1.msra.mxu0 0.0
        %2941 = vmatprep.subr.mxu0 0.0
        %2942 = vmatpush1.msra.mxu0 0.0
        %2943 = vmatprep.subr.mxu0 0.0
        %2944 = vmatpush1.msra.mxu0 0.0
        %2945 = vmatprep.subr.mxu0 0.0
        %2946 = vmatpush1.msra.mxu0 %v2908
        %2947 = vmatprep.subr.mxu0 0.0
        %2948 = vmatpush1.msra.mxu0 %v2906
        %2949 = vmatprep.subr.mxu0 0.0
        %2950 = vmatpush2.msra.mxu0 0.0
        %2951 = vmatprep.subr.mxu0 0.0
        %2952 = vmatpush2.msra.mxu0 0.0
        %2953 = vmatprep.subr.mxu0 0.0
        %2954 = vmatpush2.msra.mxu0 0.0
        %2955 = vmatprep.subr.mxu0 0.0
        %2956 = vmatpush2.msra.mxu0 0.0
        %2957 = vmatprep.subr.mxu0 0.0
        %2958 = vmatpush2.msra.mxu0 0.0
        %2959 = vmatprep.subr.mxu0 0.0
        %2960 = vmatpush2.msra.mxu0 0.0
        %2961 = vmatprep.subr.mxu0 0.0
        %2962 = vmatpush2.msra.mxu0 0.0
        %2963 = vmatprep.subr.mxu0 0.0
        %2964 = vmatpush2.msra.mxu0 0.0
        %2965 = vmatprep.subr.mxu0 0.0
        %2966 = vmatpush2.msra.mxu0 0.0
        %2967 = vmatprep.subr.mxu0 0.0
        %2968 = vmatpush2.msra.mxu0 0.0
        %2969 = vmatprep.subr.mxu0 0.0
        %2970 = vmatpush2.msra.mxu0 0.0
        %2971 = vmatprep.subr.mxu0 0.0
        %2972 = vmatpush2.msra.mxu0 0.0
        %2973 = vmatprep.subr.mxu0 0.0
        %2974 = vmatpush2.msra.mxu0 0.0
        %2975 = vmatprep.subr.mxu0 0.0
        %2976 = vmatpush2.msra.mxu0 0.0
        %2977 = vmatprep.subr.mxu0 0.0
        %2978 = vmatpush2.msra.mxu0 0.0
        %2979 = vmatprep.subr.mxu0 0.0
        %2980 = vmatpush2.msra.mxu0 0.0
        %2981 = vmatprep.mubr.f32.mxu0 0.0
        %2982 = vmatmul.mubr.f32.gmra.mxu0 %v2912
        %v2983 = vpop.f32.mrf.mxu0
        %v2984 = vadd.f32 0.0, %v2983
        %v2985 = vpop.f32.mrf.mxu0
        %2986 = vmatprep.mubr.f32.mxu0 0.0
        %2987 = vmatmul.mubr.f32.gmra.mxu0 %v2915
        %v2988 = vpop.f32.mrf.mxu0
        %v2989 = vadd.f32 0.0, %v2988
        %v2990 = vpop.f32.mrf.mxu0
        %2991 = vdwg.mxu0
        %v2992 = vmul.f32 %v2984, %v1263
        %v2993 = vmul.f32 %v2989, %v1263
        %v2994 = vadd.f32 %v2992, 0.0
        %v2995 = vadd.f32 %v2993, 0.0
        %v2996 = vmul.f32 %v2778, %v1268
        %v2997 = vmul.f32 %v2783, %v1268
        %v2999 = vsel %vm1198, %v2996, 0
        %v3002 = vsel %vm1198, %v2997, 0
        %3004 = vmatprep.subr.mxu0 0.0
        %3005 = vmatpush1.xpose.msra.mxu0 0.0
        %3006 = vmatprep.subr.mxu0 0.0
        %3007 = vmatpush1.xpose.msra.mxu0 0.0
        %3008 = vmatprep.subr.mxu0 0.0
        %3009 = vmatpush1.xpose.msra.mxu0 0.0
        %3010 = vmatprep.subr.mxu0 0.0
        %3011 = vmatpush1.xpose.msra.mxu0 0.0
        %3012 = vmatprep.subr.mxu0 0.0
        %3013 = vmatpush1.xpose.msra.mxu0 0.0
        %3014 = vmatprep.subr.mxu0 0.0
        %3015 = vmatpush1.xpose.msra.mxu0 0.0
        %3016 = vmatprep.subr.mxu0 0.0
        %3017 = vmatpush1.xpose.msra.mxu0 0.0
        %3018 = vmatprep.subr.mxu0 0.0
        %3019 = vmatpush1.xpose.msra.mxu0 0.0
        %3020 = vmatprep.subr.mxu0 0.0
        %3021 = vmatpush1.xpose.msra.mxu0 0.0
        %3022 = vmatprep.subr.mxu0 0.0
        %3023 = vmatpush1.xpose.msra.mxu0 0.0
        %3024 = vmatprep.subr.mxu0 0.0
        %3025 = vmatpush1.xpose.msra.mxu0 0.0
        %3026 = vmatprep.subr.mxu0 0.0
        %3027 = vmatpush1.xpose.msra.mxu0 0.0
        %3028 = vmatprep.subr.mxu0 0.0
        %3029 = vmatpush1.xpose.msra.mxu0 0.0
        %3030 = vmatprep.subr.mxu0 0.0
        %3031 = vmatpush1.xpose.msra.mxu0 0.0
        %3032 = vmatprep.subr.mxu0 0.0
        %3033 = vmatpush1.xpose.msra.mxu0 %v2802
        %3034 = vmatprep.subr.mxu0 0.0
        %3035 = vmatpush1.xpose.msra.mxu0 %v2800
        %3036 = vmatprep.subr.mxu0 0.0
        %3037 = vmatpush2.xpose.msra.mxu0 0.0
        %3038 = vmatprep.subr.mxu0 0.0
        %3039 = vmatpush2.xpose.msra.mxu0 0.0
        %3040 = vmatprep.subr.mxu0 0.0
        %3041 = vmatpush2.xpose.msra.mxu0 0.0
        %3042 = vmatprep.subr.mxu0 0.0
        %3043 = vmatpush2.xpose.msra.mxu0 0.0
        %3044 = vmatprep.subr.mxu0 0.0
        %3045 = vmatpush2.xpose.msra.mxu0 0.0
        %3046 = vmatprep.subr.mxu0 0.0
        %3047 = vmatpush2.xpose.msra.mxu0 0.0
        %3048 = vmatprep.subr.mxu0 0.0
        %3049 = vmatpush2.xpose.msra.mxu0 0.0
        %3050 = vmatprep.subr.mxu0 0.0
        %3051 = vmatpush2.xpose.msra.mxu0 0.0
        %3052 = vmatprep.subr.mxu0 0.0
        %3053 = vmatpush2.xpose.msra.mxu0 0.0
        %3054 = vmatprep.subr.mxu0 0.0
        %3055 = vmatpush2.xpose.msra.mxu0 0.0
        %3056 = vmatprep.subr.mxu0 0.0
        %3057 = vmatpush2.xpose.msra.mxu0 0.0
        %3058 = vmatprep.subr.mxu0 0.0
        %3059 = vmatpush2.xpose.msra.mxu0 0.0
        %3060 = vmatprep.subr.mxu0 0.0
        %3061 = vmatpush2.xpose.msra.mxu0 0.0
        %3062 = vmatprep.subr.mxu0 0.0
        %3063 = vmatpush2.xpose.msra.mxu0 0.0
        %3064 = vmatprep.subr.mxu0 0.0
        %3065 = vmatpush2.xpose.msra.mxu0 0.0
        %3066 = vmatprep.subr.mxu0 0.0
        %3067 = vmatpush2.xpose.msra.mxu0 0.0
        %3068 = vmatprep.mubr.f32.mxu0 0.0
        %3069 = vmatmul.mubr.f32.gmra.mxu0 %v2999
        %v3070 = vpop.f32.mrf.mxu0
        %v3071 = vadd.f32 0.0, %v3070
        %v3072 = vpop.f32.mrf.mxu0
        %3073 = vmatprep.mubr.f32.mxu0 0.0
        %3074 = vmatmul.mubr.f32.gmra.mxu0 %v3002
        %v3075 = vpop.f32.mrf.mxu0
        %v3076 = vadd.f32 0.0, %v3075
        %v3077 = vpop.f32.mrf.mxu0
        %3078 = vdwg.mxu0
        %v3079 = vmul.f32 %v3071, 0.35355338
        %v3080 = vmul.f32 %v3076, 0.35355338
        %v3081 = vsel %vm1529, %v3079, -1e+09
        %v3082 = vsel %vm1529, %v3080, -1e+09
        %v3083 = vsel %vm1532, %v3081, -inf
        %3084 = vmax.xlane.f32.xlu0 %v3083
        %v3085 = vpop.xlane.xlu0 %3084
        %v3086 = vsel %vm1532, %v3082, -inf
        %3087 = vmax.xlane.f32.xlu0 %v3086
        %v3088 = vpop.xlane.xlu0 %3087
        %v3089 = vsub.f32 %v3081, %v3085
        %v3090 = vsub.f32 %v3082, %v3088
        %v3091 = vmul.f32 %v3089, 1.442695
        %v3092 = vpow.pop %v3091
        %v3093 = vmul.f32 %v3090, 1.442695
        %v3094 = vpow.pop %v3093
        %v3095 = vsel %vm1532, %v3092, 0.0
        %3096 = vadd.xlane.f32.xlu0 %v3095
        %v3097 = vpop.xlane.xlu0 %3096
        %v3098 = vsel %vm1532, %v3094, 0.0
        %3099 = vadd.xlane.f32.xlu0 %v3098
        %v3100 = vpop.xlane.xlu0 %3099
        %v3101 = vrcp.pop %v3097
        %v3102 = vrcp.pop %v3100
        %v3103 = vmul.f32 %v3092, %v3101
        %v3104 = vmul.f32 %v3094, %v3102
        %v3106 = vsel %vm1532, %v3103, 0
        %v3109 = vsel %vm1532, %v3104, 0
        %3111 = vmatprep.subr.mxu0 0.0
        %3112 = vmatpush1.msra.mxu0 0.0
        %3113 = vmatprep.subr.mxu0 0.0
        %3114 = vmatpush1.msra.mxu0 0.0
        %3115 = vmatprep.subr.mxu0 0.0
        %3116 = vmatpush1.msra.mxu0 0.0
        %3117 = vmatprep.subr.mxu0 0.0
        %3118 = vmatpush1.msra.mxu0 0.0
        %3119 = vmatprep.subr.mxu0 0.0
        %3120 = vmatpush1.msra.mxu0 0.0
        %3121 = vmatprep.subr.mxu0 0.0
        %3122 = vmatpush1.msra.mxu0 0.0
        %3123 = vmatprep.subr.mxu0 0.0
        %3124 = vmatpush1.msra.mxu0 0.0
        %3125 = vmatprep.subr.mxu0 0.0
        %3126 = vmatpush1.msra.mxu0 0.0
        %3127 = vmatprep.subr.mxu0 0.0
        %3128 = vmatpush1.msra.mxu0 0.0
        %3129 = vmatprep.subr.mxu0 0.0
        %3130 = vmatpush1.msra.mxu0 0.0
        %3131 = vmatprep.subr.mxu0 0.0
        %3132 = vmatpush1.msra.mxu0 0.0
        %3133 = vmatprep.subr.mxu0 0.0
        %3134 = vmatpush1.msra.mxu0 0.0
        %3135 = vmatprep.subr.mxu0 0.0
        %3136 = vmatpush1.msra.mxu0 0.0
        %3137 = vmatprep.subr.mxu0 0.0
        %3138 = vmatpush1.msra.mxu0 0.0
        %3139 = vmatprep.subr.mxu0 0.0
        %3140 = vmatpush1.msra.mxu0 %v2908
        %3141 = vmatprep.subr.mxu0 0.0
        %3142 = vmatpush1.msra.mxu0 %v2906
        %3143 = vmatprep.subr.mxu0 0.0
        %3144 = vmatpush2.msra.mxu0 0.0
        %3145 = vmatprep.subr.mxu0 0.0
        %3146 = vmatpush2.msra.mxu0 0.0
        %3147 = vmatprep.subr.mxu0 0.0
        %3148 = vmatpush2.msra.mxu0 0.0
        %3149 = vmatprep.subr.mxu0 0.0
        %3150 = vmatpush2.msra.mxu0 0.0
        %3151 = vmatprep.subr.mxu0 0.0
        %3152 = vmatpush2.msra.mxu0 0.0
        %3153 = vmatprep.subr.mxu0 0.0
        %3154 = vmatpush2.msra.mxu0 0.0
        %3155 = vmatprep.subr.mxu0 0.0
        %3156 = vmatpush2.msra.mxu0 0.0
        %3157 = vmatprep.subr.mxu0 0.0
        %3158 = vmatpush2.msra.mxu0 0.0
        %3159 = vmatprep.subr.mxu0 0.0
        %3160 = vmatpush2.msra.mxu0 0.0
        %3161 = vmatprep.subr.mxu0 0.0
        %3162 = vmatpush2.msra.mxu0 0.0
        %3163 = vmatprep.subr.mxu0 0.0
        %3164 = vmatpush2.msra.mxu0 0.0
        %3165 = vmatprep.subr.mxu0 0.0
        %3166 = vmatpush2.msra.mxu0 0.0
        %3167 = vmatprep.subr.mxu0 0.0
        %3168 = vmatpush2.msra.mxu0 0.0
        %3169 = vmatprep.subr.mxu0 0.0
        %3170 = vmatpush2.msra.mxu0 0.0
        %3171 = vmatprep.subr.mxu0 0.0
        %3172 = vmatpush2.msra.mxu0 0.0
        %3173 = vmatprep.subr.mxu0 0.0
        %3174 = vmatpush2.msra.mxu0 0.0
        %3175 = vmatprep.mubr.f32.mxu0 0.0
        %3176 = vmatmul.mubr.f32.gmra.mxu0 %v3106
        %v3177 = vpop.f32.mrf.mxu0
        %v3178 = vadd.f32 0.0, %v3177
        %v3179 = vpop.f32.mrf.mxu0
        %3180 = vmatprep.mubr.f32.mxu0 0.0
        %3181 = vmatmul.mubr.f32.gmra.mxu0 %v3109
        %v3182 = vpop.f32.mrf.mxu0
        %v3183 = vadd.f32 0.0, %v3182
        %v3184 = vpop.f32.mrf.mxu0
        %3185 = vdwg.mxu0
        %v3186 = vmul.f32 %v3178, %v1268
        %v3187 = vmul.f32 %v3183, %v1268
        %v3188 = vadd.f32 %v2994, %v3186
        %v3189 = vadd.f32 %v2995, %v3187
        %v3190 = vmul.f32 %v2778, %v1273
        %v3191 = vmul.f32 %v2783, %v1273
        %v3193 = vsel %vm1198, %v3190, 0
        %v3196 = vsel %vm1198, %v3191, 0
        %3198 = vmatprep.subr.mxu0 0.0
        %3199 = vmatpush1.xpose.msra.mxu0 0.0
        %3200 = vmatprep.subr.mxu0 0.0
        %3201 = vmatpush1.xpose.msra.mxu0 0.0
        %3202 = vmatprep.subr.mxu0 0.0
        %3203 = vmatpush1.xpose.msra.mxu0 0.0
        %3204 = vmatprep.subr.mxu0 0.0
        %3205 = vmatpush1.xpose.msra.mxu0 0.0
        %3206 = vmatprep.subr.mxu0 0.0
        %3207 = vmatpush1.xpose.msra.mxu0 0.0
        %3208 = vmatprep.subr.mxu0 0.0
        %3209 = vmatpush1.xpose.msra.mxu0 0.0
        %3210 = vmatprep.subr.mxu0 0.0
        %3211 = vmatpush1.xpose.msra.mxu0 0.0
        %3212 = vmatprep.subr.mxu0 0.0
        %3213 = vmatpush1.xpose.msra.mxu0 0.0
        %3214 = vmatprep.subr.mxu0 0.0
        %3215 = vmatpush1.xpose.msra.mxu0 0.0
        %3216 = vmatprep.subr.mxu0 0.0
        %3217 = vmatpush1.xpose.msra.mxu0 0.0
        %3218 = vmatprep.subr.mxu0 0.0
        %3219 = vmatpush1.xpose.msra.mxu0 0.0
        %3220 = vmatprep.subr.mxu0 0.0
        %3221 = vmatpush1.xpose.msra.mxu0 0.0
        %3222 = vmatprep.subr.mxu0 0.0
        %3223 = vmatpush1.xpose.msra.mxu0 0.0
        %3224 = vmatprep.subr.mxu0 0.0
        %3225 = vmatpush1.xpose.msra.mxu0 0.0
        %3226 = vmatprep.subr.mxu0 0.0
        %3227 = vmatpush1.xpose.msra.mxu0 %v2802
        %3228 = vmatprep.subr.mxu0 0.0
        %3229 = vmatpush1.xpose.msra.mxu0 %v2800
        %3230 = vmatprep.subr.mxu0 0.0
        %3231 = vmatpush2.xpose.msra.mxu0 0.0
        %3232 = vmatprep.subr.mxu0 0.0
        %3233 = vmatpush2.xpose.msra.mxu0 0.0
        %3234 = vmatprep.subr.mxu0 0.0
        %3235 = vmatpush2.xpose.msra.mxu0 0.0
        %3236 = vmatprep.subr.mxu0 0.0
        %3237 = vmatpush2.xpose.msra.mxu0 0.0
        %3238 = vmatprep.subr.mxu0 0.0
        %3239 = vmatpush2.xpose.msra.mxu0 0.0
        %3240 = vmatprep.subr.mxu0 0.0
        %3241 = vmatpush2.xpose.msra.mxu0 0.0
        %3242 = vmatprep.subr.mxu0 0.0
        %3243 = vmatpush2.xpose.msra.mxu0 0.0
        %3244 = vmatprep.subr.mxu0 0.0
        %3245 = vmatpush2.xpose.msra.mxu0 0.0
        %3246 = vmatprep.subr.mxu0 0.0
        %3247 = vmatpush2.xpose.msra.mxu0 0.0
        %3248 = vmatprep.subr.mxu0 0.0
        %3249 = vmatpush2.xpose.msra.mxu0 0.0
        %3250 = vmatprep.subr.mxu0 0.0
        %3251 = vmatpush2.xpose.msra.mxu0 0.0
        %3252 = vmatprep.subr.mxu0 0.0
        %3253 = vmatpush2.xpose.msra.mxu0 0.0
        %3254 = vmatprep.subr.mxu0 0.0
        %3255 = vmatpush2.xpose.msra.mxu0 0.0
        %3256 = vmatprep.subr.mxu0 0.0
        %3257 = vmatpush2.xpose.msra.mxu0 0.0
        %3258 = vmatprep.subr.mxu0 0.0
        %3259 = vmatpush2.xpose.msra.mxu0 0.0
        %3260 = vmatprep.subr.mxu0 0.0
        %3261 = vmatpush2.xpose.msra.mxu0 0.0
        %3262 = vmatprep.mubr.f32.mxu0 0.0
        %3263 = vmatmul.mubr.f32.gmra.mxu0 %v3193
        %v3264 = vpop.f32.mrf.mxu0
        %v3265 = vadd.f32 0.0, %v3264
        %v3266 = vpop.f32.mrf.mxu0
        %3267 = vmatprep.mubr.f32.mxu0 0.0
        %3268 = vmatmul.mubr.f32.gmra.mxu0 %v3196
        %v3269 = vpop.f32.mrf.mxu0
        %v3270 = vadd.f32 0.0, %v3269
        %v3271 = vpop.f32.mrf.mxu0
        %3272 = vdwg.mxu0
        %v3273 = vmul.f32 %v3265, 0.35355338
        %v3274 = vmul.f32 %v3270, 0.35355338
        %v3275 = vsel %vm1529, %v3273, -1e+09
        %v3276 = vsel %vm1529, %v3274, -1e+09
        %v3277 = vsel %vm1532, %v3275, -inf
        %3278 = vmax.xlane.f32.xlu0 %v3277
        %v3279 = vpop.xlane.xlu0 %3278
        %v3280 = vsel %vm1532, %v3276, -inf
        %3281 = vmax.xlane.f32.xlu0 %v3280
        %v3282 = vpop.xlane.xlu0 %3281
        %v3283 = vsub.f32 %v3275, %v3279
        %v3284 = vsub.f32 %v3276, %v3282
        %v3285 = vmul.f32 %v3283, 1.442695
        %v3286 = vpow.pop %v3285
        %v3287 = vmul.f32 %v3284, 1.442695
        %v3288 = vpow.pop %v3287
        %v3289 = vsel %vm1532, %v3286, 0.0
        %3290 = vadd.xlane.f32.xlu0 %v3289
        %v3291 = vpop.xlane.xlu0 %3290
        %v3292 = vsel %vm1532, %v3288, 0.0
        %3293 = vadd.xlane.f32.xlu0 %v3292
        %v3294 = vpop.xlane.xlu0 %3293
        %v3295 = vrcp.pop %v3291
        %v3296 = vrcp.pop %v3294
        %v3297 = vmul.f32 %v3286, %v3295
        %v3298 = vmul.f32 %v3288, %v3296
        %v3300 = vsel %vm1532, %v3297, 0
        %v3303 = vsel %vm1532, %v3298, 0
        %3305 = vmatprep.subr.mxu0 0.0
        %3306 = vmatpush1.msra.mxu0 0.0
        %3307 = vmatprep.subr.mxu0 0.0
        %3308 = vmatpush1.msra.mxu0 0.0
        %3309 = vmatprep.subr.mxu0 0.0
        %3310 = vmatpush1.msra.mxu0 0.0
        %3311 = vmatprep.subr.mxu0 0.0
        %3312 = vmatpush1.msra.mxu0 0.0
        %3313 = vmatprep.subr.mxu0 0.0
        %3314 = vmatpush1.msra.mxu0 0.0
        %3315 = vmatprep.subr.mxu0 0.0
        %3316 = vmatpush1.msra.mxu0 0.0
        %3317 = vmatprep.subr.mxu0 0.0
        %3318 = vmatpush1.msra.mxu0 0.0
        %3319 = vmatprep.subr.mxu0 0.0
        %3320 = vmatpush1.msra.mxu0 0.0
        %3321 = vmatprep.subr.mxu0 0.0
        %3322 = vmatpush1.msra.mxu0 0.0
        %3323 = vmatprep.subr.mxu0 0.0
        %3324 = vmatpush1.msra.mxu0 0.0
        %3325 = vmatprep.subr.mxu0 0.0
        %3326 = vmatpush1.msra.mxu0 0.0
        %3327 = vmatprep.subr.mxu0 0.0
        %3328 = vmatpush1.msra.mxu0 0.0
        %3329 = vmatprep.subr.mxu0 0.0
        %3330 = vmatpush1.msra.mxu0 0.0
        %3331 = vmatprep.subr.mxu0 0.0
        %3332 = vmatpush1.msra.mxu0 0.0
        %3333 = vmatprep.subr.mxu0 0.0
        %3334 = vmatpush1.msra.mxu0 %v2908
        %3335 = vmatprep.subr.mxu0 0.0
        %3336 = vmatpush1.msra.mxu0 %v2906
        %3337 = vmatprep.subr.mxu0 0.0
        %3338 = vmatpush2.msra.mxu0 0.0
        %3339 = vmatprep.subr.mxu0 0.0
        %3340 = vmatpush2.msra.mxu0 0.0
        %3341 = vmatprep.subr.mxu0 0.0
        %3342 = vmatpush2.msra.mxu0 0.0
        %3343 = vmatprep.subr.mxu0 0.0
        %3344 = vmatpush2.msra.mxu0 0.0
        %3345 = vmatprep.subr.mxu0 0.0
        %3346 = vmatpush2.msra.mxu0 0.0
        %3347 = vmatprep.subr.mxu0 0.0
        %3348 = vmatpush2.msra.mxu0 0.0
        %3349 = vmatprep.subr.mxu0 0.0
        %3350 = vmatpush2.msra.mxu0 0.0
        %3351 = vmatprep.subr.mxu0 0.0
        %3352 = vmatpush2.msra.mxu0 0.0
        %3353 = vmatprep.subr.mxu0 0.0
        %3354 = vmatpush2.msra.mxu0 0.0
        %3355 = vmatprep.subr.mxu0 0.0
        %3356 = vmatpush2.msra.mxu0 0.0
        %3357 = vmatprep.subr.mxu0 0.0
        %3358 = vmatpush2.msra.mxu0 0.0
        %3359 = vmatprep.subr.mxu0 0.0
        %3360 = vmatpush2.msra.mxu0 0.0
        %3361 = vmatprep.subr.mxu0 0.0
        %3362 = vmatpush2.msra.mxu0 0.0
        %3363 = vmatprep.subr.mxu0 0.0
        %3364 = vmatpush2.msra.mxu0 0.0
        %3365 = vmatprep.subr.mxu0 0.0
        %3366 = vmatpush2.msra.mxu0 0.0
        %3367 = vmatprep.subr.mxu0 0.0
        %3368 = vmatpush2.msra.mxu0 0.0
        %3369 = vmatprep.mubr.f32.mxu0 0.0
        %3370 = vmatmul.mubr.f32.gmra.mxu0 %v3300
        %v3371 = vpop.f32.mrf.mxu0
        %v3372 = vadd.f32 0.0, %v3371
        %v3373 = vpop.f32.mrf.mxu0
        %3374 = vmatprep.mubr.f32.mxu0 0.0
        %3375 = vmatmul.mubr.f32.gmra.mxu0 %v3303
        %v3376 = vpop.f32.mrf.mxu0
        %v3377 = vadd.f32 0.0, %v3376
        %v3378 = vpop.f32.mrf.mxu0
        %3379 = vdwg.mxu0
        %v3380 = vmul.f32 %v3372, %v1273
        %v3381 = vmul.f32 %v3377, %v1273
        %v3382 = vadd.f32 %v3188, %v3380
        %v3383 = vadd.f32 %v3189, %v3381
        %v3384 = vmul.f32 %v2778, %v1278
        %v3385 = vmul.f32 %v2783, %v1278
        %v3387 = vsel %vm1198, %v3384, 0
        %v3390 = vsel %vm1198, %v3385, 0
        %3392 = vmatprep.subr.mxu0 0.0
        %3393 = vmatpush1.xpose.msra.mxu0 0.0
        %3394 = vmatprep.subr.mxu0 0.0
        %3395 = vmatpush1.xpose.msra.mxu0 0.0
        %3396 = vmatprep.subr.mxu0 0.0
        %3397 = vmatpush1.xpose.msra.mxu0 0.0
        %3398 = vmatprep.subr.mxu0 0.0
        %3399 = vmatpush1.xpose.msra.mxu0 0.0
        %3400 = vmatprep.subr.mxu0 0.0
        %3401 = vmatpush1.xpose.msra.mxu0 0.0
        %3402 = vmatprep.subr.mxu0 0.0
        %3403 = vmatpush1.xpose.msra.mxu0 0.0
        %3404 = vmatprep.subr.mxu0 0.0
        %3405 = vmatpush1.xpose.msra.mxu0 0.0
        %3406 = vmatprep.subr.mxu0 0.0
        %3407 = vmatpush1.xpose.msra.mxu0 0.0
        %3408 = vmatprep.subr.mxu0 0.0
        %3409 = vmatpush1.xpose.msra.mxu0 0.0
        %3410 = vmatprep.subr.mxu0 0.0
        %3411 = vmatpush1.xpose.msra.mxu0 0.0
        %3412 = vmatprep.subr.mxu0 0.0
        %3413 = vmatpush1.xpose.msra.mxu0 0.0
        %3414 = vmatprep.subr.mxu0 0.0
        %3415 = vmatpush1.xpose.msra.mxu0 0.0
        %3416 = vmatprep.subr.mxu0 0.0
        %3417 = vmatpush1.xpose.msra.mxu0 0.0
        %3418 = vmatprep.subr.mxu0 0.0
        %3419 = vmatpush1.xpose.msra.mxu0 0.0
        %3420 = vmatprep.subr.mxu0 0.0
        %3421 = vmatpush1.xpose.msra.mxu0 %v2802
        %3422 = vmatprep.subr.mxu0 0.0
        %3423 = vmatpush1.xpose.msra.mxu0 %v2800
        %3424 = vmatprep.subr.mxu0 0.0
        %3425 = vmatpush2.xpose.msra.mxu0 0.0
        %3426 = vmatprep.subr.mxu0 0.0
        %3427 = vmatpush2.xpose.msra.mxu0 0.0
        %3428 = vmatprep.subr.mxu0 0.0
        %3429 = vmatpush2.xpose.msra.mxu0 0.0
        %3430 = vmatprep.subr.mxu0 0.0
        %3431 = vmatpush2.xpose.msra.mxu0 0.0
        %3432 = vmatprep.subr.mxu0 0.0
        %3433 = vmatpush2.xpose.msra.mxu0 0.0
        %3434 = vmatprep.subr.mxu0 0.0
        %3435 = vmatpush2.xpose.msra.mxu0 0.0
        %3436 = vmatprep.subr.mxu0 0.0
        %3437 = vmatpush2.xpose.msra.mxu0 0.0
        %3438 = vmatprep.subr.mxu0 0.0
        %3439 = vmatpush2.xpose.msra.mxu0 0.0
        %3440 = vmatprep.subr.mxu0 0.0
        %3441 = vmatpush2.xpose.msra.mxu0 0.0
        %3442 = vmatprep.subr.mxu0 0.0
        %3443 = vmatpush2.xpose.msra.mxu0 0.0
        %3444 = vmatprep.subr.mxu0 0.0
        %3445 = vmatpush2.xpose.msra.mxu0 0.0
        %3446 = vmatprep.subr.mxu0 0.0
        %3447 = vmatpush2.xpose.msra.mxu0 0.0
        %3448 = vmatprep.subr.mxu0 0.0
        %3449 = vmatpush2.xpose.msra.mxu0 0.0
        %3450 = vmatprep.subr.mxu0 0.0
        %3451 = vmatpush2.xpose.msra.mxu0 0.0
        %3452 = vmatprep.subr.mxu0 0.0
        %3453 = vmatpush2.xpose.msra.mxu0 0.0
        %3454 = vmatprep.subr.mxu0 0.0
        %3455 = vmatpush2.xpose.msra.mxu0 0.0
        %3456 = vmatprep.mubr.f32.mxu0 0.0
        %3457 = vmatmul.mubr.f32.gmra.mxu0 %v3387
        %v3458 = vpop.f32.mrf.mxu0
        %v3459 = vadd.f32 0.0, %v3458
        %v3460 = vpop.f32.mrf.mxu0
        %3461 = vmatprep.mubr.f32.mxu0 0.0
        %3462 = vmatmul.mubr.f32.gmra.mxu0 %v3390
        %v3463 = vpop.f32.mrf.mxu0
        %v3464 = vadd.f32 0.0, %v3463
        %v3465 = vpop.f32.mrf.mxu0
        %3466 = vdwg.mxu0
        %v3467 = vmul.f32 %v3459, 0.35355338
        %v3468 = vmul.f32 %v3464, 0.35355338
        %v3469 = vsel %vm1529, %v3467, -1e+09
        %v3470 = vsel %vm1529, %v3468, -1e+09
        %v3471 = vsel %vm1532, %v3469, -inf
        %3472 = vmax.xlane.f32.xlu0 %v3471
        %v3473 = vpop.xlane.xlu0 %3472
        %v3474 = vsel %vm1532, %v3470, -inf
        %3475 = vmax.xlane.f32.xlu0 %v3474
        %v3476 = vpop.xlane.xlu0 %3475
        %v3477 = vsub.f32 %v3469, %v3473
        %v3478 = vsub.f32 %v3470, %v3476
        %v3479 = vmul.f32 %v3477, 1.442695
        %v3480 = vpow.pop %v3479
        %v3481 = vmul.f32 %v3478, 1.442695
        %v3482 = vpow.pop %v3481
        %v3483 = vsel %vm1532, %v3480, 0.0
        %3484 = vadd.xlane.f32.xlu0 %v3483
        %v3485 = vpop.xlane.xlu0 %3484
        %v3486 = vsel %vm1532, %v3482, 0.0
        %3487 = vadd.xlane.f32.xlu0 %v3486
        %v3488 = vpop.xlane.xlu0 %3487
        %v3489 = vrcp.pop %v3485
        %v3490 = vrcp.pop %v3488
        %v3491 = vmul.f32 %v3480, %v3489
        %v3492 = vmul.f32 %v3482, %v3490
        %v3494 = vsel %vm1532, %v3491, 0
        %v3497 = vsel %vm1532, %v3492, 0
        %3499 = vmatprep.subr.mxu0 0.0
        %3500 = vmatpush1.msra.mxu0 0.0
        %3501 = vmatprep.subr.mxu0 0.0
        %3502 = vmatpush1.msra.mxu0 0.0
        %3503 = vmatprep.subr.mxu0 0.0
        %3504 = vmatpush1.msra.mxu0 0.0
        %3505 = vmatprep.subr.mxu0 0.0
        %3506 = vmatpush1.msra.mxu0 0.0
        %3507 = vmatprep.subr.mxu0 0.0
        %3508 = vmatpush1.msra.mxu0 0.0
        %3509 = vmatprep.subr.mxu0 0.0
        %3510 = vmatpush1.msra.mxu0 0.0
        %3511 = vmatprep.subr.mxu0 0.0
        %3512 = vmatpush1.msra.mxu0 0.0
        %3513 = vmatprep.subr.mxu0 0.0
        %3514 = vmatpush1.msra.mxu0 0.0
        %3515 = vmatprep.subr.mxu0 0.0
        %3516 = vmatpush1.msra.mxu0 0.0
        %3517 = vmatprep.subr.mxu0 0.0
        %3518 = vmatpush1.msra.mxu0 0.0
        %3519 = vmatprep.subr.mxu0 0.0
        %3520 = vmatpush1.msra.mxu0 0.0
        %3521 = vmatprep.subr.mxu0 0.0
        %3522 = vmatpush1.msra.mxu0 0.0
        %3523 = vmatprep.subr.mxu0 0.0
        %3524 = vmatpush1.msra.mxu0 0.0
        %3525 = vmatprep.subr.mxu0 0.0
        %3526 = vmatpush1.msra.mxu0 0.0
        %3527 = vmatprep.subr.mxu0 0.0
        %3528 = vmatpush1.msra.mxu0 %v2908
        %3529 = vmatprep.subr.mxu0 0.0
        %3530 = vmatpush1.msra.mxu0 %v2906
        %3531 = vmatprep.subr.mxu0 0.0
        %3532 = vmatpush2.msra.mxu0 0.0
        %3533 = vmatprep.subr.mxu0 0.0
        %3534 = vmatpush2.msra.mxu0 0.0
        %3535 = vmatprep.subr.mxu0 0.0
        %3536 = vmatpush2.msra.mxu0 0.0
        %3537 = vmatprep.subr.mxu0 0.0
        %3538 = vmatpush2.msra.mxu0 0.0
        %3539 = vmatprep.subr.mxu0 0.0
        %3540 = vmatpush2.msra.mxu0 0.0
        %3541 = vmatprep.subr.mxu0 0.0
        %3542 = vmatpush2.msra.mxu0 0.0
        %3543 = vmatprep.subr.mxu0 0.0
        %3544 = vmatpush2.msra.mxu0 0.0
        %3545 = vmatprep.subr.mxu0 0.0
        %3546 = vmatpush2.msra.mxu0 0.0
        %3547 = vmatprep.subr.mxu0 0.0
        %3548 = vmatpush2.msra.mxu0 0.0
        %3549 = vmatprep.subr.mxu0 0.0
        %3550 = vmatpush2.msra.mxu0 0.0
        %3551 = vmatprep.subr.mxu0 0.0
        %3552 = vmatpush2.msra.mxu0 0.0
        %3553 = vmatprep.subr.mxu0 0.0
        %3554 = vmatpush2.msra.mxu0 0.0
        %3555 = vmatprep.subr.mxu0 0.0
        %3556 = vmatpush2.msra.mxu0 0.0
        %3557 = vmatprep.subr.mxu0 0.0
        %3558 = vmatpush2.msra.mxu0 0.0
        %3559 = vmatprep.subr.mxu0 0.0
        %3560 = vmatpush2.msra.mxu0 0.0
        %3561 = vmatprep.subr.mxu0 0.0
        %3562 = vmatpush2.msra.mxu0 0.0
        %3563 = vmatprep.mubr.f32.mxu0 0.0
        %3564 = vmatmul.mubr.f32.gmra.mxu0 %v3494
        %v3565 = vpop.f32.mrf.mxu0
        %v3566 = vadd.f32 0.0, %v3565
        %v3567 = vpop.f32.mrf.mxu0
        %3568 = vmatprep.mubr.f32.mxu0 0.0
        %3569 = vmatmul.mubr.f32.gmra.mxu0 %v3497
        %v3570 = vpop.f32.mrf.mxu0
        %v3571 = vadd.f32 0.0, %v3570
        %v3572 = vpop.f32.mrf.mxu0
        %3573 = vdwg.mxu0
        %v3574 = vmul.f32 %v3566, %v1278
        %v3575 = vmul.f32 %v3571, %v1278
        %v3576 = vadd.f32 %v3382, %v3574
        %v3577 = vadd.f32 %v3383, %v3575
        %s3578 = scalar_lea.vmem %s21, 32
        %v3579 = vld [vmem:[%s3578] sm:$0xff]
        %v3580 = vld [vmem:[%s3578 + $0x8] sm:$0xff]
        %v3581 = vld [vmem:[%s3578 + $0x10] sm:$0xff]
        %v3582 = vld [vmem:[%s3578 + $0x18] sm:$0xff]
        %s3583 = scalar_lea.vmem %s23, 1
        %v3584 = vld [vmem:[%s3583] sm:$0x1]
        %v3586 = vlaneseq
        %v3587 = vshrl.u32 %v3586, 7
        %v3588 = vsub.s32 0, %v3587
        %v3589 = vrot.slane %v3584, %v3588
        %v3592 = vsel %vm1198, %v3576, 0
        %v3595 = vsel %vm1198, %v3577, 0
        %3597 = vmatprep.subr.mxu0 0.0
        %3598 = vmatpush1.msra.mxu0 0.0
        %3599 = vmatprep.subr.mxu0 0.0
        %3600 = vmatpush1.msra.mxu0 0.0
        %3601 = vmatprep.subr.mxu0 0.0
        %3602 = vmatpush1.msra.mxu0 0.0
        %3603 = vmatprep.subr.mxu0 0.0
        %3604 = vmatpush1.msra.mxu0 0.0
        %3605 = vmatprep.subr.mxu0 0.0
        %3606 = vmatpush1.msra.mxu0 0.0
        %3607 = vmatprep.subr.mxu0 0.0
        %3608 = vmatpush1.msra.mxu0 0.0
        %3609 = vmatprep.subr.mxu0 0.0
        %3610 = vmatpush1.msra.mxu0 0.0
        %3611 = vmatprep.subr.mxu0 0.0
        %3612 = vmatpush1.msra.mxu0 0.0
        %3613 = vmatprep.subr.mxu0 0.0
        %3614 = vmatpush1.msra.mxu0 0.0
        %3615 = vmatprep.subr.mxu0 0.0
        %3616 = vmatpush1.msra.mxu0 0.0
        %3617 = vmatprep.subr.mxu0 0.0
        %3618 = vmatpush1.msra.mxu0 0.0
        %3619 = vmatprep.subr.mxu0 0.0
        %3620 = vmatpush1.msra.mxu0 0.0
        %3621 = vmatprep.subr.mxu0 0.0
        %3622 = vmatpush1.msra.mxu0 %v3582
        %3623 = vmatprep.subr.mxu0 0.0
        %3624 = vmatpush1.msra.mxu0 %v3581
        %3625 = vmatprep.subr.mxu0 0.0
        %3626 = vmatpush1.msra.mxu0 %v3580
        %3627 = vmatprep.subr.mxu0 0.0
        %3628 = vmatpush1.msra.mxu0 %v3579
        %3629 = vmatprep.subr.mxu0 0.0
        %3630 = vmatpush2.msra.mxu0 0.0
        %3631 = vmatprep.subr.mxu0 0.0
        %3632 = vmatpush2.msra.mxu0 0.0
        %3633 = vmatprep.subr.mxu0 0.0
        %3634 = vmatpush2.msra.mxu0 0.0
        %3635 = vmatprep.subr.mxu0 0.0
        %3636 = vmatpush2.msra.mxu0 0.0
        %3637 = vmatprep.subr.mxu0 0.0
        %3638 = vmatpush2.msra.mxu0 0.0
        %3639 = vmatprep.subr.mxu0 0.0
        %3640 = vmatpush2.msra.mxu0 0.0
        %3641 = vmatprep.subr.mxu0 0.0
        %3642 = vmatpush2.msra.mxu0 0.0
        %3643 = vmatprep.subr.mxu0 0.0
        %3644 = vmatpush2.msra.mxu0 0.0
        %3645 = vmatprep.subr.mxu0 0.0
        %3646 = vmatpush2.msra.mxu0 0.0
        %3647 = vmatprep.subr.mxu0 0.0
        %3648 = vmatpush2.msra.mxu0 0.0
        %3649 = vmatprep.subr.mxu0 0.0
        %3650 = vmatpush2.msra.mxu0 0.0
        %3651 = vmatprep.subr.mxu0 0.0
        %3652 = vmatpush2.msra.mxu0 0.0
        %3653 = vmatprep.subr.mxu0 0.0
        %3654 = vmatpush2.msra.mxu0 0.0
        %3655 = vmatprep.subr.mxu0 0.0
        %3656 = vmatpush2.msra.mxu0 0.0
        %3657 = vmatprep.subr.mxu0 0.0
        %3658 = vmatpush2.msra.mxu0 0.0
        %3659 = vmatprep.subr.mxu0 0.0
        %3660 = vmatpush2.msra.mxu0 0.0
        %3661 = vmatprep.mubr.f32.mxu0 0.0
        %3662 = vmatmul.mubr.f32.gmra.mxu0 %v3592
        %v3663 = vpop.f32.mrf.mxu0
        %v3664 = vadd.f32 %v3589, %v3663
        %v3665 = vpop.f32.mrf.mxu0
        %3666 = vmatprep.mubr.f32.mxu0 0.0
        %3667 = vmatmul.mubr.f32.gmra.mxu0 %v3595
        %v3668 = vpop.f32.mrf.mxu0
        %v3669 = vadd.f32 %v3589, %v3668
        %v3670 = vpop.f32.mrf.mxu0
        %3671 = vdwg.mxu0
        %v3672 = vadd.f32 %v2630, %v3664
        %v3673 = vadd.f32 %v2631, %v3669
        %s3674 = scalar_lea.vmem %s37, 1
        %v3675 = vld [vmem:[%s3674] sm:$0x1]
        %s3676 = scalar_lea.vmem %s39, 1
        %v3677 = vld [vmem:[%s3676] sm:$0x1]
        %v3678 = vsel %vm1198, %v3672, 0.0
        %3679 = vadd.xlane.f32.xlu0 %v3678
        %v3680 = vpop.xlane.xlu0 %3679
        %v3681 = vsel %vm1198, %v3673, 0.0
        %3682 = vadd.xlane.f32.xlu0 %v3681
        %v3683 = vpop.xlane.xlu0 %3682
        %v3684 = vmul.f32 %v3680, %v1205
        %v3685 = vmul.f32 %v3683, %v1205
        %v3686 = vsub.f32 %v3672, %v3684
        %v3687 = vsub.f32 %v3673, %v3685
        %v3688 = vmul.f32 %v3686, %v3686
        %v3689 = vmul.f32 %v3687, %v3687
        %v3690 = vsel %vm1198, %v3688, 0.0
        %3691 = vadd.xlane.f32.xlu0 %v3690
        %v3692 = vpop.xlane.xlu0 %3691
        %v3693 = vsel %vm1198, %v3689, 0.0
        %3694 = vadd.xlane.f32.xlu0 %v3693
        %v3695 = vpop.xlane.xlu0 %3694
        %v3696 = vmul.f32 %v3692, %v1218
        %v3697 = vmul.f32 %v3695, %v1218
        %v3698 = vrsqrt.pop %v3696
        %v3699 = vmul.f32 %v3696, %v3698
        %vm3700 = vcmp.eq.f32.partialorder %v3696, inf
        %v3701 = vsel %vm3700, %v3696, %v3699
        %vm3702 = vcmp.eq.f32.partialorder %v3696, 0.0
        %v3703 = vand.u32 %v3696, 2147483648
        %v3704 = vsel %vm3702, %v3703, %v3701
        %v3705 = vrsqrt.pop %v3697
        %v3706 = vmul.f32 %v3697, %v3705
        %vm3707 = vcmp.eq.f32.partialorder %v3697, inf
        %v3708 = vsel %vm3707, %v3697, %v3706
        %vm3709 = vcmp.eq.f32.partialorder %v3697, 0.0
        %v3710 = vand.u32 %v3697, 2147483648
        %v3711 = vsel %vm3709, %v3710, %v3708
        %v3713 = vlaneseq
        %v3714 = vshrl.u32 %v3713, 7
        %v3715 = vsub.s32 0, %v3714
        %v3716 = vrot.slane %v3675, %v3715
        %v3718 = vmul.f32 %v3716, %v3686
        %v3719 = vmul.f32 %v3716, %v3687
        %v3720 = vadd.f32 %v3704, 1e-06
        %v3721 = vadd.f32 %v3711, 1e-06
        %v3722 = vrcp.pop %v3720
        %v3723 = vrcp.pop %v3721
        %v3724 = vmul.f32 %v3718, %v3722
        %v3725 = vmul.f32 %v3719, %v3723
        %v3727 = vlaneseq
        %v3728 = vshrl.u32 %v3727, 7
        %v3729 = vsub.s32 0, %v3728
        %v3730 = vrot.slane %v3677, %v3729
        %v3732 = vadd.f32 %v3724, %v3730
        %v3733 = vadd.f32 %v3725, %v3730
        %s3734 = scalar_lea.vmem %s25, 32
        %v3735 = vld [vmem:[%s3734] sm:$0xff]
        %v3736 = vld [vmem:[%s3734 + $0x8] sm:$0xff]
        %v3737 = vld [vmem:[%s3734 + $0x10] sm:$0xff]
        %v3738 = vld [vmem:[%s3734 + $0x18] sm:$0xff]
        %s3739 = scalar_lea.vmem %s27, 1
        %v3740 = vld [vmem:[%s3739] sm:$0x1]
        %v3742 = vlaneseq
        %v3743 = vshrl.u32 %v3742, 7
        %v3744 = vsub.s32 0, %v3743
        %v3745 = vrot.slane %v3740, %v3744
        %v3748 = vsel %vm1198, %v3732, 0
        %v3751 = vsel %vm1198, %v3733, 0
        %3753 = vmatprep.subr.mxu0 0.0
        %3754 = vmatpush1.msra.mxu0 0.0
        %3755 = vmatprep.subr.mxu0 0.0
        %3756 = vmatpush1.msra.mxu0 0.0
        %3757 = vmatprep.subr.mxu0 0.0
        %3758 = vmatpush1.msra.mxu0 0.0
        %3759 = vmatprep.subr.mxu0 0.0
        %3760 = vmatpush1.msra.mxu0 0.0
        %3761 = vmatprep.subr.mxu0 0.0
        %3762 = vmatpush1.msra.mxu0 0.0
        %3763 = vmatprep.subr.mxu0 0.0
        %3764 = vmatpush1.msra.mxu0 0.0
        %3765 = vmatprep.subr.mxu0 0.0
        %3766 = vmatpush1.msra.mxu0 0.0
        %3767 = vmatprep.subr.mxu0 0.0
        %3768 = vmatpush1.msra.mxu0 0.0
        %3769 = vmatprep.subr.mxu0 0.0
        %3770 = vmatpush1.msra.mxu0 0.0
        %3771 = vmatprep.subr.mxu0 0.0
        %3772 = vmatpush1.msra.mxu0 0.0
        %3773 = vmatprep.subr.mxu0 0.0
        %3774 = vmatpush1.msra.mxu0 0.0
        %3775 = vmatprep.subr.mxu0 0.0
        %3776 = vmatpush1.msra.mxu0 0.0
        %3777 = vmatprep.subr.mxu0 0.0
        %3778 = vmatpush1.msra.mxu0 %v3738
        %3779 = vmatprep.subr.mxu0 0.0
        %3780 = vmatpush1.msra.mxu0 %v3737
        %3781 = vmatprep.subr.mxu0 0.0
        %3782 = vmatpush1.msra.mxu0 %v3736
        %3783 = vmatprep.subr.mxu0 0.0
        %3784 = vmatpush1.msra.mxu0 %v3735
        %3785 = vmatprep.subr.mxu0 0.0
        %3786 = vmatpush2.msra.mxu0 0.0
        %3787 = vmatprep.subr.mxu0 0.0
        %3788 = vmatpush2.msra.mxu0 0.0
        %3789 = vmatprep.subr.mxu0 0.0
        %3790 = vmatpush2.msra.mxu0 0.0
        %3791 = vmatprep.subr.mxu0 0.0
        %3792 = vmatpush2.msra.mxu0 0.0
        %3793 = vmatprep.subr.mxu0 0.0
        %3794 = vmatpush2.msra.mxu0 0.0
        %3795 = vmatprep.subr.mxu0 0.0
        %3796 = vmatpush2.msra.mxu0 0.0
        %3797 = vmatprep.subr.mxu0 0.0
        %3798 = vmatpush2.msra.mxu0 0.0
        %3799 = vmatprep.subr.mxu0 0.0
        %3800 = vmatpush2.msra.mxu0 0.0
        %3801 = vmatprep.subr.mxu0 0.0
        %3802 = vmatpush2.msra.mxu0 0.0
        %3803 = vmatprep.subr.mxu0 0.0
        %3804 = vmatpush2.msra.mxu0 0.0
        %3805 = vmatprep.subr.mxu0 0.0
        %3806 = vmatpush2.msra.mxu0 0.0
        %3807 = vmatprep.subr.mxu0 0.0
        %3808 = vmatpush2.msra.mxu0 0.0
        %3809 = vmatprep.subr.mxu0 0.0
        %3810 = vmatpush2.msra.mxu0 0.0
        %3811 = vmatprep.subr.mxu0 0.0
        %3812 = vmatpush2.msra.mxu0 0.0
        %3813 = vmatprep.subr.mxu0 0.0
        %3814 = vmatpush2.msra.mxu0 0.0
        %3815 = vmatprep.subr.mxu0 0.0
        %3816 = vmatpush2.msra.mxu0 0.0
        %3817 = vmatprep.mubr.f32.mxu0 0.0
        %3818 = vmatmul.mubr.f32.gmra.mxu0 %v3748
        %v3819 = vpop.f32.mrf.mxu0
        %v3820 = vadd.f32 %v3745, %v3819
        %v3821 = vpop.f32.mrf.mxu0
        %3822 = vmatprep.mubr.f32.mxu0 0.0
        %3823 = vmatmul.mubr.f32.gmra.mxu0 %v3751
        %v3824 = vpop.f32.mrf.mxu0
        %v3825 = vadd.f32 %v3745, %v3824
        %v3826 = vpop.f32.mrf.mxu0
        %3827 = vdwg.mxu0
        %v3828 = vmax.f32 %v3820, 0.0
        %v3829 = vmax.f32 %v3825, 0.0
        %s3830 = scalar_lea.vmem %s29, 64
        %v3831 = vld [vmem:[%s3830] sm:$0xff]
        %v3832 = vld [vmem:[%s3830 + $0x8] sm:$0xff]
        %v3833 = vld [vmem:[%s3830 + $0x10] sm:$0xff]
        %v3834 = vld [vmem:[%s3830 + $0x18] sm:$0xff]
        %v3835 = vld [vmem:[%s3830 + $0x20] sm:$0xff]
        %v3836 = vld [vmem:[%s3830 + $0x28] sm:$0xff]
        %v3837 = vld [vmem:[%s3830 + $0x30] sm:$0xff]
        %v3838 = vld [vmem:[%s3830 + $0x38] sm:$0xff]
        %v3840 = vsel %vm1114, %v3828, 0
        %v3843 = vsel %vm1114, %v3829, 0
        %3845 = vmatprep.subr.mxu0 0.0
        %3846 = vmatpush1.msra.mxu0 0.0
        %3847 = vmatprep.subr.mxu0 0.0
        %3848 = vmatpush1.msra.mxu0 0.0
        %3849 = vmatprep.subr.mxu0 0.0
        %3850 = vmatpush1.msra.mxu0 0.0
        %3851 = vmatprep.subr.mxu0 0.0
        %3852 = vmatpush1.msra.mxu0 0.0
        %3853 = vmatprep.subr.mxu0 0.0
        %3854 = vmatpush1.msra.mxu0 0.0
        %3855 = vmatprep.subr.mxu0 0.0
        %3856 = vmatpush1.msra.mxu0 0.0
        %3857 = vmatprep.subr.mxu0 0.0
        %3858 = vmatpush1.msra.mxu0 0.0
        %3859 = vmatprep.subr.mxu0 0.0
        %3860 = vmatpush1.msra.mxu0 0.0
        %3861 = vmatprep.subr.mxu0 0.0
        %3862 = vmatpush1.msra.mxu0 %v3838
        %3863 = vmatprep.subr.mxu0 0.0
        %3864 = vmatpush1.msra.mxu0 %v3837
        %3865 = vmatprep.subr.mxu0 0.0
        %3866 = vmatpush1.msra.mxu0 %v3836
        %3867 = vmatprep.subr.mxu0 0.0
        %3868 = vmatpush1.msra.mxu0 %v3835
        %3869 = vmatprep.subr.mxu0 0.0
        %3870 = vmatpush1.msra.mxu0 %v3834
        %3871 = vmatprep.subr.mxu0 0.0
        %3872 = vmatpush1.msra.mxu0 %v3833
        %3873 = vmatprep.subr.mxu0 0.0
        %3874 = vmatpush1.msra.mxu0 %v3832
        %3875 = vmatprep.subr.mxu0 0.0
        %3876 = vmatpush1.msra.mxu0 %v3831
        %3877 = vmatprep.subr.mxu0 0.0
        %3878 = vmatpush2.msra.mxu0 0.0
        %3879 = vmatprep.subr.mxu0 0.0
        %3880 = vmatpush2.msra.mxu0 0.0
        %3881 = vmatprep.subr.mxu0 0.0
        %3882 = vmatpush2.msra.mxu0 0.0
        %3883 = vmatprep.subr.mxu0 0.0
        %3884 = vmatpush2.msra.mxu0 0.0
        %3885 = vmatprep.subr.mxu0 0.0
        %3886 = vmatpush2.msra.mxu0 0.0
        %3887 = vmatprep.subr.mxu0 0.0
        %3888 = vmatpush2.msra.mxu0 0.0
        %3889 = vmatprep.subr.mxu0 0.0
        %3890 = vmatpush2.msra.mxu0 0.0
        %3891 = vmatprep.subr.mxu0 0.0
        %3892 = vmatpush2.msra.mxu0 0.0
        %3893 = vmatprep.subr.mxu0 0.0
        %3894 = vmatpush2.msra.mxu0 0.0
        %3895 = vmatprep.subr.mxu0 0.0
        %3896 = vmatpush2.msra.mxu0 0.0
        %3897 = vmatprep.subr.mxu0 0.0
        %3898 = vmatpush2.msra.mxu0 0.0
        %3899 = vmatprep.subr.mxu0 0.0
        %3900 = vmatpush2.msra.mxu0 0.0
        %3901 = vmatprep.subr.mxu0 0.0
        %3902 = vmatpush2.msra.mxu0 0.0
        %3903 = vmatprep.subr.mxu0 0.0
        %3904 = vmatpush2.msra.mxu0 0.0
        %3905 = vmatprep.subr.mxu0 0.0
        %3906 = vmatpush2.msra.mxu0 0.0
        %3907 = vmatprep.subr.mxu0 0.0
        %3908 = vmatpush2.msra.mxu0 0.0
        %3909 = vmatprep.mubr.f32.mxu0 0.0
        %3910 = vmatmul.mubr.f32.gmra.mxu0 %v3840
        %v3911 = vpop.f32.mrf.mxu0
        %v3912 = vadd.f32 0.0, %v3911
        %v3913 = vpop.f32.mrf.mxu0
        %3914 = vmatprep.mubr.f32.mxu0 0.0
        %3915 = vmatmul.mubr.f32.gmra.mxu0 %v3843
        %v3916 = vpop.f32.mrf.mxu0
        %v3917 = vadd.f32 0.0, %v3916
        %v3918 = vpop.f32.mrf.mxu0
        %3919 = vdwg.mxu0
        %v3920 = vadd.f32 %v3672, %v3912
        %v3921 = vadd.f32 %v3673, %v3917
        %s3922 = scalar_lea.vmem %s31, 1
        %v3923 = vld [vmem:[%s3922] sm:$0x1]
        %v3925 = vlaneseq
        %v3926 = vshrl.u32 %v3925, 7
        %v3927 = vsub.s32 0, %v3926
        %v3928 = vrot.slane %v3923, %v3927
        %v3930 = vadd.f32 %v3920, %v3928
        %v3931 = vadd.f32 %v3921, %v3928
        %s3932 = scalar_lea.vmem %s41, 1
        %v3933 = vld [vmem:[%s3932] sm:$0x1]
        %s3934 = scalar_lea.vmem %s43, 1
        %v3935 = vld [vmem:[%s3934] sm:$0x1]
        %v3936 = vsel %vm1198, %v3930, 0.0
        %3937 = vadd.xlane.f32.xlu0 %v3936
        %v3938 = vpop.xlane.xlu0 %3937
        %v3939 = vsel %vm1198, %v3931, 0.0
        %3940 = vadd.xlane.f32.xlu0 %v3939
        %v3941 = vpop.xlane.xlu0 %3940
        %v3942 = vmul.f32 %v3938, %v1205
        %v3943 = vmul.f32 %v3941, %v1205
        %v3944 = vsub.f32 %v3930, %v3942
        %v3945 = vsub.f32 %v3931, %v3943
        %v3946 = vmul.f32 %v3944, %v3944
        %v3947 = vmul.f32 %v3945, %v3945
        %v3948 = vsel %vm1198, %v3946, 0.0
        %3949 = vadd.xlane.f32.xlu0 %v3948
        %v3950 = vpop.xlane.xlu0 %3949
        %v3951 = vsel %vm1198, %v3947, 0.0
        %3952 = vadd.xlane.f32.xlu0 %v3951
        %v3953 = vpop.xlane.xlu0 %3952
        %v3954 = vmul.f32 %v3950, %v1218
        %v3955 = vmul.f32 %v3953, %v1218
        %v3956 = vrsqrt.pop %v3954
        %v3957 = vmul.f32 %v3954, %v3956
        %vm3958 = vcmp.eq.f32.partialorder %v3954, inf
        %v3959 = vsel %vm3958, %v3954, %v3957
        %vm3960 = vcmp.eq.f32.partialorder %v3954, 0.0
        %v3961 = vand.u32 %v3954, 2147483648
        %v3962 = vsel %vm3960, %v3961, %v3959
        %v3963 = vrsqrt.pop %v3955
        %v3964 = vmul.f32 %v3955, %v3963
        %vm3965 = vcmp.eq.f32.partialorder %v3955, inf
        %v3966 = vsel %vm3965, %v3955, %v3964
        %vm3967 = vcmp.eq.f32.partialorder %v3955, 0.0
        %v3968 = vand.u32 %v3955, 2147483648
        %v3969 = vsel %vm3967, %v3968, %v3966
        %v3971 = vlaneseq
        %v3972 = vshrl.u32 %v3971, 7
        %v3973 = vsub.s32 0, %v3972
        %v3974 = vrot.slane %v3933, %v3973
        %v3976 = vmul.f32 %v3974, %v3944
        %v3977 = vmul.f32 %v3974, %v3945
        %v3978 = vadd.f32 %v3962, 1e-06
        %v3979 = vadd.f32 %v3969, 1e-06
        %v3980 = vrcp.pop %v3978
        %v3981 = vrcp.pop %v3979
        %v3982 = vmul.f32 %v3976, %v3980
        %v3983 = vmul.f32 %v3977, %v3981
        %v3985 = vlaneseq
        %v3986 = vshrl.u32 %v3985, 7
        %v3987 = vsub.s32 0, %v3986
        %v3988 = vrot.slane %v3935, %v3987
        %v3990 = vadd.f32 %v3982, %v3988
        %v3991 = vadd.f32 %v3983, %v3988
        %3992 = vst.msk [vmem:[%s1021] sm:$0xff] %vm1198, %v3990
        %3993 = vst.msk [vmem:[%s1021 + $0x8] sm:$0xff] %vm1198, %v3991
        %v3994 = vld [vmem:[%s45] sm:$0xff]
        %v3995 = vld [vmem:[%s45 + $0x8] sm:$0xff]
        %v3996 = vld [vmem:[%s45 + $0x10] sm:$0xff]
        %v3997 = vld [vmem:[%s45 + $0x18] sm:$0xff]
        %v3998 = vld [vmem:[%s47] sm:$0x1]
        %v4000 = vlaneseq
        %v4001 = vshrl.u32 %v4000, 7
        %v4002 = vsub.s32 0, %v4001
        %v4003 = vrot.slane %v3998, %v4002
        %v4006 = vsel %vm1198, %v3990, 0
        %v4009 = vsel %vm1198, %v3991, 0
        %4011 = vmatprep.subr.mxu0 0.0
        %4012 = vmatpush1.msra.mxu0 0.0
        %4013 = vmatprep.subr.mxu0 0.0
        %4014 = vmatpush1.msra.mxu0 0.0
        %4015 = vmatprep.subr.mxu0 0.0
        %4016 = vmatpush1.msra.mxu0 0.0
        %4017 = vmatprep.subr.mxu0 0.0
        %4018 = vmatpush1.msra.mxu0 0.0
        %4019 = vmatprep.subr.mxu0 0.0
        %4020 = vmatpush1.msra.mxu0 0.0
        %4021 = vmatprep.subr.mxu0 0.0
        %4022 = vmatpush1.msra.mxu0 0.0
        %4023 = vmatprep.subr.mxu0 0.0
        %4024 = vmatpush1.msra.mxu0 0.0
        %4025 = vmatprep.subr.mxu0 0.0
        %4026 = vmatpush1.msra.mxu0 0.0
        %4027 = vmatprep.subr.mxu0 0.0
        %4028 = vmatpush1.msra.mxu0 0.0
        %4029 = vmatprep.subr.mxu0 0.0
        %4030 = vmatpush1.msra.mxu0 0.0
        %4031 = vmatprep.subr.mxu0 0.0
        %4032 = vmatpush1.msra.mxu0 0.0
        %4033 = vmatprep.subr.mxu0 0.0
        %4034 = vmatpush1.msra.mxu0 0.0
        %4035 = vmatprep.subr.mxu0 0.0
        %4036 = vmatpush1.msra.mxu0 %v3997
        %4037 = vmatprep.subr.mxu0 0.0
        %4038 = vmatpush1.msra.mxu0 %v3996
        %4039 = vmatprep.subr.mxu0 0.0
        %4040 = vmatpush1.msra.mxu0 %v3995
        %4041 = vmatprep.subr.mxu0 0.0
        %4042 = vmatpush1.msra.mxu0 %v3994
        %4043 = vmatprep.subr.mxu0 0.0
        %4044 = vmatpush2.msra.mxu0 0.0
        %4045 = vmatprep.subr.mxu0 0.0
        %4046 = vmatpush2.msra.mxu0 0.0
        %4047 = vmatprep.subr.mxu0 0.0
        %4048 = vmatpush2.msra.mxu0 0.0
        %4049 = vmatprep.subr.mxu0 0.0
        %4050 = vmatpush2.msra.mxu0 0.0
        %4051 = vmatprep.subr.mxu0 0.0
        %4052 = vmatpush2.msra.mxu0 0.0
        %4053 = vmatprep.subr.mxu0 0.0
        %4054 = vmatpush2.msra.mxu0 0.0
        %4055 = vmatprep.subr.mxu0 0.0
        %4056 = vmatpush2.msra.mxu0 0.0
        %4057 = vmatprep.subr.mxu0 0.0
        %4058 = vmatpush2.msra.mxu0 0.0
        %4059 = vmatprep.subr.mxu0 0.0
        %4060 = vmatpush2.msra.mxu0 0.0
        %4061 = vmatprep.subr.mxu0 0.0
        %4062 = vmatpush2.msra.mxu0 0.0
        %4063 = vmatprep.subr.mxu0 0.0
        %4064 = vmatpush2.msra.mxu0 0.0
        %4065 = vmatprep.subr.mxu0 0.0
        %4066 = vmatpush2.msra.mxu0 0.0
        %4067 = vmatprep.subr.mxu0 0.0
        %4068 = vmatpush2.msra.mxu0 0.0
        %4069 = vmatprep.subr.mxu0 0.0
        %4070 = vmatpush2.msra.mxu0 0.0
        %4071 = vmatprep.subr.mxu0 0.0
        %4072 = vmatpush2.msra.mxu0 0.0
        %4073 = vmatprep.subr.mxu0 0.0
        %4074 = vmatpush2.msra.mxu0 0.0
        %4075 = vmatprep.mubr.f32.mxu0 0.0
        %4076 = vmatmul.mubr.f32.gmra.mxu0 %v4006
        %v4077 = vpop.f32.mrf.mxu0
        %v4078 = vadd.f32 %v4003, %v4077
        %v4079 = vpop.f32.mrf.mxu0
        %4080 = vmatprep.mubr.f32.mxu0 0.0
        %4081 = vmatmul.mubr.f32.gmra.mxu0 %v4009
        %v4082 = vpop.f32.mrf.mxu0
        %v4083 = vadd.f32 %v4003, %v4082
        %v4084 = vpop.f32.mrf.mxu0
        %4085 = vdwg.mxu0
        %v4086 = vld [vmem:[%s1062] sm:$0xff]
        %v4087 = vld [vmem:[%s1062 + $0x8] sm:$0xff]
        %vm4088 = vcmask 39936
        %v4089 = vsel %vm4088, %v4078, -inf
        %4090 = vmax.xlane.f32.xlu0 %v4089
        %v4091 = vpop.xlane.xlu0 %4090
        %v4092 = vsel %vm4088, %v4083, -inf
        %4093 = vmax.xlane.f32.xlu0 %v4092
        %v4094 = vpop.xlane.xlu0 %4093
        %v4095 = vsub.f32 %v4078, %v4091
        %v4096 = vsub.f32 %v4083, %v4094
        %v4097 = vmul.f32 %v4095, 1.442695
        %v4098 = vpow.pop %v4097
        %v4099 = vmul.f32 %v4096, 1.442695
        %v4100 = vpow.pop %v4099
        %v4101 = vsel %vm4088, %v4098, 0.0
        %4102 = vadd.xlane.f32.xlu0 %v4101
        %v4103 = vpop.xlane.xlu0 %4102
        %v4104 = vsel %vm4088, %v4100, 0.0
        %4105 = vadd.xlane.f32.xlu0 %v4104
        %v4106 = vpop.xlane.xlu0 %4105
        %v4107 = vlog2.pop %v4103
        %v4108 = vmul.f32 %v4107, 0.6931472
        %v4109 = vlog2.pop %v4106
        %v4110 = vmul.f32 %v4109, 0.6931472
        %v4111 = vsub.f32 %v4095, %v4108
        %v4112 = vsub.f32 %v4096, %v4110
        %4113 = vset.pattern.permute.xlu0 0
        %4114 = vperm.xlu0 %4113, %v4086
        %v4115 = vpop.permute.xlu0 %4114
        %4116 = vset.pattern.permute.xlu0 0
        %4117 = vperm.xlu0 %4116, %v4087
        %v4118 = vpop.permute.xlu0 %4117
        %vm4119 = vcmp.eq.s32.totalorder %v1091, %v4115
        %vm4120 = vcmp.eq.s32.totalorder %v1091, %v4118
        %v4121 = vsel %vm4119, 1, 0
        %v4122 = vsel %vm4120, 1, 0
        %v4123 = vcvt.s32.f32 %v4121
        %v4124 = vcvt.s32.f32 %v4122
        %v4125 = vmul.f32 %v4111, %v4123
        %v4126 = vmul.f32 %v4112, %v4124
        %v4127 = vsel %vm4088, %v4125, 0.0
        %4128 = vadd.xlane.f32.xlu0 %v4127
        %v4129 = vpop.xlane.xlu0 %4128
        %v4130 = vsel %vm4088, %v4126, 0.0
        %4131 = vadd.xlane.f32.xlu0 %v4130
        %v4132 = vpop.xlane.xlu0 %4131
        %v4133 = vsub.f32 0.0, %v4129
        %v4134 = vsub.f32 0.0, %v4132
        %vm4135 = vcmp.ge.s32.totalorder %v4086, 0
        %vm4136 = vcmp.ge.s32.totalorder %v4087, 0
        %v4137 = vsel %vm4135, 1, 0
        %v4138 = vsel %vm4136, 1, 0
        %v4139 = vcvt.s32.f32 %v4137
        %v4140 = vcvt.s32.f32 %v4138
        %v4141 = vmul.f32 %v4133, %v4139
        %v4142 = vmul.f32 %v4134, %v4140
        %vm4143 = vcmp.ge.f32.partialorder %v4078, %v4091
        %vm4144 = vcmp.ge.f32.partialorder %v4083, %v4094
        %v4145 = vcvt.s32.f32 %v1091
        %v4146 = vsel %vm4143, %v4145, 5.0
        %v4147 = vsel %vm4144, %v4145, 5.0
        %v4148 = vsel %vm4088, %v4146, inf
        %4149 = vmin.xlane.f32.xlu0 %v4148
        %v4150 = vpop.xlane.xlu0 %4149
        %v4151 = vsel %vm4088, %v4147, inf
        %4152 = vmin.xlane.f32.xlu0 %v4151
        %v4153 = vpop.xlane.xlu0 %4152
        %v4154 = vcvt.f32.s32.to.zero.pseudo %v4150
        %v4155 = vcvt.f32.s32.to.zero.pseudo %v4153
        %vm4156 = vcmask 7168
        %4157 = vst.msk [vmem:[%s1072] sm:$0xff] %vm4156, %v4141
        %4158 = vst.msk [vmem:[%s1072 + $0x8] sm:$0xff] %vm4156, %v4142
        %4159 = vst.msk [vmem:[%s1077] sm:$0xff] %vm4156, %v4154
        %4160 = vst.msk [vmem:[%s1077 + $0x8] sm:$0xff] %vm4156, %v4155
        %v4161 = vld [vmem:[%s49] sm:$0xff]
        %v4162 = vld [vmem:[%s49 + $0x8] sm:$0xff]
        %v4163 = vld [vmem:[%s49 + $0x10] sm:$0xff]
        %v4164 = vld [vmem:[%s49 + $0x18] sm:$0xff]
        %v4165 = vld [vmem:[%s51] sm:$0x1]
        %v4167 = vlaneseq
        %v4168 = vshrl.u32 %v4167, 7
        %v4169 = vsub.s32 0, %v4168
        %v4170 = vrot.slane %v4165, %v4169
        %4172 = vmatprep.subr.mxu0 0.0
        %4173 = vmatpush1.msra.mxu0 0.0
        %4174 = vmatprep.subr.mxu0 0.0
        %4175 = vmatpush1.msra.mxu0 0.0
        %4176 = vmatprep.subr.mxu0 0.0
        %4177 = vmatpush1.msra.mxu0 0.0
        %4178 = vmatprep.subr.mxu0 0.0
        %4179 = vmatpush1.msra.mxu0 0.0
        %4180 = vmatprep.subr.mxu0 0.0
        %4181 = vmatpush1.msra.mxu0 0.0
        %4182 = vmatprep.subr.mxu0 0.0
        %4183 = vmatpush1.msra.mxu0 0.0
        %4184 = vmatprep.subr.mxu0 0.0
        %4185 = vmatpush1.msra.mxu0 0.0
        %4186 = vmatprep.subr.mxu0 0.0
        %4187 = vmatpush1.msra.mxu0 0.0
        %4188 = vmatprep.subr.mxu0 0.0
        %4189 = vmatpush1.msra.mxu0 0.0
        %4190 = vmatprep.subr.mxu0 0.0
        %4191 = vmatpush1.msra.mxu0 0.0
        %4192 = vmatprep.subr.mxu0 0.0
        %4193 = vmatpush1.msra.mxu0 0.0
        %4194 = vmatprep.subr.mxu0 0.0
        %4195 = vmatpush1.msra.mxu0 0.0
        %4196 = vmatprep.subr.mxu0 0.0
        %4197 = vmatpush1.msra.mxu0 %v4164
        %4198 = vmatprep.subr.mxu0 0.0
        %4199 = vmatpush1.msra.mxu0 %v4163
        %4200 = vmatprep.subr.mxu0 0.0
        %4201 = vmatpush1.msra.mxu0 %v4162
        %4202 = vmatprep.subr.mxu0 0.0
        %4203 = vmatpush1.msra.mxu0 %v4161
        %4204 = vmatprep.subr.mxu0 0.0
        %4205 = vmatpush2.msra.mxu0 0.0
        %4206 = vmatprep.subr.mxu0 0.0
        %4207 = vmatpush2.msra.mxu0 0.0
        %4208 = vmatprep.subr.mxu0 0.0
        %4209 = vmatpush2.msra.mxu0 0.0
        %4210 = vmatprep.subr.mxu0 0.0
        %4211 = vmatpush2.msra.mxu0 0.0
        %4212 = vmatprep.subr.mxu0 0.0
        %4213 = vmatpush2.msra.mxu0 0.0
        %4214 = vmatprep.subr.mxu0 0.0
        %4215 = vmatpush2.msra.mxu0 0.0
        %4216 = vmatprep.subr.mxu0 0.0
        %4217 = vmatpush2.msra.mxu0 0.0
        %4218 = vmatprep.subr.mxu0 0.0
        %4219 = vmatpush2.msra.mxu0 0.0
        %4220 = vmatprep.subr.mxu0 0.0
        %4221 = vmatpush2.msra.mxu0 0.0
        %4222 = vmatprep.subr.mxu0 0.0
        %4223 = vmatpush2.msra.mxu0 0.0
        %4224 = vmatprep.subr.mxu0 0.0
        %4225 = vmatpush2.msra.mxu0 0.0
        %4226 = vmatprep.subr.mxu0 0.0
        %4227 = vmatpush2.msra.mxu0 0.0
        %4228 = vmatprep.subr.mxu0 0.0
        %4229 = vmatpush2.msra.mxu0 0.0
        %4230 = vmatprep.subr.mxu0 0.0
        %4231 = vmatpush2.msra.mxu0 0.0
        %4232 = vmatprep.subr.mxu0 0.0
        %4233 = vmatpush2.msra.mxu0 0.0
        %4234 = vmatprep.subr.mxu0 0.0
        %4235 = vmatpush2.msra.mxu0 0.0
        %4236 = vmatprep.mubr.f32.mxu0 0.0
        %4237 = vmatmul.mubr.f32.gmra.mxu0 %v4006
        %v4238 = vpop.f32.mrf.mxu0
        %v4239 = vadd.f32 %v4170, %v4238
        %v4240 = vpop.f32.mrf.mxu0
        %4241 = vmatprep.mubr.f32.mxu0 0.0
        %4242 = vmatmul.mubr.f32.gmra.mxu0 %v4009
        %v4243 = vpop.f32.mrf.mxu0
        %v4244 = vadd.f32 %v4170, %v4243
        %v4245 = vpop.f32.mrf.mxu0
        %4246 = vdwg.mxu0
        %v4247 = vmax.f32 %v4239, 0.0
        %v4248 = vmax.f32 %v4244, 0.0
        %v4249 = vld [vmem:[%s53] sm:$0xff]
        %v4250 = vld [vmem:[%s53 + $0x8] sm:$0xff]
        %v4251 = vld [vmem:[%s55] sm:$0x1]
        %v4253 = vlaneseq
        %v4254 = vshrl.u32 %v4253, 7
        %v4255 = vsub.s32 0, %v4254
        %v4256 = vrot.slane %v4251, %v4255
        %v4259 = vsel %vm1532, %v4247, 0
        %v4262 = vsel %vm1532, %v4248, 0
        %4264 = vmatprep.subr.mxu0 0.0
        %4265 = vmatpush1.msra.mxu0 0.0
        %4266 = vmatprep.subr.mxu0 0.0
        %4267 = vmatpush1.msra.mxu0 0.0
        %4268 = vmatprep.subr.mxu0 0.0
        %4269 = vmatpush1.msra.mxu0 0.0
        %4270 = vmatprep.subr.mxu0 0.0
        %4271 = vmatpush1.msra.mxu0 0.0
        %4272 = vmatprep.subr.mxu0 0.0
        %4273 = vmatpush1.msra.mxu0 0.0
        %4274 = vmatprep.subr.mxu0 0.0
        %4275 = vmatpush1.msra.mxu0 0.0
        %4276 = vmatprep.subr.mxu0 0.0
        %4277 = vmatpush1.msra.mxu0 0.0
        %4278 = vmatprep.subr.mxu0 0.0
        %4279 = vmatpush1.msra.mxu0 0.0
        %4280 = vmatprep.subr.mxu0 0.0
        %4281 = vmatpush1.msra.mxu0 0.0
        %4282 = vmatprep.subr.mxu0 0.0
        %4283 = vmatpush1.msra.mxu0 0.0
        %4284 = vmatprep.subr.mxu0 0.0
        %4285 = vmatpush1.msra.mxu0 0.0
        %4286 = vmatprep.subr.mxu0 0.0
        %4287 = vmatpush1.msra.mxu0 0.0
        %4288 = vmatprep.subr.mxu0 0.0
        %4289 = vmatpush1.msra.mxu0 0.0
        %4290 = vmatprep.subr.mxu0 0.0
        %4291 = vmatpush1.msra.mxu0 0.0
        %4292 = vmatprep.subr.mxu0 0.0
        %4293 = vmatpush1.msra.mxu0 %v4250
        %4294 = vmatprep.subr.mxu0 0.0
        %4295 = vmatpush1.msra.mxu0 %v4249
        %4296 = vmatprep.subr.mxu0 0.0
        %4297 = vmatpush2.msra.mxu0 0.0
        %4298 = vmatprep.subr.mxu0 0.0
        %4299 = vmatpush2.msra.mxu0 0.0
        %4300 = vmatprep.subr.mxu0 0.0
        %4301 = vmatpush2.msra.mxu0 0.0
        %4302 = vmatprep.subr.mxu0 0.0
        %4303 = vmatpush2.msra.mxu0 0.0
        %4304 = vmatprep.subr.mxu0 0.0
        %4305 = vmatpush2.msra.mxu0 0.0
        %4306 = vmatprep.subr.mxu0 0.0
        %4307 = vmatpush2.msra.mxu0 0.0
        %4308 = vmatprep.subr.mxu0 0.0
        %4309 = vmatpush2.msra.mxu0 0.0
        %4310 = vmatprep.subr.mxu0 0.0
        %4311 = vmatpush2.msra.mxu0 0.0
        %4312 = vmatprep.subr.mxu0 0.0
        %4313 = vmatpush2.msra.mxu0 0.0
        %4314 = vmatprep.subr.mxu0 0.0
        %4315 = vmatpush2.msra.mxu0 0.0
        %4316 = vmatprep.subr.mxu0 0.0
        %4317 = vmatpush2.msra.mxu0 0.0
        %4318 = vmatprep.subr.mxu0 0.0
        %4319 = vmatpush2.msra.mxu0 0.0
        %4320 = vmatprep.subr.mxu0 0.0
        %4321 = vmatpush2.msra.mxu0 0.0
        %4322 = vmatprep.subr.mxu0 0.0
        %4323 = vmatpush2.msra.mxu0 0.0
        %4324 = vmatprep.subr.mxu0 0.0
        %4325 = vmatpush2.msra.mxu0 0.0
        %4326 = vmatprep.subr.mxu0 0.0
        %4327 = vmatpush2.msra.mxu0 0.0
        %4328 = vmatprep.mubr.f32.mxu0 0.0
        %4329 = vmatmul.mubr.f32.gmra.mxu0 %v4259
        %v4330 = vpop.f32.mrf.mxu0
        %v4331 = vadd.f32 %v4256, %v4330
        %v4332 = vpop.f32.mrf.mxu0
        %4333 = vmatprep.mubr.f32.mxu0 0.0
        %4334 = vmatmul.mubr.f32.gmra.mxu0 %v4262
        %v4335 = vpop.f32.mrf.mxu0
        %v4336 = vadd.f32 %v4256, %v4335
        %v4337 = vpop.f32.mrf.mxu0
        %4338 = vdwg.mxu0
        %v4339 = vld [vmem:[%s1067] sm:$0xff]
        %v4340 = vld [vmem:[%s1067 + $0x8] sm:$0xff]
        %vm4341 = vcmask 15360
        %v4342 = vsel %vm4341, %v4331, -inf
        %4343 = vmax.xlane.f32.xlu0 %v4342
        %v4344 = vpop.xlane.xlu0 %4343
        %v4345 = vsel %vm4341, %v4336, -inf
        %4346 = vmax.xlane.f32.xlu0 %v4345
        %v4347 = vpop.xlane.xlu0 %4346
        %v4348 = vsub.f32 %v4331, %v4344
        %v4349 = vsub.f32 %v4336, %v4347
        %v4350 = vmul.f32 %v4348, 1.442695
        %v4351 = vpow.pop %v4350
        %v4352 = vmul.f32 %v4349, 1.442695
        %v4353 = vpow.pop %v4352
        %v4354 = vsel %vm4341, %v4351, 0.0
        %4355 = vadd.xlane.f32.xlu0 %v4354
        %v4356 = vpop.xlane.xlu0 %4355
        %v4357 = vsel %vm4341, %v4353, 0.0
        %4358 = vadd.xlane.f32.xlu0 %v4357
        %v4359 = vpop.xlane.xlu0 %4358
        %v4360 = vlog2.pop %v4356
        %v4361 = vmul.f32 %v4360, 0.6931472
        %v4362 = vlog2.pop %v4359
        %v4363 = vmul.f32 %v4362, 0.6931472
        %v4364 = vsub.f32 %v4348, %v4361
        %v4365 = vsub.f32 %v4349, %v4363
        %4366 = vset.pattern.permute.xlu0 0
        %4367 = vperm.xlu0 %4366, %v4339
        %v4368 = vpop.permute.xlu0 %4367
        %4369 = vset.pattern.permute.xlu0 0
        %4370 = vperm.xlu0 %4369, %v4340
        %v4371 = vpop.permute.xlu0 %4370
        %vm4372 = vcmp.eq.s32.totalorder %v1091, %v4368
        %vm4373 = vcmp.eq.s32.totalorder %v1091, %v4371
        %v4374 = vsel %vm4372, 1, 0
        %v4375 = vsel %vm4373, 1, 0
        %v4376 = vcvt.s32.f32 %v4374
        %v4377 = vcvt.s32.f32 %v4375
        %v4378 = vmul.f32 %v4364, %v4376
        %v4379 = vmul.f32 %v4365, %v4377
        %v4380 = vsel %vm4341, %v4378, 0.0
        %4381 = vadd.xlane.f32.xlu0 %v4380
        %v4382 = vpop.xlane.xlu0 %4381
        %v4383 = vsel %vm4341, %v4379, 0.0
        %4384 = vadd.xlane.f32.xlu0 %v4383
        %v4385 = vpop.xlane.xlu0 %4384
        %v4386 = vsub.f32 0.0, %v4382
        %v4387 = vsub.f32 0.0, %v4385
        %vm4388 = vcmp.ge.s32.totalorder %v4339, 0
        %vm4389 = vcmp.ge.s32.totalorder %v4340, 0
        %v4390 = vsel %vm4388, 1, 0
        %v4391 = vsel %vm4389, 1, 0
        %v4392 = vcvt.s32.f32 %v4390
        %v4393 = vcvt.s32.f32 %v4391
        %v4394 = vmul.f32 %v4386, %v4392
        %v4395 = vmul.f32 %v4387, %v4393
        %vm4396 = vcmp.ge.f32.partialorder %v4331, %v4344
        %vm4397 = vcmp.ge.f32.partialorder %v4336, %v4347
        %v4398 = vsel %vm4396, %v4145, 2.0
        %v4399 = vsel %vm4397, %v4145, 2.0
        %v4400 = vsel %vm4341, %v4398, inf
        %4401 = vmin.xlane.f32.xlu0 %v4400
        %v4402 = vpop.xlane.xlu0 %4401
        %v4403 = vsel %vm4341, %v4399, inf
        %4404 = vmin.xlane.f32.xlu0 %v4403
        %v4405 = vpop.xlane.xlu0 %4404
        %v4406 = vcvt.f32.s32.to.zero.pseudo %v4402
        %v4407 = vcvt.f32.s32.to.zero.pseudo %v4405
        %4408 = vst.msk [vmem:[%s1082] sm:$0xff] %vm4156, %v4394
        %4409 = vst.msk [vmem:[%s1082 + $0x8] sm:$0xff] %vm4156, %v4395
        %4410 = vst.msk [vmem:[%s1087] sm:$0xff] %vm4156, %v4406
        %4411 = vst.msk [vmem:[%s1087 + $0x8] sm:$0xff] %vm4156, %v4407
        %s4412 = sand.u32 %s696, 1
        %s4413 = scalar_lea.sflag [#allocation3], %s4412
        %s4414 = sand.u32 %s696, 1
        %s4415 = smul.addr %s4414, 16
        %s4416 = scalar_lea.vmem [#allocation2], %s4415
        %p4417 = scmp.lt.s32.totalorder %s80, 3
        %s4418 = scalar_select %p4417, %s80, 3
        %s4419 = smul.addr %s4418, 2
        %s4420 = smul.addr %s4419, 8
        %s4421 = scalar_lea.vmem %s59, %s4420
        %p4422 = scmp.lt.s32.totalorder %s80, 3
        %s4423 = scalar_select %p4422, %s80, 3
        %s4424 = smul.addr %s4423, 2
        %s4425 = smul.addr %s4424, 8
        %s4426 = scalar_lea.vmem %s61, %s4425
        %p4427 = scmp.lt.s32.totalorder %s80, 3
        %s4428 = scalar_select %p4427, %s80, 3
        %s4429 = smul.addr %s4428, 2
        %s4430 = smul.addr %s4429, 8
        %s4431 = scalar_lea.vmem %s63, %s4430
        %p4432 = scmp.lt.s32.totalorder %s80, 3
        %s4433 = scalar_select %p4432, %s80, 3
        %s4434 = smul.addr %s4433, 2
        %s4435 = smul.addr %s4434, 8
        %s4436 = scalar_lea.vmem %s65, %s4435
        // Predicated region
        $region133: #{_lambda_.1} parent=131 // pred_check
          %p4437 = pneg %p706
        $region134: #{_lambda_.1} parent=131 // pred_check_branch
          %4439 = sbr.rel (%p4437) target = $region136
        $region135: #{_lambda_.1} parent=131 // pred_region
          %s4441 = ssub.s32 256, 256
          %4442 = vsyncadd %s4413, %s4441
          %s4443 = smul.addr %s80, 2
          %s4444 = smul.addr %s4443, 128
          %s4445 = scalar_lea.hbm %s57, %s4444
          %s4446 = sshll.u32 %s4416, 4
          %s4447 = int_to_ptr.vmem [resolvable:$true] %s4446
          %4452 = dma.vmem_to_hbm [thread:$0]  %s4447, 256, %s4445, %s4413, 128, 128, 8
        $region136: #{_lambda_.1} parent=131 // pred_fallthru
          _
        // Predicated region
        $region137: #{_lambda_.1} parent=131 // pred_check
          %p4453 = pneg %p732
        $region138: #{_lambda_.1} parent=131 // pred_check_branch
          %4455 = sbr.rel (%p4453) target = $region140
        $region139: #{_lambda_.1} parent=131 // pred_region
          _
        $region140: #{_lambda_.1} parent=131 // pred_fallthru
          _
        // Predicated region
        $region141: #{_lambda_.1} parent=131 // pred_check
          %p4456 = pneg %p758
        $region142: #{_lambda_.1} parent=131 // pred_check_branch
          %4458 = sbr.rel (%p4456) target = $region144
        $region143: #{_lambda_.1} parent=131 // pred_region
          _
        $region144: #{_lambda_.1} parent=131 // pred_fallthru
          _
        // Predicated region
        $region145: #{_lambda_.1} parent=131 // pred_check
          %p4459 = pneg %p784
        $region146: #{_lambda_.1} parent=131 // pred_check_branch
          %4461 = sbr.rel (%p4459) target = $region148
        $region147: #{_lambda_.1} parent=131 // pred_region
          _
        $region148: #{_lambda_.1} parent=131 // pred_fallthru
          _
        // Predicated region
        $region149: #{_lambda_.1} parent=131 // pred_check
          %p4462 = pneg %p810
        $region150: #{_lambda_.1} parent=131 // pred_check_branch
          %4464 = sbr.rel (%p4462) target = $region152
        $region151: #{_lambda_.1} parent=131 // pred_region
          _
        $region152: #{_lambda_.1} parent=131 // pred_fallthru
          _
      $region132: #{_lambda_.1} parent=5 // pred_fallthru
        _
      %p4465 = scmp.le.s32.totalorder 2, %s75
      // Predicated region
      $region153: #{_lambda_.1} parent=5 // pred_check
        %p4466 = pneg %p4465
      $region154: #{_lambda_.1} parent=5 // pred_check_branch
        %4468 = sbr.rel (%p4466) target = $region156
      $region155: #{_lambda_.1} parent=5 // pred_region
        %s4469 = ssub.s32 %s75, 2
        // Predicated region
        $region157: #{_lambda_.1} parent=155 // pred_check
          %p4470 = pneg %p712
        $region158: #{_lambda_.1} parent=155 // pred_check_branch
          %4472 = sbr.rel (%p4470) target = $region160
        $region159: #{_lambda_.1} parent=155 // pred_region
          %s4473 = sand.u32 %s697, 1
          %s4474 = scalar_lea.sflag [#allocation3], %s4473
          %s4475 = sand.u32 %s697, 1
          %s4476 = smul.addr %s4475, 16
          %s4477 = scalar_lea.vmem [#allocation2], %s4476
          %4478 = dma.done %s4474, 256
        $region160: #{_lambda_.1} parent=155 // pred_fallthru
          _
        // Predicated region
        $region161: #{_lambda_.1} parent=155 // pred_check
          %p4479 = pneg %p738
        $region162: #{_lambda_.1} parent=155 // pred_check_branch
          %4481 = sbr.rel (%p4479) target = $region164
        $region163: #{_lambda_.1} parent=155 // pred_region
          %p4482 = scmp.lt.s32.totalorder %s81, 3
          %s4483 = scalar_select %p4482, %s81, 3
          %s4484 = smul.addr %s4483, 2
          %s4485 = smul.addr %s4484, 8
          %s4486 = scalar_lea.vmem %s59, %s4485
        $region164: #{_lambda_.1} parent=155 // pred_fallthru
          _
        // Predicated region
        $region165: #{_lambda_.1} parent=155 // pred_check
          %p4487 = pneg %p764
        $region166: #{_lambda_.1} parent=155 // pred_check_branch
          %4489 = sbr.rel (%p4487) target = $region168
        $region167: #{_lambda_.1} parent=155 // pred_region
          %p4490 = scmp.lt.s32.totalorder %s81, 3
          %s4491 = scalar_select %p4490, %s81, 3
          %s4492 = smul.addr %s4491, 2
          %s4493 = smul.addr %s4492, 8
          %s4494 = scalar_lea.vmem %s61, %s4493
        $region168: #{_lambda_.1} parent=155 // pred_fallthru
          _
        // Predicated region
        $region169: #{_lambda_.1} parent=155 // pred_check
          %p4495 = pneg %p790
        $region170: #{_lambda_.1} parent=155 // pred_check_branch
          %4497 = sbr.rel (%p4495) target = $region172
        $region171: #{_lambda_.1} parent=155 // pred_region
          %p4498 = scmp.lt.s32.totalorder %s81, 3
          %s4499 = scalar_select %p4498, %s81, 3
          %s4500 = smul.addr %s4499, 2
          %s4501 = smul.addr %s4500, 8
          %s4502 = scalar_lea.vmem %s63, %s4501
        $region172: #{_lambda_.1} parent=155 // pred_fallthru
          _
        // Predicated region
        $region173: #{_lambda_.1} parent=155 // pred_check
          %p4503 = pneg %p816
        $region174: #{_lambda_.1} parent=155 // pred_check_branch
          %4505 = sbr.rel (%p4503) target = $region176
        $region175: #{_lambda_.1} parent=155 // pred_region
          %p4506 = scmp.lt.s32.totalorder %s81, 3
          %s4507 = scalar_select %p4506, %s81, 3
          %s4508 = smul.addr %s4507, 2
          %s4509 = smul.addr %s4508, 8
          %s4510 = scalar_lea.vmem %s65, %s4509
        $region176: #{_lambda_.1} parent=155 // pred_fallthru
          _
      $region156: #{_lambda_.1} parent=5 // pred_fallthru
        _
    $region6: #{_lambda_.1} parent=1 // loop_footer
      %s79 = sadd.s32 1, %s75
    $region7: #{_lambda_.1} parent=1 // loop_footer_branch
      %74 = sbr.rel target = $region3
    $region8: #{_lambda_.1} parent=1 // loop_exit
      _
    %4511 = vsyncpa [#allocation3], 1
    %s4512 = scalar_lea.sflag [#allocation3], 1
    %4513 = vsyncpa %s4512, 1

</llo_original>
